<compile_context>
chip_gen: v5e
topology: v5e:2x2
jax: 0.10.0
libtpu: 0.0.40
codegen_flags: <defaults>
</compile_context>

<pallas_src>
import functools

import jax
import jax.numpy as jnp
from jax.experimental import pallas as pl
from jax.experimental.pallas import tpu as pltpu

DROPOUT_P = 0.1


def _attn_tail_kernel(attn_ref,   # (G, Sq, Sk) f32
                      bias_ref,   # (1, Sk)     f32
                      mask_ref,   # (G, Sq, Sk) f32  pre-scaled keep mask
                      v_ref,      # (G, Sk, D)  f32
                      o_ref,      # (1, Sq, G*D) f32  lane-dense output slab
                      *, heads_per_block):
    bias = bias_ref[...]                                  # (1, Sk), broadcasts over Sq
    outs = []
    for g in range(heads_per_block):                      # static unroll, G small
        s = attn_ref[g] + bias                            # (Sq, Sk)
        s = s - jnp.max(s, axis=-1, keepdims=True)
        p = jnp.exp(s)
        denom = jnp.sum(p, axis=-1, keepdims=True)
        p = p * pl.reciprocal(denom, approx=True)         # EUP vrcp, ~1e-3 rel err
        p = p * mask_ref[g]                               # dropout mask (already /(1-p))
        outs.append(
            jnp.dot(p.astype(jnp.bfloat16),
                    v_ref[g].astype(jnp.bfloat16),
                    preferred_element_type=jnp.float32))  # (Sq, D), f32 accumulate
    # Concatenate per-head results along lanes -> single unmasked 128-wide store.
    o_ref[0] = jnp.concatenate(outs, axis=-1).astype(o_ref.dtype)


def attn_bias_softmax_dropout_matmul(attn, bias, v, dropout_mask=None):
    """attn: (B,H,Sq,Sk) f32; bias: (1,1,1,Sk) f32; v: (B,H,Sk,D) f32;
    dropout_mask: optional (B,H,Sq,Sk) f32 pre-scaled keep mask (keep/(1-p)),
    None disables dropout.  Returns (B,H,Sq,D) f32."""
    B, H, Sq, Sk = attn.shape
    D = v.shape[-1]
    BH = B * H

    if dropout_mask is None:
        dropout_mask = jnp.ones((B, H, Sq, Sk), jnp.float32)

    # Pack heads so the per-step output last dim is a multiple of 128 lanes.
    G = 2 if (BH % 2 == 0 and (2 * D) % 128 == 0) else 1
    n_steps = BH // G

    attn_f = attn.reshape(BH, Sq, Sk)
    mask_f = dropout_mask.astype(jnp.float32).reshape(BH, Sq, Sk)
    v_f = v.reshape(BH, Sk, D)
    bias_f = bias.reshape(1, Sk)

    kernel = functools.partial(_attn_tail_kernel, heads_per_block=G)

    out_flat = pl.pallas_call(
        kernel,
        out_shape=jax.ShapeDtypeStruct((n_steps, Sq, G * D), jnp.float32),
        grid=(n_steps,),
        in_specs=[
            pl.BlockSpec((G, Sq, Sk), lambda i: (i, 0, 0)),
            pl.BlockSpec((1, Sk), lambda i: (0, 0)),
            pl.BlockSpec((G, Sq, Sk), lambda i: (i, 0, 0)),
            pl.BlockSpec((G, Sk, D), lambda i: (i, 0, 0)),
        ],
        out_specs=pl.BlockSpec((1, Sq, G * D), lambda i: (i, 0, 0)),
        compiler_params=pltpu.CompilerParams(
            dimension_semantics=("parallel",),
        ),
    )(attn_f, bias_f, mask_f, v_f)

    # Un-interleave the packed heads: (n_steps, Sq, G, D) -> (BH, Sq, D).
    out = out_flat.reshape(n_steps, Sq, G, D).transpose(0, 2, 1, 3)
    return out.reshape(B, H, Sq, D)


if __name__ == "__main__":
    # Module shapes: B=1, H=4, Sq=Sk=384, D=64.
    B, H, Sq, Sk, D = 1, 4, 384, 384, 64

    key = jax.random.PRNGKey(0)
    k1, k2, k3, k4 = jax.random.split(key, 4)

    x386 = jax.random.normal(k1, (B, H, Sq, Sk), dtype=jnp.float32)   # attn scores
    x378 = jax.random.normal(k2, (B, H, Sk, D), dtype=jnp.float32)    # values
    bias = jax.random.uniform(k3, (1, 1, 1, Sk), dtype=jnp.float32)   # _tensor_constant20 ~ U[0,1)

    # Dropout randomness drawn outside the kernel (PyTorch training-mode
    # semantics: zero with prob p, scale kept values by 1/(1-p)).
    keep = jax.random.bernoulli(k4, 1.0 - DROPOUT_P, (B, H, Sq, Sk))
    mask = keep.astype(jnp.float32) / (1.0 - DROPOUT_P)

    out = attn_bias_softmax_dropout_matmul(x386, bias, x378, dropout_mask=mask)
    out = jax.block_until_ready(out)

    # Reference with the same mask (kernel uses bf16 MXU operands + approx
    # reciprocal, so compare with a loose tolerance).
    p_ref = jax.nn.softmax(x386 + bias, axis=-1) * mask
    ref = jnp.einsum("bhqk,bhkd->bhqd", p_ref, x378)

    assert out.shape == (B, H, Sq, D)
    assert out.dtype == jnp.float32
    assert bool(jnp.all(jnp.isfinite(out)))
    max_err = float(jnp.max(jnp.abs(out - ref)))
    assert max_err < 5e-2, f"max abs err {max_err}"
    print("KERNEL_OK")
</pallas_src>

<mosaic_0001>
module attributes {stable_mosaic.version = 11 : i64} {
  func.func @_attn_tail_kernel(%arg0: i32, %arg1: memref<2x384x384xf32, #tpu.memory_space<vmem>>, %arg2: memref<1x384xf32, #tpu.memory_space<vmem>>, %arg3: memref<2x384x384xf32, #tpu.memory_space<vmem>>, %arg4: memref<2x384x64xf32, #tpu.memory_space<vmem>>, %arg5: memref<1x384x128xf32, #tpu.memory_space<vmem>>) attributes {dimension_semantics = [#tpu.dimension_semantics<parallel>], iteration_bounds = array<i64: 2>, scalar_prefetch = 0 : i64, scratch_operands = 0 : i64, tpu.core_type = #tpu.core_type<tc>, window_params = [{transform_indices = @transform_0, window_bounds = array<i64: 2, 384, 384>}, {pipeline_mode = #tpu.pipeline_mode<synchronous>, transform_indices = @transform_1, window_bounds = array<i64: 1, 384>}, {transform_indices = @transform_2, window_bounds = array<i64: 2, 384, 384>}, {transform_indices = @transform_3, window_bounds = array<i64: 2, 384, 64>}, {transform_indices = @transform_4, window_bounds = array<i64: 1, 384, 128>}]} {
    %c0 = arith.constant 0 : index
    %c0_0 = arith.constant 0 : index
    %0 = vector.load %arg2[%c0, %c0_0] : memref<1x384xf32, #tpu.memory_space<vmem>>, vector<1x384xf32>
    %c0_1 = arith.constant 0 : index
    %c0_2 = arith.constant 0 : index
    %c0_3 = arith.constant 0 : index
    %1 = vector.load %arg1[%c0_1, %c0_2, %c0_3] : memref<2x384x384xf32, #tpu.memory_space<vmem>>, vector<1x384x384xf32>
    %2 = vector.shape_cast %1 : vector<1x384x384xf32> to vector<384x384xf32>
    %3 = vector.broadcast %0 : vector<1x384xf32> to vector<384x384xf32>
    %4 = arith.addf %2, %3 : vector<384x384xf32>
    %cst = arith.constant dense<0xFF800000> : vector<384xf32>
    %5 = vector.multi_reduction <maximumf>, %4, %cst [1] : vector<384x384xf32> to vector<384xf32>
    %6 = vector.shape_cast %5 : vector<384xf32> to vector<384x1xf32>
    %7 = vector.broadcast %6 : vector<384x1xf32> to vector<384x384xf32>
    %8 = arith.subf %4, %7 : vector<384x384xf32>
    %9 = math.exp %8 : vector<384x384xf32>
    %cst_4 = arith.constant dense<0.000000e+00> : vector<384xf32>
    %10 = vector.multi_reduction <add>, %9, %cst_4 [1] : vector<384x384xf32> to vector<384xf32>
    %11 = vector.shape_cast %10 : vector<384xf32> to vector<384x1xf32>
    %12 = tpu.reciprocal %11 {approx = true} : vector<384x1xf32> -> vector<384x1xf32>
    %13 = vector.broadcast %12 : vector<384x1xf32> to vector<384x384xf32>
    %14 = arith.mulf %9, %13 : vector<384x384xf32>
    %c0_5 = arith.constant 0 : index
    %c0_6 = arith.constant 0 : index
    %c0_7 = arith.constant 0 : index
    %15 = vector.load %arg3[%c0_5, %c0_6, %c0_7] : memref<2x384x384xf32, #tpu.memory_space<vmem>>, vector<1x384x384xf32>
    %16 = vector.shape_cast %15 : vector<1x384x384xf32> to vector<384x384xf32>
    %17 = arith.mulf %14, %16 : vector<384x384xf32>
    %18 = arith.truncf %17 : vector<384x384xf32> to vector<384x384xbf16>
    %c0_8 = arith.constant 0 : index
    %c0_9 = arith.constant 0 : index
    %c0_10 = arith.constant 0 : index
    %19 = vector.load %arg4[%c0_8, %c0_9, %c0_10] : memref<2x384x64xf32, #tpu.memory_space<vmem>>, vector<1x384x64xf32>
    %20 = vector.shape_cast %19 : vector<1x384x64xf32> to vector<384x64xf32>
    %21 = arith.truncf %20 : vector<384x64xf32> to vector<384x64xbf16>
    %cst_11 = arith.constant dense<0.000000e+00> : vector<384x64xf32>
    %22 = tpu.matmul %18, %21, %cst_11 {dimension_numbers = #tpu.dot_dimension_numbers<[1], [0], [0], [1], [0, 0, 1, 1], [], []>} : vector<384x384xbf16>, vector<384x64xbf16>, vector<384x64xf32> -> vector<384x64xf32>
    %c1 = arith.constant 1 : index
    %c0_12 = arith.constant 0 : index
    %c0_13 = arith.constant 0 : index
    %23 = vector.load %arg1[%c1, %c0_12, %c0_13] : memref<2x384x384xf32, #tpu.memory_space<vmem>>, vector<1x384x384xf32>
    %24 = vector.shape_cast %23 : vector<1x384x384xf32> to vector<384x384xf32>
    %25 = vector.broadcast %0 : vector<1x384xf32> to vector<384x384xf32>
    %26 = arith.addf %24, %25 : vector<384x384xf32>
    %cst_14 = arith.constant dense<0xFF800000> : vector<384xf32>
    %27 = vector.multi_reduction <maximumf>, %26, %cst_14 [1] : vector<384x384xf32> to vector<384xf32>
    %28 = vector.shape_cast %27 : vector<384xf32> to vector<384x1xf32>
    %29 = vector.broadcast %28 : vector<384x1xf32> to vector<384x384xf32>
    %30 = arith.subf %26, %29 : vector<384x384xf32>
    %31 = math.exp %30 : vector<384x384xf32>
    %cst_15 = arith.constant dense<0.000000e+00> : vector<384xf32>
    %32 = vector.multi_reduction <add>, %31, %cst_15 [1] : vector<384x384xf32> to vector<384xf32>
    %33 = vector.shape_cast %32 : vector<384xf32> to vector<384x1xf32>
    %34 = tpu.reciprocal %33 {approx = true} : vector<384x1xf32> -> vector<384x1xf32>
    %35 = vector.broadcast %34 : vector<384x1xf32> to vector<384x384xf32>
    %36 = arith.mulf %31, %35 : vector<384x384xf32>
    %c1_16 = arith.constant 1 : index
    %c0_17 = arith.constant 0 : index
    %c0_18 = arith.constant 0 : index
    %37 = vector.load %arg3[%c1_16, %c0_17, %c0_18] : memref<2x384x384xf32, #tpu.memory_space<vmem>>, vector<1x384x384xf32>
    %38 = vector.shape_cast %37 : vector<1x384x384xf32> to vector<384x384xf32>
    %39 = arith.mulf %36, %38 : vector<384x384xf32>
    %40 = arith.truncf %39 : vector<384x384xf32> to vector<384x384xbf16>
    %c1_19 = arith.constant 1 : index
    %c0_20 = arith.constant 0 : index
    %c0_21 = arith.constant 0 : index
    %41 = vector.load %arg4[%c1_19, %c0_20, %c0_21] : memref<2x384x64xf32, #tpu.memory_space<vmem>>, vector<1x384x64xf32>
    %42 = vector.shape_cast %41 : vector<1x384x64xf32> to vector<384x64xf32>
    %43 = arith.truncf %42 : vector<384x64xf32> to vector<384x64xbf16>
    %cst_22 = arith.constant dense<0.000000e+00> : vector<384x64xf32>
    %44 = tpu.matmul %40, %43, %cst_22 {dimension_numbers = #tpu.dot_dimension_numbers<[1], [0], [0], [1], [0, 0, 1, 1], [], []>} : vector<384x384xbf16>, vector<384x64xbf16>, vector<384x64xf32> -> vector<384x64xf32>
    %45 = tpu.concatenate %22, %44 in 1 : vector<384x64xf32>, vector<384x64xf32> -> vector<384x128xf32>
    %c0_23 = arith.constant 0 : index
    %c0_24 = arith.constant 0 : index
    %c0_25 = arith.constant 0 : index
    %46 = vector.load %arg5[%c0_23, %c0_24, %c0_25] : memref<1x384x128xf32, #tpu.memory_space<vmem>>, vector<1x384x128xf32>
    %47 = vector.shape_cast %46 : vector<1x384x128xf32> to vector<384x128xf32>
    %48 = vector.shape_cast %45 : vector<384x128xf32> to vector<1x384x128xf32>
    tpu.vector_store %arg5[%c0_23, %c0_24, %c0_25], %48 {strides = array<i32>} : memref<1x384x128xf32, #tpu.memory_space<vmem>>, vector<1x384x128xf32>,
    return
  }
  func.func @transform_0(%arg0: i32) -> (i32, i32, i32) {
    %c0_i32 = arith.constant 0 : i32
    %c0_i32_0 = arith.constant 0 : i32
    %c0_i32_1 = arith.constant 0 : i32
    return %arg0, %c0_i32, %c0_i32_0 : i32, i32, i32
  }
  func.func @transform_1(%arg0: i32) -> (i32, i32) {
    %c0_i32 = arith.constant 0 : i32
    %c0_i32_0 = arith.constant 0 : i32
    %c0_i32_1 = arith.constant 0 : i32
    return %c0_i32, %c0_i32_0 : i32, i32
  }
  func.func @transform_2(%arg0: i32) -> (i32, i32, i32) {
    %c0_i32 = arith.constant 0 : i32
    %c0_i32_0 = arith.constant 0 : i32
    %c0_i32_1 = arith.constant 0 : i32
    return %arg0, %c0_i32, %c0_i32_0 : i32, i32, i32
  }
  func.func @transform_3(%arg0: i32) -> (i32, i32, i32) {
    %c0_i32 = arith.constant 0 : i32
    %c0_i32_0 = arith.constant 0 : i32
    %c0_i32_1 = arith.constant 0 : i32
    return %arg0, %c0_i32, %c0_i32_0 : i32, i32, i32
  }
  func.func @transform_4(%arg0: i32) -> (i32, i32, i32) {
    %c0_i32 = arith.constant 0 : i32
    %c0_i32_0 = arith.constant 0 : i32
    %c0_i32_1 = arith.constant 0 : i32
    return %arg0, %c0_i32, %c0_i32_0 : i32, i32, i32
  }
}

</mosaic_0001>

<llo_original>
// kernel: tpu_custom_call.1
$region0: #{tpu_custom_call.1}
  #allocation0 [shape = 'u32[]', space=smem, size = 0x4, offset = 0x4, fixed_abs, tag = 'smem constant byte address 0x4 - core index']
  #allocation1 [shape = 'u32[72,128]{1,0:T(1,128)}', space=vmem, size = 0x9000, scoped, tag = 'internal scratch']
  %s0 = inlined_call_operand.hbm [shape: f32[4,384,384], index: 0, kind: input, shape index: {}]
  %s1 = inlined_call_operand.hbm [shape: f32[1,384], index: 1, kind: input, shape index: {}]
  %s2 = inlined_call_operand.hbm [shape: f32[4,384,384], index: 2, kind: input, shape index: {}]
  %s3 = inlined_call_operand.vmem [shape: f32[4,384,64], index: 3, kind: input, shape index: {}]
  %s4 = inlined_call_operand.hbm [shape: f32[2,384,128], index: 4, kind: output, shape index: {}]
  %s5 = sld [smem:[#allocation0]]
  $region61: #{tpu_custom_call.1} parent=0
    _
  %s7 = ssub.s32 1, %s5
  %s8 = scalar_select 0, %s7, %s5
  $region1: #{tpu_custom_call.1} parent=0
    #allocation2 [shape = 'u8[2359296]{0}', space=vmem, size = 0x240000, scoped, tag = 'input window, operand 0']
    #allocation3 [shape = 's32[2]{0}', space=sflag, size = 0x8, scoped, tag = 'scoped memory for tpu_custom_call.1']
    #allocation4 [shape = 's32[2]{0}', space=sflag, size = 0x8, scoped, tag = 'scoped memory for tpu_custom_call.1']
    #allocation5 [shape = 'u8[1536]{0}', space=vmem, size = 0x800, scoped, tag = 'input window, operand 1, single buffered']
    #allocation6 [shape = 's32[1]{0}', space=sflag, size = 0x4, scoped, tag = 'scoped memory for tpu_custom_call.1']
    #allocation7 [shape = 'u8[2359296]{0}', space=vmem, size = 0x240000, scoped, tag = 'input window, operand 2']
    #allocation8 [shape = 'u8[393216]{0}', space=vmem, size = 0x60000, scoped, tag = 'output window, operand 0']
    %9 = vsyncpa [#allocation3], 0
    %s10 = scalar_lea.sflag [#allocation3], 1
    %11 = vsyncpa %s10, 0
    %12 = vsyncpa [#allocation6], 0
    %13 = vsyncpa [#allocation4], 0
    %s14 = scalar_lea.sflag [#allocation4], 1
    %15 = vsyncpa %s14, 0
    loop: start=0, step=1, limit=4
    $region2: #{tpu_custom_call.1} parent=1 // loop_pre_header
      _
    $region3: #{tpu_custom_call.1} parent=1 // loop_header
      %s17 = sphi 0, %s21
      %p18 = scmp.ge.s32.totalorder %s17, 4
      %s27 = sphi 0, %s29
      %s30 = sphi 0, %s27
      %s31 = sphi 0, %s30
      %s47 = sphi 0, %s31
      %s51 = sphi 0, %s51
      %s53 = sphi 0, %s51
      %s54 = sphi 0, %s53
      %s68 = sphi 0, %s54
      %s74 = sphi 0, %s76
      %s77 = sphi 0, %s74
      %s78 = sphi 0, %s77
      %s94 = sphi 0, %s78
      %s100 = sphi 0, %s102
      %s103 = sphi 0, %s100
      %s104 = sphi 0, %s103
      %s120 = sphi 0, %s104
      %s126 = sphi 0, %s128
      %s129 = sphi 0, %s126
      %s130 = sphi 0, %s129
      %s146 = sphi 0, %s130
    $region4: #{tpu_custom_call.1} parent=1 // loop_header_branch
      %20 = sbr.rel (%p18) target = $region8
    $region5: #{tpu_custom_call.1} parent=1 // loop_body
      %s22 = ssub.s32 %s17, 1
      %s23 = ssub.s32 %s17, 2
      %s24 = sadd.s32 %s17, 1
      %s25 = ssub.s32 %s17, %s24
      %p26 = scmp.eq.s32.totalorder %s25, 0
      %s28 = sadd.s32 %s27, 1
      %s29 = scalar_select %p26, %s27, %s28
      %p32 = pneg %p26
      %p33 = scmp.eq.s32.totalorder %s17, 1
      %p34 = por %p32, %p33
      %p35 = scmp.ne.s32.totalorder %s27, %s30
      %p36 = scmp.eq.s32.totalorder %s17, 0
      %p37 = por %p35, %p36
      %p38 = scmp.ne.s32.totalorder %s27, %s30
      %p39 = scmp.eq.s32.totalorder %s22, 1
      %p40 = por %p38, %p39
      %p41 = scmp.ne.s32.totalorder %s30, %s31
      %p42 = scmp.eq.s32.totalorder %s22, 0
      %p43 = por %p41, %p42
      %p44 = scmp.ne.s32.totalorder %s30, %s31
      %p45 = scmp.eq.s32.totalorder %s23, 1
      %p46 = por %p44, %p45
      %p48 = scmp.ne.s32.totalorder %s31, %s47
      %p49 = scmp.eq.s32.totalorder %s23, 0
      %p50 = por %p48, %p49
      %s52 = sadd.s32 %s51, 1
      %p55 = scmp.eq.s32.totalorder %s17, 1
      %p56 = scmp.ne.s32.totalorder %s51, %s53
      %p57 = scmp.eq.s32.totalorder %s17, 0
      %p58 = por %p56, %p57
      %p59 = scmp.ne.s32.totalorder %s51, %s53
      %p60 = scmp.eq.s32.totalorder %s22, 1
      %p61 = por %p59, %p60
      %p62 = scmp.ne.s32.totalorder %s53, %s54
      %p63 = scmp.eq.s32.totalorder %s22, 0
      %p64 = por %p62, %p63
      %p65 = scmp.ne.s32.totalorder %s53, %s54
      %p66 = scmp.eq.s32.totalorder %s23, 1
      %p67 = por %p65, %p66
      %p69 = scmp.ne.s32.totalorder %s54, %s68
      %p70 = scmp.eq.s32.totalorder %s23, 0
      %p71 = por %p69, %p70
      %s72 = ssub.s32 %s17, %s24
      %p73 = scmp.eq.s32.totalorder %s72, 0
      %s75 = sadd.s32 %s74, 1
      %s76 = scalar_select %p73, %s74, %s75
      %p79 = pneg %p73
      %p80 = scmp.eq.s32.totalorder %s17, 1
      %p81 = por %p79, %p80
      %p82 = scmp.ne.s32.totalorder %s74, %s77
      %p83 = scmp.eq.s32.totalorder %s17, 0
      %p84 = por %p82, %p83
      %p85 = scmp.ne.s32.totalorder %s74, %s77
      %p86 = scmp.eq.s32.totalorder %s22, 1
      %p87 = por %p85, %p86
      %p88 = scmp.ne.s32.totalorder %s77, %s78
      %p89 = scmp.eq.s32.totalorder %s22, 0
      %p90 = por %p88, %p89
      %p91 = scmp.ne.s32.totalorder %s77, %s78
      %p92 = scmp.eq.s32.totalorder %s23, 1
      %p93 = por %p91, %p92
      %p95 = scmp.ne.s32.totalorder %s78, %s94
      %p96 = scmp.eq.s32.totalorder %s23, 0
      %p97 = por %p95, %p96
      %s98 = ssub.s32 %s17, %s24
      %p99 = scmp.eq.s32.totalorder %s98, 0
      %s101 = sadd.s32 %s100, 1
      %s102 = scalar_select %p99, %s100, %s101
      %p105 = pneg %p99
      %p106 = scmp.eq.s32.totalorder %s17, 1
      %p107 = por %p105, %p106
      %p108 = scmp.ne.s32.totalorder %s100, %s103
      %p109 = scmp.eq.s32.totalorder %s17, 0
      %p110 = por %p108, %p109
      %p111 = scmp.ne.s32.totalorder %s100, %s103
      %p112 = scmp.eq.s32.totalorder %s22, 1
      %p113 = por %p111, %p112
      %p114 = scmp.ne.s32.totalorder %s103, %s104
      %p115 = scmp.eq.s32.totalorder %s22, 0
      %p116 = por %p114, %p115
      %p117 = scmp.ne.s32.totalorder %s103, %s104
      %p118 = scmp.eq.s32.totalorder %s23, 1
      %p119 = por %p117, %p118
      %p121 = scmp.ne.s32.totalorder %s104, %s120
      %p122 = scmp.eq.s32.totalorder %s23, 0
      %p123 = por %p121, %p122
      %s124 = ssub.s32 %s17, %s24
      %p125 = scmp.eq.s32.totalorder %s124, 0
      %s127 = sadd.s32 %s126, 1
      %s128 = scalar_select %p125, %s126, %s127
      %p131 = pneg %p125
      %p132 = scmp.eq.s32.totalorder %s17, 1
      %p133 = por %p131, %p132
      %p134 = scmp.ne.s32.totalorder %s126, %s129
      %p135 = scmp.eq.s32.totalorder %s17, 0
      %p136 = por %p134, %p135
      %p137 = scmp.ne.s32.totalorder %s126, %s129
      %p138 = scmp.eq.s32.totalorder %s22, 1
      %p139 = por %p137, %p138
      %p140 = scmp.ne.s32.totalorder %s129, %s130
      %p141 = scmp.eq.s32.totalorder %s22, 0
      %p142 = por %p140, %p141
      %p143 = scmp.ne.s32.totalorder %s129, %s130
      %p144 = scmp.eq.s32.totalorder %s23, 1
      %p145 = por %p143, %p144
      %p147 = scmp.ne.s32.totalorder %s130, %s146
      %p148 = scmp.eq.s32.totalorder %s23, 0
      %p149 = por %p147, %p148
      %p150 = scmp.le.s32.totalorder 1, %s17
      %p151 = scmp.lt.s32.totalorder %s17, 3
      %p152 = pnand %p150, %p151
      %p153 = pneg %p152
      // Predicated region
      $region9: #{tpu_custom_call.1} parent=5 // pred_check
        _
      $region10: #{tpu_custom_call.1} parent=5 // pred_check_branch
        %155 = sbr.rel (%p152) target = $region12
      $region11: #{tpu_custom_call.1} parent=5 // pred_region
        %s156 = ssub.s32 %s17, 1
        // Predicated region
        $region13: #{tpu_custom_call.1} parent=11 // pred_check
          %p157 = pneg %p64
        $region14: #{tpu_custom_call.1} parent=11 // pred_check_branch
          %159 = sbr.rel (%p157) target = $region16
        $region15: #{tpu_custom_call.1} parent=11 // pred_region
          %161 = vsyncadd [#allocation6], 0
          %s163 = sshll.u32 %s1, 4
          %s164 = int_to_ptr.hbm [resolvable:$true] %s163
          %s165 = sshll.u32 [#allocation5], 4
          %s166 = int_to_ptr.vmem [resolvable:$true] %s165
          %168 = dma.hbm_to_vmem [thread:$0]  %s164, 48, %s166, [#allocation6]
        $region16: #{tpu_custom_call.1} parent=11 // pred_fallthru
          _
      $region12: #{tpu_custom_call.1} parent=5 // pred_fallthru
        _
      %p169 = scmp.lt.s32.totalorder %s17, 2
      // Predicated region
      $region17: #{tpu_custom_call.1} parent=5 // pred_check
        %p170 = pneg %p169
      $region18: #{tpu_custom_call.1} parent=5 // pred_check_branch
        %172 = sbr.rel (%p170) target = $region20
      $region19: #{tpu_custom_call.1} parent=5 // pred_region
        // Predicated region
        $region21: #{tpu_custom_call.1} parent=19 // pred_check
          %p173 = pneg %p37
        $region22: #{tpu_custom_call.1} parent=19 // pred_check_branch
          %175 = sbr.rel (%p173) target = $region24
        $region23: #{tpu_custom_call.1} parent=19 // pred_region
          %s176 = sand.u32 %s17, 1
          %s177 = scalar_lea.sflag [#allocation3], %s176
          %s178 = sand.u32 %s27, 1
          %s179 = smul.addr %s178, 2304
          %s180 = scalar_lea.vmem [#allocation2], %s179
          %s181 = smul.u32 2, %s17
          %183 = vsyncadd %s177, 0
          %s184 = smul.addr %s181, 144
          %s185 = smul.addr %s184, 8
          %s186 = scalar_lea.hbm %s0, %s185
          %s187 = sshll.u32 %s186, 4
          %s188 = int_to_ptr.hbm [resolvable:$true] %s187
          %s189 = sshll.u32 %s180, 4
          %s190 = int_to_ptr.vmem [resolvable:$true] %s189
          %195 = dma.hbm_to_vmem [thread:$0]  %s188, 36864, %s190, %s177, 384, 384, 24
        $region24: #{tpu_custom_call.1} parent=19 // pred_fallthru
          _
        // Predicated region
        $region25: #{tpu_custom_call.1} parent=19 // pred_check
          %p196 = pneg %p84
        $region26: #{tpu_custom_call.1} parent=19 // pred_check_branch
          %198 = sbr.rel (%p196) target = $region28
        $region27: #{tpu_custom_call.1} parent=19 // pred_region
          %s199 = sand.u32 %s17, 1
          %s200 = scalar_lea.sflag [#allocation3], %s199
          %s201 = sand.u32 %s74, 1
          %s202 = smul.addr %s201, 2304
          %s203 = scalar_lea.vmem [#allocation7], %s202
          %s204 = smul.u32 2, %s17
          %206 = vsyncadd %s200, 0
          %s207 = smul.addr %s204, 144
          %s208 = smul.addr %s207, 8
          %s209 = scalar_lea.hbm %s2, %s208
          %s210 = sshll.u32 %s209, 4
          %s211 = int_to_ptr.hbm [resolvable:$true] %s210
          %s212 = sshll.u32 %s203, 4
          %s213 = int_to_ptr.vmem [resolvable:$true] %s212
          %218 = dma.hbm_to_vmem [thread:$0]  %s211, 36864, %s213, %s200, 384, 384, 24
        $region28: #{tpu_custom_call.1} parent=19 // pred_fallthru
          _
        // Predicated region
        $region29: #{tpu_custom_call.1} parent=19 // pred_check
          %p219 = pneg %p110
        $region30: #{tpu_custom_call.1} parent=19 // pred_check_branch
          %221 = sbr.rel (%p219) target = $region32
        $region31: #{tpu_custom_call.1} parent=19 // pred_region
          %s222 = smul.u32 2, %s17
          %p223 = scmp.lt.s32.totalorder %s222, 3
          %s224 = scalar_select %p223, %s222, 3
          %s225 = smul.addr %s224, 48
          %s226 = smul.addr %s225, 8
          %s227 = scalar_lea.vmem %s3, %s226
          %s228 = smul.u32 2, %s17
        $region32: #{tpu_custom_call.1} parent=19 // pred_fallthru
          _
      $region20: #{tpu_custom_call.1} parent=5 // pred_fallthru
        _
      %p229 = scmp.le.s32.totalorder 1, %s17
      %p230 = scmp.lt.s32.totalorder %s17, 3
      %p231 = pnand %p229, %p230
      %p232 = pneg %p231
      // Predicated region
      $region33: #{tpu_custom_call.1} parent=5 // pred_check
        _
      $region34: #{tpu_custom_call.1} parent=5 // pred_check_branch
        %234 = sbr.rel (%p231) target = $region36
      $region35: #{tpu_custom_call.1} parent=5 // pred_region
        %s235 = ssub.s32 %s17, 1
        %s236 = sand.u32 %s22, 1
        %s237 = scalar_lea.sflag [#allocation3], %s236
        %s238 = sand.u32 %s30, 1
        %s239 = smul.addr %s238, 2304
        %s240 = scalar_lea.vmem [#allocation2], %s239
        // Predicated region
        $region37: #{tpu_custom_call.1} parent=35 // pred_check
          %p241 = pneg %p43
        $region38: #{tpu_custom_call.1} parent=35 // pred_check_branch
          %243 = sbr.rel (%p241) target = $region40
        $region39: #{tpu_custom_call.1} parent=35 // pred_region
          %245 = dma.done %s237, 36864
        $region40: #{tpu_custom_call.1} parent=35 // pred_fallthru
          _
        // Predicated region
        $region41: #{tpu_custom_call.1} parent=35 // pred_check
          %p246 = pneg %p64
        $region42: #{tpu_custom_call.1} parent=35 // pred_check_branch
          %248 = sbr.rel (%p246) target = $region44
        $region43: #{tpu_custom_call.1} parent=35 // pred_region
          %250 = dma.done [#allocation6], 48
        $region44: #{tpu_custom_call.1} parent=35 // pred_fallthru
          _
        %s251 = sand.u32 %s22, 1
        %s252 = scalar_lea.sflag [#allocation3], %s251
        %s253 = sand.u32 %s77, 1
        %s254 = smul.addr %s253, 2304
        %s255 = scalar_lea.vmem [#allocation7], %s254
        // Predicated region
        $region45: #{tpu_custom_call.1} parent=35 // pred_check
          %p256 = pneg %p90
        $region46: #{tpu_custom_call.1} parent=35 // pred_check_branch
          %258 = sbr.rel (%p256) target = $region48
        $region47: #{tpu_custom_call.1} parent=35 // pred_region
          %260 = dma.done %s252, 36864
        $region48: #{tpu_custom_call.1} parent=35 // pred_fallthru
          _
        %s261 = sand.u32 %s22, 1
        %s262 = scalar_lea.sflag [#allocation3], %s261
        %s263 = sand.u32 %s30, 1
        %s264 = smul.addr %s263, 2304
        %s265 = scalar_lea.vmem [#allocation2], %s264
        %p266 = pneg %p43
        %p267 = pneg %p40
        %p268 = pneg %p64
        %p269 = pneg %p61
        %s270 = sand.u32 %s22, 1
        %s271 = scalar_lea.sflag [#allocation3], %s270
        %s272 = sand.u32 %s77, 1
        %s273 = smul.addr %s272, 2304
        %s274 = scalar_lea.vmem [#allocation7], %s273
        %p275 = pneg %p90
        %p276 = pneg %p87
        %s277 = smul.u32 2, %s22
        %p278 = scmp.lt.s32.totalorder %s277, 3
        %s279 = scalar_select %p278, %s277, 3
        %s280 = smul.addr %s279, 48
        %s281 = smul.addr %s280, 8
        %s282 = scalar_lea.vmem %s3, %s281
        %p283 = pneg %p116
        %p284 = pneg %p113
        %p285 = pneg %p142
        %p286 = pneg %p139
        %s287 = sand.u32 %s129, 1
        %s288 = scalar_lea.sflag [#allocation4], %s287
        %s289 = sand.u32 %s129, 1
        %s290 = smul.addr %s289, 384
        %s291 = scalar_lea.vmem [#allocation8], %s290
        %s292 = smul.u32 2, %s22
        %s293 = smul.u32 2, %s22
        %s294 = smul.u32 2, %s22
        %p295 = scmp.lt.s32.totalorder %s294, 3
        %s296 = scalar_select %p295, %s294, 3
        %s297 = smul.addr %s296, 48
        %s298 = smul.addr %s297, 8
        %s299 = scalar_lea.vmem %s3, %s298
        %s300 = smul.u32 2, %s22
        %v301 = vld [vmem:[#allocation5] sm:$0x7]
        %v302 = vld [vmem:[%s240] sm:$0xff]
        %v303 = vld [vmem:[%s240 + $0x8] sm:$0xff]
        %v304 = vld [vmem:[%s240 + $0x10] sm:$0xff]
        %v305 = vld [vmem:[%s240 + $0x18] sm:$0xff]
        %v306 = vld [vmem:[%s240 + $0x20] sm:$0xff]
        %v307 = vld [vmem:[%s240 + $0x28] sm:$0xff]
        %v308 = vld [vmem:[%s240 + $0x30] sm:$0xff]
        %v309 = vld [vmem:[%s240 + $0x38] sm:$0xff]
        %v310 = vld [vmem:[%s240 + $0x40] sm:$0xff]
        %v311 = vld [vmem:[%s240 + $0x48] sm:$0xff]
        %v312 = vld [vmem:[%s240 + $0x50] sm:$0xff]
        %v313 = vld [vmem:[%s240 + $0x58] sm:$0xff]
        %v314 = vld [vmem:[%s240 + $0x60] sm:$0xff]
        %v315 = vld [vmem:[%s240 + $0x68] sm:$0xff]
        %v316 = vld [vmem:[%s240 + $0x70] sm:$0xff]
        %v317 = vld [vmem:[%s240 + $0x78] sm:$0xff]
        %v318 = vld [vmem:[%s240 + $0x80] sm:$0xff]
        %v319 = vld [vmem:[%s240 + $0x88] sm:$0xff]
        %v320 = vld [vmem:[%s240 + $0x90] sm:$0xff]
        %v321 = vld [vmem:[%s240 + $0x98] sm:$0xff]
        %v322 = vld [vmem:[%s240 + $0xa0] sm:$0xff]
        %v323 = vld [vmem:[%s240 + $0xa8] sm:$0xff]
        %v324 = vld [vmem:[%s240 + $0xb0] sm:$0xff]
        %v325 = vld [vmem:[%s240 + $0xb8] sm:$0xff]
        %v326 = vld [vmem:[%s240 + $0xc0] sm:$0xff]
        %v327 = vld [vmem:[%s240 + $0xc8] sm:$0xff]
        %v328 = vld [vmem:[%s240 + $0xd0] sm:$0xff]
        %v329 = vld [vmem:[%s240 + $0xd8] sm:$0xff]
        %v330 = vld [vmem:[%s240 + $0xe0] sm:$0xff]
        %v331 = vld [vmem:[%s240 + $0xe8] sm:$0xff]
        %v332 = vld [vmem:[%s240 + $0xf0] sm:$0xff]
        %v333 = vld [vmem:[%s240 + $0xf8] sm:$0xff]
        %v334 = vld [vmem:[%s240 + $0x100] sm:$0xff]
        %v335 = vld [vmem:[%s240 + $0x108] sm:$0xff]
        %v336 = vld [vmem:[%s240 + $0x110] sm:$0xff]
        %v337 = vld [vmem:[%s240 + $0x118] sm:$0xff]
        %v338 = vld [vmem:[%s240 + $0x120] sm:$0xff]
        %v339 = vld [vmem:[%s240 + $0x128] sm:$0xff]
        %v340 = vld [vmem:[%s240 + $0x130] sm:$0xff]
        %v341 = vld [vmem:[%s240 + $0x138] sm:$0xff]
        %v342 = vld [vmem:[%s240 + $0x140] sm:$0xff]
        %v343 = vld [vmem:[%s240 + $0x148] sm:$0xff]
        %v344 = vld [vmem:[%s240 + $0x150] sm:$0xff]
        %v345 = vld [vmem:[%s240 + $0x158] sm:$0xff]
        %v346 = vld [vmem:[%s240 + $0x160] sm:$0xff]
        %v347 = vld [vmem:[%s240 + $0x168] sm:$0xff]
        %v348 = vld [vmem:[%s240 + $0x170] sm:$0xff]
        %v349 = vld [vmem:[%s240 + $0x178] sm:$0xff]
        %v350 = vld [vmem:[%s240 + $0x180] sm:$0xff]
        %v351 = vld [vmem:[%s240 + $0x188] sm:$0xff]
        %v352 = vld [vmem:[%s240 + $0x190] sm:$0xff]
        %v353 = vld [vmem:[%s240 + $0x198] sm:$0xff]
        %v354 = vld [vmem:[%s240 + $0x1a0] sm:$0xff]
        %v355 = vld [vmem:[%s240 + $0x1a8] sm:$0xff]
        %v356 = vld [vmem:[%s240 + $0x1b0] sm:$0xff]
        %v357 = vld [vmem:[%s240 + $0x1b8] sm:$0xff]
        %v358 = vld [vmem:[%s240 + $0x1c0] sm:$0xff]
        %v359 = vld [vmem:[%s240 + $0x1c8] sm:$0xff]
        %v360 = vld [vmem:[%s240 + $0x1d0] sm:$0xff]
        %v361 = vld [vmem:[%s240 + $0x1d8] sm:$0xff]
        %v362 = vld [vmem:[%s240 + $0x1e0] sm:$0xff]
        %v363 = vld [vmem:[%s240 + $0x1e8] sm:$0xff]
        %v364 = vld [vmem:[%s240 + $0x1f0] sm:$0xff]
        %v365 = vld [vmem:[%s240 + $0x1f8] sm:$0xff]
        %v366 = vld [vmem:[%s240 + $0x200] sm:$0xff]
        %v367 = vld [vmem:[%s240 + $0x208] sm:$0xff]
        %v368 = vld [vmem:[%s240 + $0x210] sm:$0xff]
        %v369 = vld [vmem:[%s240 + $0x218] sm:$0xff]
        %v370 = vld [vmem:[%s240 + $0x220] sm:$0xff]
        %v371 = vld [vmem:[%s240 + $0x228] sm:$0xff]
        %v372 = vld [vmem:[%s240 + $0x230] sm:$0xff]
        %v373 = vld [vmem:[%s240 + $0x238] sm:$0xff]
        %v374 = vld [vmem:[%s240 + $0x240] sm:$0xff]
        %v375 = vld [vmem:[%s240 + $0x248] sm:$0xff]
        %v376 = vld [vmem:[%s240 + $0x250] sm:$0xff]
        %v377 = vld [vmem:[%s240 + $0x258] sm:$0xff]
        %v378 = vld [vmem:[%s240 + $0x260] sm:$0xff]
        %v379 = vld [vmem:[%s240 + $0x268] sm:$0xff]
        %v380 = vld [vmem:[%s240 + $0x270] sm:$0xff]
        %v381 = vld [vmem:[%s240 + $0x278] sm:$0xff]
        %v382 = vld [vmem:[%s240 + $0x280] sm:$0xff]
        %v383 = vld [vmem:[%s240 + $0x288] sm:$0xff]
        %v384 = vld [vmem:[%s240 + $0x290] sm:$0xff]
        %v385 = vld [vmem:[%s240 + $0x298] sm:$0xff]
        %v386 = vld [vmem:[%s240 + $0x2a0] sm:$0xff]
        %v387 = vld [vmem:[%s240 + $0x2a8] sm:$0xff]
        %v388 = vld [vmem:[%s240 + $0x2b0] sm:$0xff]
        %v389 = vld [vmem:[%s240 + $0x2b8] sm:$0xff]
        %v390 = vld [vmem:[%s240 + $0x2c0] sm:$0xff]
        %v391 = vld [vmem:[%s240 + $0x2c8] sm:$0xff]
        %v392 = vld [vmem:[%s240 + $0x2d0] sm:$0xff]
        %v393 = vld [vmem:[%s240 + $0x2d8] sm:$0xff]
        %v394 = vld [vmem:[%s240 + $0x2e0] sm:$0xff]
        %v395 = vld [vmem:[%s240 + $0x2e8] sm:$0xff]
        %v396 = vld [vmem:[%s240 + $0x2f0] sm:$0xff]
        %v397 = vld [vmem:[%s240 + $0x2f8] sm:$0xff]
        %v398 = vld [vmem:[%s240 + $0x300] sm:$0xff]
        %v399 = vld [vmem:[%s240 + $0x308] sm:$0xff]
        %v400 = vld [vmem:[%s240 + $0x310] sm:$0xff]
        %v401 = vld [vmem:[%s240 + $0x318] sm:$0xff]
        %v402 = vld [vmem:[%s240 + $0x320] sm:$0xff]
        %v403 = vld [vmem:[%s240 + $0x328] sm:$0xff]
        %v404 = vld [vmem:[%s240 + $0x330] sm:$0xff]
        %v405 = vld [vmem:[%s240 + $0x338] sm:$0xff]
        %v406 = vld [vmem:[%s240 + $0x340] sm:$0xff]
        %v407 = vld [vmem:[%s240 + $0x348] sm:$0xff]
        %v408 = vld [vmem:[%s240 + $0x350] sm:$0xff]
        %v409 = vld [vmem:[%s240 + $0x358] sm:$0xff]
        %v410 = vld [vmem:[%s240 + $0x360] sm:$0xff]
        %v411 = vld [vmem:[%s240 + $0x368] sm:$0xff]
        %v412 = vld [vmem:[%s240 + $0x370] sm:$0xff]
        %v413 = vld [vmem:[%s240 + $0x378] sm:$0xff]
        %v414 = vld [vmem:[%s240 + $0x380] sm:$0xff]
        %v415 = vld [vmem:[%s240 + $0x388] sm:$0xff]
        %v416 = vld [vmem:[%s240 + $0x390] sm:$0xff]
        %v417 = vld [vmem:[%s240 + $0x398] sm:$0xff]
        %v418 = vld [vmem:[%s240 + $0x3a0] sm:$0xff]
        %v419 = vld [vmem:[%s240 + $0x3a8] sm:$0xff]
        %v420 = vld [vmem:[%s240 + $0x3b0] sm:$0xff]
        %v421 = vld [vmem:[%s240 + $0x3b8] sm:$0xff]
        %v422 = vld [vmem:[%s240 + $0x3c0] sm:$0xff]
        %v423 = vld [vmem:[%s240 + $0x3c8] sm:$0xff]
        %v424 = vld [vmem:[%s240 + $0x3d0] sm:$0xff]
        %v425 = vld [vmem:[%s240 + $0x3d8] sm:$0xff]
        %v426 = vld [vmem:[%s240 + $0x3e0] sm:$0xff]
        %v427 = vld [vmem:[%s240 + $0x3e8] sm:$0xff]
        %v428 = vld [vmem:[%s240 + $0x3f0] sm:$0xff]
        %v429 = vld [vmem:[%s240 + $0x3f8] sm:$0xff]
        %v430 = vld [vmem:[%s240 + $0x400] sm:$0xff]
        %v431 = vld [vmem:[%s240 + $0x408] sm:$0xff]
        %v432 = vld [vmem:[%s240 + $0x410] sm:$0xff]
        %v433 = vld [vmem:[%s240 + $0x418] sm:$0xff]
        %v434 = vld [vmem:[%s240 + $0x420] sm:$0xff]
        %v435 = vld [vmem:[%s240 + $0x428] sm:$0xff]
        %v436 = vld [vmem:[%s240 + $0x430] sm:$0xff]
        %v437 = vld [vmem:[%s240 + $0x438] sm:$0xff]
        %v438 = vld [vmem:[%s240 + $0x440] sm:$0xff]
        %v439 = vld [vmem:[%s240 + $0x448] sm:$0xff]
        %v440 = vld [vmem:[%s240 + $0x450] sm:$0xff]
        %v441 = vld [vmem:[%s240 + $0x458] sm:$0xff]
        %v442 = vld [vmem:[%s240 + $0x460] sm:$0xff]
        %v443 = vld [vmem:[%s240 + $0x468] sm:$0xff]
        %v444 = vld [vmem:[%s240 + $0x470] sm:$0xff]
        %v445 = vld [vmem:[%s240 + $0x478] sm:$0xff]
        %v447 = vperm.slane %v301, 0
        %v448 = vperm.slane %v301, 1
        %v449 = vperm.slane %v301, 2
        %v453 = vadd.f32 %v302, %v447
        %v454 = vadd.f32 %v303, %v448
        %v455 = vadd.f32 %v304, %v449
        %v456 = vadd.f32 %v305, %v447
        %v457 = vadd.f32 %v306, %v448
        %v458 = vadd.f32 %v307, %v449
        %v459 = vadd.f32 %v308, %v447
        %v460 = vadd.f32 %v309, %v448
        %v461 = vadd.f32 %v310, %v449
        %v462 = vadd.f32 %v311, %v447
        %v463 = vadd.f32 %v312, %v448
        %v464 = vadd.f32 %v313, %v449
        %v465 = vadd.f32 %v314, %v447
        %v466 = vadd.f32 %v315, %v448
        %v467 = vadd.f32 %v316, %v449
        %v468 = vadd.f32 %v317, %v447
        %v469 = vadd.f32 %v318, %v448
        %v470 = vadd.f32 %v319, %v449
        %v471 = vadd.f32 %v320, %v447
        %v472 = vadd.f32 %v321, %v448
        %v473 = vadd.f32 %v322, %v449
        %v474 = vadd.f32 %v323, %v447
        %v475 = vadd.f32 %v324, %v448
        %v476 = vadd.f32 %v325, %v449
        %v477 = vadd.f32 %v326, %v447
        %v478 = vadd.f32 %v327, %v448
        %v479 = vadd.f32 %v328, %v449
        %v480 = vadd.f32 %v329, %v447
        %v481 = vadd.f32 %v330, %v448
        %v482 = vadd.f32 %v331, %v449
        %v483 = vadd.f32 %v332, %v447
        %v484 = vadd.f32 %v333, %v448
        %v485 = vadd.f32 %v334, %v449
        %v486 = vadd.f32 %v335, %v447
        %v487 = vadd.f32 %v336, %v448
        %v488 = vadd.f32 %v337, %v449
        %v489 = vadd.f32 %v338, %v447
        %v490 = vadd.f32 %v339, %v448
        %v491 = vadd.f32 %v340, %v449
        %v492 = vadd.f32 %v341, %v447
        %v493 = vadd.f32 %v342, %v448
        %v494 = vadd.f32 %v343, %v449
        %v495 = vadd.f32 %v344, %v447
        %v496 = vadd.f32 %v345, %v448
        %v497 = vadd.f32 %v346, %v449
        %v498 = vadd.f32 %v347, %v447
        %v499 = vadd.f32 %v348, %v448
        %v500 = vadd.f32 %v349, %v449
        %v501 = vadd.f32 %v350, %v447
        %v502 = vadd.f32 %v351, %v448
        %v503 = vadd.f32 %v352, %v449
        %v504 = vadd.f32 %v353, %v447
        %v505 = vadd.f32 %v354, %v448
        %v506 = vadd.f32 %v355, %v449
        %v507 = vadd.f32 %v356, %v447
        %v508 = vadd.f32 %v357, %v448
        %v509 = vadd.f32 %v358, %v449
        %v510 = vadd.f32 %v359, %v447
        %v511 = vadd.f32 %v360, %v448
        %v512 = vadd.f32 %v361, %v449
        %v513 = vadd.f32 %v362, %v447
        %v514 = vadd.f32 %v363, %v448
        %v515 = vadd.f32 %v364, %v449
        %v516 = vadd.f32 %v365, %v447
        %v517 = vadd.f32 %v366, %v448
        %v518 = vadd.f32 %v367, %v449
        %v519 = vadd.f32 %v368, %v447
        %v520 = vadd.f32 %v369, %v448
        %v521 = vadd.f32 %v370, %v449
        %v522 = vadd.f32 %v371, %v447
        %v523 = vadd.f32 %v372, %v448
        %v524 = vadd.f32 %v373, %v449
        %v525 = vadd.f32 %v374, %v447
        %v526 = vadd.f32 %v375, %v448
        %v527 = vadd.f32 %v376, %v449
        %v528 = vadd.f32 %v377, %v447
        %v529 = vadd.f32 %v378, %v448
        %v530 = vadd.f32 %v379, %v449
        %v531 = vadd.f32 %v380, %v447
        %v532 = vadd.f32 %v381, %v448
        %v533 = vadd.f32 %v382, %v449
        %v534 = vadd.f32 %v383, %v447
        %v535 = vadd.f32 %v384, %v448
        %v536 = vadd.f32 %v385, %v449
        %v537 = vadd.f32 %v386, %v447
        %v538 = vadd.f32 %v387, %v448
        %v539 = vadd.f32 %v388, %v449
        %v540 = vadd.f32 %v389, %v447
        %v541 = vadd.f32 %v390, %v448
        %v542 = vadd.f32 %v391, %v449
        %v543 = vadd.f32 %v392, %v447
        %v544 = vadd.f32 %v393, %v448
        %v545 = vadd.f32 %v394, %v449
        %v546 = vadd.f32 %v395, %v447
        %v547 = vadd.f32 %v396, %v448
        %v548 = vadd.f32 %v397, %v449
        %v549 = vadd.f32 %v398, %v447
        %v550 = vadd.f32 %v399, %v448
        %v551 = vadd.f32 %v400, %v449
        %v552 = vadd.f32 %v401, %v447
        %v553 = vadd.f32 %v402, %v448
        %v554 = vadd.f32 %v403, %v449
        %v555 = vadd.f32 %v404, %v447
        %v556 = vadd.f32 %v405, %v448
        %v557 = vadd.f32 %v406, %v449
        %v558 = vadd.f32 %v407, %v447
        %v559 = vadd.f32 %v408, %v448
        %v560 = vadd.f32 %v409, %v449
        %v561 = vadd.f32 %v410, %v447
        %v562 = vadd.f32 %v411, %v448
        %v563 = vadd.f32 %v412, %v449
        %v564 = vadd.f32 %v413, %v447
        %v565 = vadd.f32 %v414, %v448
        %v566 = vadd.f32 %v415, %v449
        %v567 = vadd.f32 %v416, %v447
        %v568 = vadd.f32 %v417, %v448
        %v569 = vadd.f32 %v418, %v449
        %v570 = vadd.f32 %v419, %v447
        %v571 = vadd.f32 %v420, %v448
        %v572 = vadd.f32 %v421, %v449
        %v573 = vadd.f32 %v422, %v447
        %v574 = vadd.f32 %v423, %v448
        %v575 = vadd.f32 %v424, %v449
        %v576 = vadd.f32 %v425, %v447
        %v577 = vadd.f32 %v426, %v448
        %v578 = vadd.f32 %v427, %v449
        %v579 = vadd.f32 %v428, %v447
        %v580 = vadd.f32 %v429, %v448
        %v581 = vadd.f32 %v430, %v449
        %v582 = vadd.f32 %v431, %v447
        %v583 = vadd.f32 %v432, %v448
        %v584 = vadd.f32 %v433, %v449
        %v585 = vadd.f32 %v434, %v447
        %v586 = vadd.f32 %v435, %v448
        %v587 = vadd.f32 %v436, %v449
        %v588 = vadd.f32 %v437, %v447
        %v589 = vadd.f32 %v438, %v448
        %v590 = vadd.f32 %v439, %v449
        %v591 = vadd.f32 %v440, %v447
        %v592 = vadd.f32 %v441, %v448
        %v593 = vadd.f32 %v442, %v449
        %v594 = vadd.f32 %v443, %v447
        %v595 = vadd.f32 %v444, %v448
        %v596 = vadd.f32 %v445, %v449
        %v597 = vmax.f32 %v453, %v454
        %v598 = vmax.f32 %v597, %v455
        %599 = vmax.xlane.f32.xlu0 %v598
        %v600 = vpop.xlane.xlu0 %599
        %v601 = vmax.f32 %v456, %v457
        %v602 = vmax.f32 %v601, %v458
        %603 = vmax.xlane.f32.xlu0 %v602
        %v604 = vpop.xlane.xlu0 %603
        %v605 = vmax.f32 %v459, %v460
        %v606 = vmax.f32 %v605, %v461
        %607 = vmax.xlane.f32.xlu0 %v606
        %v608 = vpop.xlane.xlu0 %607
        %v609 = vmax.f32 %v462, %v463
        %v610 = vmax.f32 %v609, %v464
        %611 = vmax.xlane.f32.xlu0 %v610
        %v612 = vpop.xlane.xlu0 %611
        %v613 = vmax.f32 %v465, %v466
        %v614 = vmax.f32 %v613, %v467
        %615 = vmax.xlane.f32.xlu0 %v614
        %v616 = vpop.xlane.xlu0 %615
        %v617 = vmax.f32 %v468, %v469
        %v618 = vmax.f32 %v617, %v470
        %619 = vmax.xlane.f32.xlu0 %v618
        %v620 = vpop.xlane.xlu0 %619
        %v621 = vmax.f32 %v471, %v472
        %v622 = vmax.f32 %v621, %v473
        %623 = vmax.xlane.f32.xlu0 %v622
        %v624 = vpop.xlane.xlu0 %623
        %v625 = vmax.f32 %v474, %v475
        %v626 = vmax.f32 %v625, %v476
        %627 = vmax.xlane.f32.xlu0 %v626
        %v628 = vpop.xlane.xlu0 %627
        %v629 = vmax.f32 %v477, %v478
        %v630 = vmax.f32 %v629, %v479
        %631 = vmax.xlane.f32.xlu0 %v630
        %v632 = vpop.xlane.xlu0 %631
        %v633 = vmax.f32 %v480, %v481
        %v634 = vmax.f32 %v633, %v482
        %635 = vmax.xlane.f32.xlu0 %v634
        %v636 = vpop.xlane.xlu0 %635
        %v637 = vmax.f32 %v483, %v484
        %v638 = vmax.f32 %v637, %v485
        %639 = vmax.xlane.f32.xlu0 %v638
        %v640 = vpop.xlane.xlu0 %639
        %v641 = vmax.f32 %v486, %v487
        %v642 = vmax.f32 %v641, %v488
        %643 = vmax.xlane.f32.xlu0 %v642
        %v644 = vpop.xlane.xlu0 %643
        %v645 = vmax.f32 %v489, %v490
        %v646 = vmax.f32 %v645, %v491
        %647 = vmax.xlane.f32.xlu0 %v646
        %v648 = vpop.xlane.xlu0 %647
        %v649 = vmax.f32 %v492, %v493
        %v650 = vmax.f32 %v649, %v494
        %651 = vmax.xlane.f32.xlu0 %v650
        %v652 = vpop.xlane.xlu0 %651
        %v653 = vmax.f32 %v495, %v496
        %v654 = vmax.f32 %v653, %v497
        %655 = vmax.xlane.f32.xlu0 %v654
        %v656 = vpop.xlane.xlu0 %655
        %v657 = vmax.f32 %v498, %v499
        %v658 = vmax.f32 %v657, %v500
        %659 = vmax.xlane.f32.xlu0 %v658
        %v660 = vpop.xlane.xlu0 %659
        %v661 = vmax.f32 %v501, %v502
        %v662 = vmax.f32 %v661, %v503
        %663 = vmax.xlane.f32.xlu0 %v662
        %v664 = vpop.xlane.xlu0 %663
        %v665 = vmax.f32 %v504, %v505
        %v666 = vmax.f32 %v665, %v506
        %667 = vmax.xlane.f32.xlu0 %v666
        %v668 = vpop.xlane.xlu0 %667
        %v669 = vmax.f32 %v507, %v508
        %v670 = vmax.f32 %v669, %v509
        %671 = vmax.xlane.f32.xlu0 %v670
        %v672 = vpop.xlane.xlu0 %671
        %v673 = vmax.f32 %v510, %v511
        %v674 = vmax.f32 %v673, %v512
        %675 = vmax.xlane.f32.xlu0 %v674
        %v676 = vpop.xlane.xlu0 %675
        %v677 = vmax.f32 %v513, %v514
        %v678 = vmax.f32 %v677, %v515
        %679 = vmax.xlane.f32.xlu0 %v678
        %v680 = vpop.xlane.xlu0 %679
        %v681 = vmax.f32 %v516, %v517
        %v682 = vmax.f32 %v681, %v518
        %683 = vmax.xlane.f32.xlu0 %v682
        %v684 = vpop.xlane.xlu0 %683
        %v685 = vmax.f32 %v519, %v520
        %v686 = vmax.f32 %v685, %v521
        %687 = vmax.xlane.f32.xlu0 %v686
        %v688 = vpop.xlane.xlu0 %687
        %v689 = vmax.f32 %v522, %v523
        %v690 = vmax.f32 %v689, %v524
        %691 = vmax.xlane.f32.xlu0 %v690
        %v692 = vpop.xlane.xlu0 %691
        %v693 = vmax.f32 %v525, %v526
        %v694 = vmax.f32 %v693, %v527
        %695 = vmax.xlane.f32.xlu0 %v694
        %v696 = vpop.xlane.xlu0 %695
        %v697 = vmax.f32 %v528, %v529
        %v698 = vmax.f32 %v697, %v530
        %699 = vmax.xlane.f32.xlu0 %v698
        %v700 = vpop.xlane.xlu0 %699
        %v701 = vmax.f32 %v531, %v532
        %v702 = vmax.f32 %v701, %v533
        %703 = vmax.xlane.f32.xlu0 %v702
        %v704 = vpop.xlane.xlu0 %703
        %v705 = vmax.f32 %v534, %v535
        %v706 = vmax.f32 %v705, %v536
        %707 = vmax.xlane.f32.xlu0 %v706
        %v708 = vpop.xlane.xlu0 %707
        %v709 = vmax.f32 %v537, %v538
        %v710 = vmax.f32 %v709, %v539
        %711 = vmax.xlane.f32.xlu0 %v710
        %v712 = vpop.xlane.xlu0 %711
        %v713 = vmax.f32 %v540, %v541
        %v714 = vmax.f32 %v713, %v542
        %715 = vmax.xlane.f32.xlu0 %v714
        %v716 = vpop.xlane.xlu0 %715
        %v717 = vmax.f32 %v543, %v544
        %v718 = vmax.f32 %v717, %v545
        %719 = vmax.xlane.f32.xlu0 %v718
        %v720 = vpop.xlane.xlu0 %719
        %v721 = vmax.f32 %v546, %v547
        %v722 = vmax.f32 %v721, %v548
        %723 = vmax.xlane.f32.xlu0 %v722
        %v724 = vpop.xlane.xlu0 %723
        %v725 = vmax.f32 %v549, %v550
        %v726 = vmax.f32 %v725, %v551
        %727 = vmax.xlane.f32.xlu0 %v726
        %v728 = vpop.xlane.xlu0 %727
        %v729 = vmax.f32 %v552, %v553
        %v730 = vmax.f32 %v729, %v554
        %731 = vmax.xlane.f32.xlu0 %v730
        %v732 = vpop.xlane.xlu0 %731
        %v733 = vmax.f32 %v555, %v556
        %v734 = vmax.f32 %v733, %v557
        %735 = vmax.xlane.f32.xlu0 %v734
        %v736 = vpop.xlane.xlu0 %735
        %v737 = vmax.f32 %v558, %v559
        %v738 = vmax.f32 %v737, %v560
        %739 = vmax.xlane.f32.xlu0 %v738
        %v740 = vpop.xlane.xlu0 %739
        %v741 = vmax.f32 %v561, %v562
        %v742 = vmax.f32 %v741, %v563
        %743 = vmax.xlane.f32.xlu0 %v742
        %v744 = vpop.xlane.xlu0 %743
        %v745 = vmax.f32 %v564, %v565
        %v746 = vmax.f32 %v745, %v566
        %747 = vmax.xlane.f32.xlu0 %v746
        %v748 = vpop.xlane.xlu0 %747
        %v749 = vmax.f32 %v567, %v568
        %v750 = vmax.f32 %v749, %v569
        %751 = vmax.xlane.f32.xlu0 %v750
        %v752 = vpop.xlane.xlu0 %751
        %v753 = vmax.f32 %v570, %v571
        %v754 = vmax.f32 %v753, %v572
        %755 = vmax.xlane.f32.xlu0 %v754
        %v756 = vpop.xlane.xlu0 %755
        %v757 = vmax.f32 %v573, %v574
        %v758 = vmax.f32 %v757, %v575
        %759 = vmax.xlane.f32.xlu0 %v758
        %v760 = vpop.xlane.xlu0 %759
        %v761 = vmax.f32 %v576, %v577
        %v762 = vmax.f32 %v761, %v578
        %763 = vmax.xlane.f32.xlu0 %v762
        %v764 = vpop.xlane.xlu0 %763
        %v765 = vmax.f32 %v579, %v580
        %v766 = vmax.f32 %v765, %v581
        %767 = vmax.xlane.f32.xlu0 %v766
        %v768 = vpop.xlane.xlu0 %767
        %v769 = vmax.f32 %v582, %v583
        %v770 = vmax.f32 %v769, %v584
        %771 = vmax.xlane.f32.xlu0 %v770
        %v772 = vpop.xlane.xlu0 %771
        %v773 = vmax.f32 %v585, %v586
        %v774 = vmax.f32 %v773, %v587
        %775 = vmax.xlane.f32.xlu0 %v774
        %v776 = vpop.xlane.xlu0 %775
        %v777 = vmax.f32 %v588, %v589
        %v778 = vmax.f32 %v777, %v590
        %779 = vmax.xlane.f32.xlu0 %v778
        %v780 = vpop.xlane.xlu0 %779
        %v781 = vmax.f32 %v591, %v592
        %v782 = vmax.f32 %v781, %v593
        %783 = vmax.xlane.f32.xlu0 %v782
        %v784 = vpop.xlane.xlu0 %783
        %v785 = vmax.f32 %v594, %v595
        %v786 = vmax.f32 %v785, %v596
        %787 = vmax.xlane.f32.xlu0 %v786
        %v788 = vpop.xlane.xlu0 %787
        %v789 = vsub.f32 %v453, %v600
        %v790 = vsub.f32 %v454, %v600
        %v791 = vsub.f32 %v455, %v600
        %v792 = vsub.f32 %v456, %v604
        %v793 = vsub.f32 %v457, %v604
        %v794 = vsub.f32 %v458, %v604
        %v795 = vsub.f32 %v459, %v608
        %v796 = vsub.f32 %v460, %v608
        %v797 = vsub.f32 %v461, %v608
        %v798 = vsub.f32 %v462, %v612
        %v799 = vsub.f32 %v463, %v612
        %v800 = vsub.f32 %v464, %v612
        %v801 = vsub.f32 %v465, %v616
        %v802 = vsub.f32 %v466, %v616
        %v803 = vsub.f32 %v467, %v616
        %v804 = vsub.f32 %v468, %v620
        %v805 = vsub.f32 %v469, %v620
        %v806 = vsub.f32 %v470, %v620
        %v807 = vsub.f32 %v471, %v624
        %v808 = vsub.f32 %v472, %v624
        %v809 = vsub.f32 %v473, %v624
        %v810 = vsub.f32 %v474, %v628
        %v811 = vsub.f32 %v475, %v628
        %v812 = vsub.f32 %v476, %v628
        %v813 = vsub.f32 %v477, %v632
        %v814 = vsub.f32 %v478, %v632
        %v815 = vsub.f32 %v479, %v632
        %v816 = vsub.f32 %v480, %v636
        %v817 = vsub.f32 %v481, %v636
        %v818 = vsub.f32 %v482, %v636
        %v819 = vsub.f32 %v483, %v640
        %v820 = vsub.f32 %v484, %v640
        %v821 = vsub.f32 %v485, %v640
        %v822 = vsub.f32 %v486, %v644
        %v823 = vsub.f32 %v487, %v644
        %v824 = vsub.f32 %v488, %v644
        %v825 = vsub.f32 %v489, %v648
        %v826 = vsub.f32 %v490, %v648
        %v827 = vsub.f32 %v491, %v648
        %v828 = vsub.f32 %v492, %v652
        %v829 = vsub.f32 %v493, %v652
        %v830 = vsub.f32 %v494, %v652
        %v831 = vsub.f32 %v495, %v656
        %v832 = vsub.f32 %v496, %v656
        %v833 = vsub.f32 %v497, %v656
        %v834 = vsub.f32 %v498, %v660
        %v835 = vsub.f32 %v499, %v660
        %v836 = vsub.f32 %v500, %v660
        %v837 = vsub.f32 %v501, %v664
        %v838 = vsub.f32 %v502, %v664
        %v839 = vsub.f32 %v503, %v664
        %v840 = vsub.f32 %v504, %v668
        %v841 = vsub.f32 %v505, %v668
        %v842 = vsub.f32 %v506, %v668
        %v843 = vsub.f32 %v507, %v672
        %v844 = vsub.f32 %v508, %v672
        %v845 = vsub.f32 %v509, %v672
        %v846 = vsub.f32 %v510, %v676
        %v847 = vsub.f32 %v511, %v676
        %v848 = vsub.f32 %v512, %v676
        %v849 = vsub.f32 %v513, %v680
        %v850 = vsub.f32 %v514, %v680
        %v851 = vsub.f32 %v515, %v680
        %v852 = vsub.f32 %v516, %v684
        %v853 = vsub.f32 %v517, %v684
        %v854 = vsub.f32 %v518, %v684
        %v855 = vsub.f32 %v519, %v688
        %v856 = vsub.f32 %v520, %v688
        %v857 = vsub.f32 %v521, %v688
        %v858 = vsub.f32 %v522, %v692
        %v859 = vsub.f32 %v523, %v692
        %v860 = vsub.f32 %v524, %v692
        %v861 = vsub.f32 %v525, %v696
        %v862 = vsub.f32 %v526, %v696
        %v863 = vsub.f32 %v527, %v696
        %v864 = vsub.f32 %v528, %v700
        %v865 = vsub.f32 %v529, %v700
        %v866 = vsub.f32 %v530, %v700
        %v867 = vsub.f32 %v531, %v704
        %v868 = vsub.f32 %v532, %v704
        %v869 = vsub.f32 %v533, %v704
        %v870 = vsub.f32 %v534, %v708
        %v871 = vsub.f32 %v535, %v708
        %v872 = vsub.f32 %v536, %v708
        %v873 = vsub.f32 %v537, %v712
        %v874 = vsub.f32 %v538, %v712
        %v875 = vsub.f32 %v539, %v712
        %v876 = vsub.f32 %v540, %v716
        %v877 = vsub.f32 %v541, %v716
        %v878 = vsub.f32 %v542, %v716
        %v879 = vsub.f32 %v543, %v720
        %v880 = vsub.f32 %v544, %v720
        %v881 = vsub.f32 %v545, %v720
        %v882 = vsub.f32 %v546, %v724
        %v883 = vsub.f32 %v547, %v724
        %v884 = vsub.f32 %v548, %v724
        %v885 = vsub.f32 %v549, %v728
        %v886 = vsub.f32 %v550, %v728
        %v887 = vsub.f32 %v551, %v728
        %v888 = vsub.f32 %v552, %v732
        %v889 = vsub.f32 %v553, %v732
        %v890 = vsub.f32 %v554, %v732
        %v891 = vsub.f32 %v555, %v736
        %v892 = vsub.f32 %v556, %v736
        %v893 = vsub.f32 %v557, %v736
        %v894 = vsub.f32 %v558, %v740
        %v895 = vsub.f32 %v559, %v740
        %v896 = vsub.f32 %v560, %v740
        %v897 = vsub.f32 %v561, %v744
        %v898 = vsub.f32 %v562, %v744
        %v899 = vsub.f32 %v563, %v744
        %v900 = vsub.f32 %v564, %v748
        %v901 = vsub.f32 %v565, %v748
        %v902 = vsub.f32 %v566, %v748
        %v903 = vsub.f32 %v567, %v752
        %v904 = vsub.f32 %v568, %v752
        %v905 = vsub.f32 %v569, %v752
        %v906 = vsub.f32 %v570, %v756
        %v907 = vsub.f32 %v571, %v756
        %v908 = vsub.f32 %v572, %v756
        %v909 = vsub.f32 %v573, %v760
        %v910 = vsub.f32 %v574, %v760
        %v911 = vsub.f32 %v575, %v760
        %v912 = vsub.f32 %v576, %v764
        %v913 = vsub.f32 %v577, %v764
        %v914 = vsub.f32 %v578, %v764
        %v915 = vsub.f32 %v579, %v768
        %v916 = vsub.f32 %v580, %v768
        %v917 = vsub.f32 %v581, %v768
        %v918 = vsub.f32 %v582, %v772
        %v919 = vsub.f32 %v583, %v772
        %v920 = vsub.f32 %v584, %v772
        %v921 = vsub.f32 %v585, %v776
        %v922 = vsub.f32 %v586, %v776
        %v923 = vsub.f32 %v587, %v776
        %v924 = vsub.f32 %v588, %v780
        %v925 = vsub.f32 %v589, %v780
        %v926 = vsub.f32 %v590, %v780
        %v927 = vsub.f32 %v591, %v784
        %v928 = vsub.f32 %v592, %v784
        %v929 = vsub.f32 %v593, %v784
        %v930 = vsub.f32 %v594, %v788
        %v931 = vsub.f32 %v595, %v788
        %v932 = vsub.f32 %v596, %v788
        %v933 = vmul.f32 %v789, 1.442695
        %v934 = vpow.pop %v933
        %v935 = vmul.f32 %v790, 1.442695
        %v936 = vpow.pop %v935
        %v937 = vmul.f32 %v791, 1.442695
        %v938 = vpow.pop %v937
        %v939 = vmul.f32 %v792, 1.442695
        %v940 = vpow.pop %v939
        %v941 = vmul.f32 %v793, 1.442695
        %v942 = vpow.pop %v941
        %v943 = vmul.f32 %v794, 1.442695
        %v944 = vpow.pop %v943
        %v945 = vmul.f32 %v795, 1.442695
        %v946 = vpow.pop %v945
        %v947 = vmul.f32 %v796, 1.442695
        %v948 = vpow.pop %v947
        %v949 = vmul.f32 %v797, 1.442695
        %v950 = vpow.pop %v949
        %v951 = vmul.f32 %v798, 1.442695
        %v952 = vpow.pop %v951
        %v953 = vmul.f32 %v799, 1.442695
        %v954 = vpow.pop %v953
        %v955 = vmul.f32 %v800, 1.442695
        %v956 = vpow.pop %v955
        %v957 = vmul.f32 %v801, 1.442695
        %v958 = vpow.pop %v957
        %v959 = vmul.f32 %v802, 1.442695
        %v960 = vpow.pop %v959
        %v961 = vmul.f32 %v803, 1.442695
        %v962 = vpow.pop %v961
        %v963 = vmul.f32 %v804, 1.442695
        %v964 = vpow.pop %v963
        %v965 = vmul.f32 %v805, 1.442695
        %v966 = vpow.pop %v965
        %v967 = vmul.f32 %v806, 1.442695
        %v968 = vpow.pop %v967
        %v969 = vmul.f32 %v807, 1.442695
        %v970 = vpow.pop %v969
        %v971 = vmul.f32 %v808, 1.442695
        %v972 = vpow.pop %v971
        %v973 = vmul.f32 %v809, 1.442695
        %v974 = vpow.pop %v973
        %v975 = vmul.f32 %v810, 1.442695
        %v976 = vpow.pop %v975
        %v977 = vmul.f32 %v811, 1.442695
        %v978 = vpow.pop %v977
        %v979 = vmul.f32 %v812, 1.442695
        %v980 = vpow.pop %v979
        %v981 = vmul.f32 %v813, 1.442695
        %v982 = vpow.pop %v981
        %v983 = vmul.f32 %v814, 1.442695
        %v984 = vpow.pop %v983
        %v985 = vmul.f32 %v815, 1.442695
        %v986 = vpow.pop %v985
        %v987 = vmul.f32 %v816, 1.442695
        %v988 = vpow.pop %v987
        %v989 = vmul.f32 %v817, 1.442695
        %v990 = vpow.pop %v989
        %v991 = vmul.f32 %v818, 1.442695
        %v992 = vpow.pop %v991
        %v993 = vmul.f32 %v819, 1.442695
        %v994 = vpow.pop %v993
        %v995 = vmul.f32 %v820, 1.442695
        %v996 = vpow.pop %v995
        %v997 = vmul.f32 %v821, 1.442695
        %v998 = vpow.pop %v997
        %v999 = vmul.f32 %v822, 1.442695
        %v1000 = vpow.pop %v999
        %v1001 = vmul.f32 %v823, 1.442695
        %v1002 = vpow.pop %v1001
        %v1003 = vmul.f32 %v824, 1.442695
        %v1004 = vpow.pop %v1003
        %v1005 = vmul.f32 %v825, 1.442695
        %v1006 = vpow.pop %v1005
        %v1007 = vmul.f32 %v826, 1.442695
        %v1008 = vpow.pop %v1007
        %v1009 = vmul.f32 %v827, 1.442695
        %v1010 = vpow.pop %v1009
        %v1011 = vmul.f32 %v828, 1.442695
        %v1012 = vpow.pop %v1011
        %v1013 = vmul.f32 %v829, 1.442695
        %v1014 = vpow.pop %v1013
        %v1015 = vmul.f32 %v830, 1.442695
        %v1016 = vpow.pop %v1015
        %v1017 = vmul.f32 %v831, 1.442695
        %v1018 = vpow.pop %v1017
        %v1019 = vmul.f32 %v832, 1.442695
        %v1020 = vpow.pop %v1019
        %v1021 = vmul.f32 %v833, 1.442695
        %v1022 = vpow.pop %v1021
        %v1023 = vmul.f32 %v834, 1.442695
        %v1024 = vpow.pop %v1023
        %v1025 = vmul.f32 %v835, 1.442695
        %v1026 = vpow.pop %v1025
        %v1027 = vmul.f32 %v836, 1.442695
        %v1028 = vpow.pop %v1027
        %v1029 = vmul.f32 %v837, 1.442695
        %v1030 = vpow.pop %v1029
        %v1031 = vmul.f32 %v838, 1.442695
        %v1032 = vpow.pop %v1031
        %v1033 = vmul.f32 %v839, 1.442695
        %v1034 = vpow.pop %v1033
        %v1035 = vmul.f32 %v840, 1.442695
        %v1036 = vpow.pop %v1035
        %v1037 = vmul.f32 %v841, 1.442695
        %v1038 = vpow.pop %v1037
        %v1039 = vmul.f32 %v842, 1.442695
        %v1040 = vpow.pop %v1039
        %v1041 = vmul.f32 %v843, 1.442695
        %v1042 = vpow.pop %v1041
        %v1043 = vmul.f32 %v844, 1.442695
        %v1044 = vpow.pop %v1043
        %v1045 = vmul.f32 %v845, 1.442695
        %v1046 = vpow.pop %v1045
        %v1047 = vmul.f32 %v846, 1.442695
        %v1048 = vpow.pop %v1047
        %v1049 = vmul.f32 %v847, 1.442695
        %v1050 = vpow.pop %v1049
        %v1051 = vmul.f32 %v848, 1.442695
        %v1052 = vpow.pop %v1051
        %v1053 = vmul.f32 %v849, 1.442695
        %v1054 = vpow.pop %v1053
        %v1055 = vmul.f32 %v850, 1.442695
        %v1056 = vpow.pop %v1055
        %v1057 = vmul.f32 %v851, 1.442695
        %v1058 = vpow.pop %v1057
        %v1059 = vmul.f32 %v852, 1.442695
        %v1060 = vpow.pop %v1059
        %v1061 = vmul.f32 %v853, 1.442695
        %v1062 = vpow.pop %v1061
        %v1063 = vmul.f32 %v854, 1.442695
        %v1064 = vpow.pop %v1063
        %v1065 = vmul.f32 %v855, 1.442695
        %v1066 = vpow.pop %v1065
        %v1067 = vmul.f32 %v856, 1.442695
        %v1068 = vpow.pop %v1067
        %v1069 = vmul.f32 %v857, 1.442695
        %v1070 = vpow.pop %v1069
        %v1071 = vmul.f32 %v858, 1.442695
        %v1072 = vpow.pop %v1071
        %v1073 = vmul.f32 %v859, 1.442695
        %v1074 = vpow.pop %v1073
        %v1075 = vmul.f32 %v860, 1.442695
        %v1076 = vpow.pop %v1075
        %v1077 = vmul.f32 %v861, 1.442695
        %v1078 = vpow.pop %v1077
        %v1079 = vmul.f32 %v862, 1.442695
        %v1080 = vpow.pop %v1079
        %v1081 = vmul.f32 %v863, 1.442695
        %v1082 = vpow.pop %v1081
        %v1083 = vmul.f32 %v864, 1.442695
        %v1084 = vpow.pop %v1083
        %v1085 = vmul.f32 %v865, 1.442695
        %v1086 = vpow.pop %v1085
        %v1087 = vmul.f32 %v866, 1.442695
        %v1088 = vpow.pop %v1087
        %v1089 = vmul.f32 %v867, 1.442695
        %v1090 = vpow.pop %v1089
        %v1091 = vmul.f32 %v868, 1.442695
        %v1092 = vpow.pop %v1091
        %v1093 = vmul.f32 %v869, 1.442695
        %v1094 = vpow.pop %v1093
        %v1095 = vmul.f32 %v870, 1.442695
        %v1096 = vpow.pop %v1095
        %v1097 = vmul.f32 %v871, 1.442695
        %v1098 = vpow.pop %v1097
        %v1099 = vmul.f32 %v872, 1.442695
        %v1100 = vpow.pop %v1099
        %v1101 = vmul.f32 %v873, 1.442695
        %v1102 = vpow.pop %v1101
        %v1103 = vmul.f32 %v874, 1.442695
        %v1104 = vpow.pop %v1103
        %v1105 = vmul.f32 %v875, 1.442695
        %v1106 = vpow.pop %v1105
        %v1107 = vmul.f32 %v876, 1.442695
        %v1108 = vpow.pop %v1107
        %v1109 = vmul.f32 %v877, 1.442695
        %v1110 = vpow.pop %v1109
        %v1111 = vmul.f32 %v878, 1.442695
        %v1112 = vpow.pop %v1111
        %v1113 = vmul.f32 %v879, 1.442695
        %v1114 = vpow.pop %v1113
        %v1115 = vmul.f32 %v880, 1.442695
        %v1116 = vpow.pop %v1115
        %v1117 = vmul.f32 %v881, 1.442695
        %v1118 = vpow.pop %v1117
        %v1119 = vmul.f32 %v882, 1.442695
        %v1120 = vpow.pop %v1119
        %v1121 = vmul.f32 %v883, 1.442695
        %v1122 = vpow.pop %v1121
        %v1123 = vmul.f32 %v884, 1.442695
        %v1124 = vpow.pop %v1123
        %v1125 = vmul.f32 %v885, 1.442695
        %v1126 = vpow.pop %v1125
        %v1127 = vmul.f32 %v886, 1.442695
        %v1128 = vpow.pop %v1127
        %v1129 = vmul.f32 %v887, 1.442695
        %v1130 = vpow.pop %v1129
        %v1131 = vmul.f32 %v888, 1.442695
        %v1132 = vpow.pop %v1131
        %v1133 = vmul.f32 %v889, 1.442695
        %v1134 = vpow.pop %v1133
        %v1135 = vmul.f32 %v890, 1.442695
        %v1136 = vpow.pop %v1135
        %v1137 = vmul.f32 %v891, 1.442695
        %v1138 = vpow.pop %v1137
        %v1139 = vmul.f32 %v892, 1.442695
        %v1140 = vpow.pop %v1139
        %v1141 = vmul.f32 %v893, 1.442695
        %v1142 = vpow.pop %v1141
        %v1143 = vmul.f32 %v894, 1.442695
        %v1144 = vpow.pop %v1143
        %v1145 = vmul.f32 %v895, 1.442695
        %v1146 = vpow.pop %v1145
        %v1147 = vmul.f32 %v896, 1.442695
        %v1148 = vpow.pop %v1147
        %v1149 = vmul.f32 %v897, 1.442695
        %v1150 = vpow.pop %v1149
        %v1151 = vmul.f32 %v898, 1.442695
        %v1152 = vpow.pop %v1151
        %v1153 = vmul.f32 %v899, 1.442695
        %v1154 = vpow.pop %v1153
        %v1155 = vmul.f32 %v900, 1.442695
        %v1156 = vpow.pop %v1155
        %v1157 = vmul.f32 %v901, 1.442695
        %v1158 = vpow.pop %v1157
        %v1159 = vmul.f32 %v902, 1.442695
        %v1160 = vpow.pop %v1159
        %v1161 = vmul.f32 %v903, 1.442695
        %v1162 = vpow.pop %v1161
        %v1163 = vmul.f32 %v904, 1.442695
        %v1164 = vpow.pop %v1163
        %v1165 = vmul.f32 %v905, 1.442695
        %v1166 = vpow.pop %v1165
        %v1167 = vmul.f32 %v906, 1.442695
        %v1168 = vpow.pop %v1167
        %v1169 = vmul.f32 %v907, 1.442695
        %v1170 = vpow.pop %v1169
        %v1171 = vmul.f32 %v908, 1.442695
        %v1172 = vpow.pop %v1171
        %v1173 = vmul.f32 %v909, 1.442695
        %v1174 = vpow.pop %v1173
        %v1175 = vmul.f32 %v910, 1.442695
        %v1176 = vpow.pop %v1175
        %v1177 = vmul.f32 %v911, 1.442695
        %v1178 = vpow.pop %v1177
        %v1179 = vmul.f32 %v912, 1.442695
        %v1180 = vpow.pop %v1179
        %v1181 = vmul.f32 %v913, 1.442695
        %v1182 = vpow.pop %v1181
        %v1183 = vmul.f32 %v914, 1.442695
        %v1184 = vpow.pop %v1183
        %v1185 = vmul.f32 %v915, 1.442695
        %v1186 = vpow.pop %v1185
        %v1187 = vmul.f32 %v916, 1.442695
        %v1188 = vpow.pop %v1187
        %v1189 = vmul.f32 %v917, 1.442695
        %v1190 = vpow.pop %v1189
        %v1191 = vmul.f32 %v918, 1.442695
        %v1192 = vpow.pop %v1191
        %v1193 = vmul.f32 %v919, 1.442695
        %v1194 = vpow.pop %v1193
        %v1195 = vmul.f32 %v920, 1.442695
        %v1196 = vpow.pop %v1195
        %v1197 = vmul.f32 %v921, 1.442695
        %v1198 = vpow.pop %v1197
        %v1199 = vmul.f32 %v922, 1.442695
        %v1200 = vpow.pop %v1199
        %v1201 = vmul.f32 %v923, 1.442695
        %v1202 = vpow.pop %v1201
        %v1203 = vmul.f32 %v924, 1.442695
        %v1204 = vpow.pop %v1203
        %v1205 = vmul.f32 %v925, 1.442695
        %v1206 = vpow.pop %v1205
        %v1207 = vmul.f32 %v926, 1.442695
        %v1208 = vpow.pop %v1207
        %v1209 = vmul.f32 %v927, 1.442695
        %v1210 = vpow.pop %v1209
        %v1211 = vmul.f32 %v928, 1.442695
        %v1212 = vpow.pop %v1211
        %v1213 = vmul.f32 %v929, 1.442695
        %v1214 = vpow.pop %v1213
        %v1215 = vmul.f32 %v930, 1.442695
        %v1216 = vpow.pop %v1215
        %v1217 = vmul.f32 %v931, 1.442695
        %v1218 = vpow.pop %v1217
        %v1219 = vmul.f32 %v932, 1.442695
        %v1220 = vpow.pop %v1219
        %v1221 = vadd.f32 %v934, %v936
        %v1222 = vadd.f32 %v1221, %v938
        %1223 = vadd.xlane.f32.xlu0 %v1222
        %v1224 = vpop.xlane.xlu0 %1223
        %v1225 = vadd.f32 %v940, %v942
        %v1226 = vadd.f32 %v1225, %v944
        %1227 = vadd.xlane.f32.xlu0 %v1226
        %v1228 = vpop.xlane.xlu0 %1227
        %v1229 = vadd.f32 %v946, %v948
        %v1230 = vadd.f32 %v1229, %v950
        %1231 = vadd.xlane.f32.xlu0 %v1230
        %v1232 = vpop.xlane.xlu0 %1231
        %v1233 = vadd.f32 %v952, %v954
        %v1234 = vadd.f32 %v1233, %v956
        %1235 = vadd.xlane.f32.xlu0 %v1234
        %v1236 = vpop.xlane.xlu0 %1235
        %v1237 = vadd.f32 %v958, %v960
        %v1238 = vadd.f32 %v1237, %v962
        %1239 = vadd.xlane.f32.xlu0 %v1238
        %v1240 = vpop.xlane.xlu0 %1239
        %v1241 = vadd.f32 %v964, %v966
        %v1242 = vadd.f32 %v1241, %v968
        %1243 = vadd.xlane.f32.xlu0 %v1242
        %v1244 = vpop.xlane.xlu0 %1243
        %v1245 = vadd.f32 %v970, %v972
        %v1246 = vadd.f32 %v1245, %v974
        %1247 = vadd.xlane.f32.xlu0 %v1246
        %v1248 = vpop.xlane.xlu0 %1247
        %v1249 = vadd.f32 %v976, %v978
        %v1250 = vadd.f32 %v1249, %v980
        %1251 = vadd.xlane.f32.xlu0 %v1250
        %v1252 = vpop.xlane.xlu0 %1251
        %v1253 = vadd.f32 %v982, %v984
        %v1254 = vadd.f32 %v1253, %v986
        %1255 = vadd.xlane.f32.xlu0 %v1254
        %v1256 = vpop.xlane.xlu0 %1255
        %v1257 = vadd.f32 %v988, %v990
        %v1258 = vadd.f32 %v1257, %v992
        %1259 = vadd.xlane.f32.xlu0 %v1258
        %v1260 = vpop.xlane.xlu0 %1259
        %v1261 = vadd.f32 %v994, %v996
        %v1262 = vadd.f32 %v1261, %v998
        %1263 = vadd.xlane.f32.xlu0 %v1262
        %v1264 = vpop.xlane.xlu0 %1263
        %v1265 = vadd.f32 %v1000, %v1002
        %v1266 = vadd.f32 %v1265, %v1004
        %1267 = vadd.xlane.f32.xlu0 %v1266
        %v1268 = vpop.xlane.xlu0 %1267
        %v1269 = vadd.f32 %v1006, %v1008
        %v1270 = vadd.f32 %v1269, %v1010
        %1271 = vadd.xlane.f32.xlu0 %v1270
        %v1272 = vpop.xlane.xlu0 %1271
        %v1273 = vadd.f32 %v1012, %v1014
        %v1274 = vadd.f32 %v1273, %v1016
        %1275 = vadd.xlane.f32.xlu0 %v1274
        %v1276 = vpop.xlane.xlu0 %1275
        %v1277 = vadd.f32 %v1018, %v1020
        %v1278 = vadd.f32 %v1277, %v1022
        %1279 = vadd.xlane.f32.xlu0 %v1278
        %v1280 = vpop.xlane.xlu0 %1279
        %v1281 = vadd.f32 %v1024, %v1026
        %v1282 = vadd.f32 %v1281, %v1028
        %1283 = vadd.xlane.f32.xlu0 %v1282
        %v1284 = vpop.xlane.xlu0 %1283
        %v1285 = vadd.f32 %v1030, %v1032
        %v1286 = vadd.f32 %v1285, %v1034
        %1287 = vadd.xlane.f32.xlu0 %v1286
        %v1288 = vpop.xlane.xlu0 %1287
        %v1289 = vadd.f32 %v1036, %v1038
        %v1290 = vadd.f32 %v1289, %v1040
        %1291 = vadd.xlane.f32.xlu0 %v1290
        %v1292 = vpop.xlane.xlu0 %1291
        %v1293 = vadd.f32 %v1042, %v1044
        %v1294 = vadd.f32 %v1293, %v1046
        %1295 = vadd.xlane.f32.xlu0 %v1294
        %v1296 = vpop.xlane.xlu0 %1295
        %v1297 = vadd.f32 %v1048, %v1050
        %v1298 = vadd.f32 %v1297, %v1052
        %1299 = vadd.xlane.f32.xlu0 %v1298
        %v1300 = vpop.xlane.xlu0 %1299
        %v1301 = vadd.f32 %v1054, %v1056
        %v1302 = vadd.f32 %v1301, %v1058
        %1303 = vadd.xlane.f32.xlu0 %v1302
        %v1304 = vpop.xlane.xlu0 %1303
        %v1305 = vadd.f32 %v1060, %v1062
        %v1306 = vadd.f32 %v1305, %v1064
        %1307 = vadd.xlane.f32.xlu0 %v1306
        %v1308 = vpop.xlane.xlu0 %1307
        %v1309 = vadd.f32 %v1066, %v1068
        %v1310 = vadd.f32 %v1309, %v1070
        %1311 = vadd.xlane.f32.xlu0 %v1310
        %v1312 = vpop.xlane.xlu0 %1311
        %v1313 = vadd.f32 %v1072, %v1074
        %v1314 = vadd.f32 %v1313, %v1076
        %1315 = vadd.xlane.f32.xlu0 %v1314
        %v1316 = vpop.xlane.xlu0 %1315
        %v1317 = vadd.f32 %v1078, %v1080
        %v1318 = vadd.f32 %v1317, %v1082
        %1319 = vadd.xlane.f32.xlu0 %v1318
        %v1320 = vpop.xlane.xlu0 %1319
        %v1321 = vadd.f32 %v1084, %v1086
        %v1322 = vadd.f32 %v1321, %v1088
        %1323 = vadd.xlane.f32.xlu0 %v1322
        %v1324 = vpop.xlane.xlu0 %1323
        %v1325 = vadd.f32 %v1090, %v1092
        %v1326 = vadd.f32 %v1325, %v1094
        %1327 = vadd.xlane.f32.xlu0 %v1326
        %v1328 = vpop.xlane.xlu0 %1327
        %v1329 = vadd.f32 %v1096, %v1098
        %v1330 = vadd.f32 %v1329, %v1100
        %1331 = vadd.xlane.f32.xlu0 %v1330
        %v1332 = vpop.xlane.xlu0 %1331
        %v1333 = vadd.f32 %v1102, %v1104
        %v1334 = vadd.f32 %v1333, %v1106
        %1335 = vadd.xlane.f32.xlu0 %v1334
        %v1336 = vpop.xlane.xlu0 %1335
        %v1337 = vadd.f32 %v1108, %v1110
        %v1338 = vadd.f32 %v1337, %v1112
        %1339 = vadd.xlane.f32.xlu0 %v1338
        %v1340 = vpop.xlane.xlu0 %1339
        %v1341 = vadd.f32 %v1114, %v1116
        %v1342 = vadd.f32 %v1341, %v1118
        %1343 = vadd.xlane.f32.xlu0 %v1342
        %v1344 = vpop.xlane.xlu0 %1343
        %v1345 = vadd.f32 %v1120, %v1122
        %v1346 = vadd.f32 %v1345, %v1124
        %1347 = vadd.xlane.f32.xlu0 %v1346
        %v1348 = vpop.xlane.xlu0 %1347
        %v1349 = vadd.f32 %v1126, %v1128
        %v1350 = vadd.f32 %v1349, %v1130
        %1351 = vadd.xlane.f32.xlu0 %v1350
        %v1352 = vpop.xlane.xlu0 %1351
        %v1353 = vadd.f32 %v1132, %v1134
        %v1354 = vadd.f32 %v1353, %v1136
        %1355 = vadd.xlane.f32.xlu0 %v1354
        %v1356 = vpop.xlane.xlu0 %1355
        %v1357 = vadd.f32 %v1138, %v1140
        %v1358 = vadd.f32 %v1357, %v1142
        %1359 = vadd.xlane.f32.xlu0 %v1358
        %v1360 = vpop.xlane.xlu0 %1359
        %v1361 = vadd.f32 %v1144, %v1146
        %v1362 = vadd.f32 %v1361, %v1148
        %1363 = vadd.xlane.f32.xlu0 %v1362
        %v1364 = vpop.xlane.xlu0 %1363
        %v1365 = vadd.f32 %v1150, %v1152
        %v1366 = vadd.f32 %v1365, %v1154
        %1367 = vadd.xlane.f32.xlu0 %v1366
        %v1368 = vpop.xlane.xlu0 %1367
        %v1369 = vadd.f32 %v1156, %v1158
        %v1370 = vadd.f32 %v1369, %v1160
        %1371 = vadd.xlane.f32.xlu0 %v1370
        %v1372 = vpop.xlane.xlu0 %1371
        %v1373 = vadd.f32 %v1162, %v1164
        %v1374 = vadd.f32 %v1373, %v1166
        %1375 = vadd.xlane.f32.xlu0 %v1374
        %v1376 = vpop.xlane.xlu0 %1375
        %v1377 = vadd.f32 %v1168, %v1170
        %v1378 = vadd.f32 %v1377, %v1172
        %1379 = vadd.xlane.f32.xlu0 %v1378
        %v1380 = vpop.xlane.xlu0 %1379
        %v1381 = vadd.f32 %v1174, %v1176
        %v1382 = vadd.f32 %v1381, %v1178
        %1383 = vadd.xlane.f32.xlu0 %v1382
        %v1384 = vpop.xlane.xlu0 %1383
        %v1385 = vadd.f32 %v1180, %v1182
        %v1386 = vadd.f32 %v1385, %v1184
        %1387 = vadd.xlane.f32.xlu0 %v1386
        %v1388 = vpop.xlane.xlu0 %1387
        %v1389 = vadd.f32 %v1186, %v1188
        %v1390 = vadd.f32 %v1389, %v1190
        %1391 = vadd.xlane.f32.xlu0 %v1390
        %v1392 = vpop.xlane.xlu0 %1391
        %v1393 = vadd.f32 %v1192, %v1194
        %v1394 = vadd.f32 %v1393, %v1196
        %1395 = vadd.xlane.f32.xlu0 %v1394
        %v1396 = vpop.xlane.xlu0 %1395
        %v1397 = vadd.f32 %v1198, %v1200
        %v1398 = vadd.f32 %v1397, %v1202
        %1399 = vadd.xlane.f32.xlu0 %v1398
        %v1400 = vpop.xlane.xlu0 %1399
        %v1401 = vadd.f32 %v1204, %v1206
        %v1402 = vadd.f32 %v1401, %v1208
        %1403 = vadd.xlane.f32.xlu0 %v1402
        %v1404 = vpop.xlane.xlu0 %1403
        %v1405 = vadd.f32 %v1210, %v1212
        %v1406 = vadd.f32 %v1405, %v1214
        %1407 = vadd.xlane.f32.xlu0 %v1406
        %v1408 = vpop.xlane.xlu0 %1407
        %v1409 = vadd.f32 %v1216, %v1218
        %v1410 = vadd.f32 %v1409, %v1220
        %1411 = vadd.xlane.f32.xlu0 %v1410
        %v1412 = vpop.xlane.xlu0 %1411
        %v1413 = vrcp.pop %v1224
        %v1414 = vrcp.pop %v1228
        %v1415 = vrcp.pop %v1232
        %v1416 = vrcp.pop %v1236
        %v1417 = vrcp.pop %v1240
        %v1418 = vrcp.pop %v1244
        %v1419 = vrcp.pop %v1248
        %v1420 = vrcp.pop %v1252
        %v1421 = vrcp.pop %v1256
        %v1422 = vrcp.pop %v1260
        %v1423 = vrcp.pop %v1264
        %v1424 = vrcp.pop %v1268
        %v1425 = vrcp.pop %v1272
        %v1426 = vrcp.pop %v1276
        %v1427 = vrcp.pop %v1280
        %v1428 = vrcp.pop %v1284
        %v1429 = vrcp.pop %v1288
        %v1430 = vrcp.pop %v1292
        %v1431 = vrcp.pop %v1296
        %v1432 = vrcp.pop %v1300
        %v1433 = vrcp.pop %v1304
        %v1434 = vrcp.pop %v1308
        %v1435 = vrcp.pop %v1312
        %v1436 = vrcp.pop %v1316
        %v1437 = vrcp.pop %v1320
        %v1438 = vrcp.pop %v1324
        %v1439 = vrcp.pop %v1328
        %v1440 = vrcp.pop %v1332
        %v1441 = vrcp.pop %v1336
        %v1442 = vrcp.pop %v1340
        %v1443 = vrcp.pop %v1344
        %v1444 = vrcp.pop %v1348
        %v1445 = vrcp.pop %v1352
        %v1446 = vrcp.pop %v1356
        %v1447 = vrcp.pop %v1360
        %v1448 = vrcp.pop %v1364
        %v1449 = vrcp.pop %v1368
        %v1450 = vrcp.pop %v1372
        %v1451 = vrcp.pop %v1376
        %v1452 = vrcp.pop %v1380
        %v1453 = vrcp.pop %v1384
        %v1454 = vrcp.pop %v1388
        %v1455 = vrcp.pop %v1392
        %v1456 = vrcp.pop %v1396
        %v1457 = vrcp.pop %v1400
        %v1458 = vrcp.pop %v1404
        %v1459 = vrcp.pop %v1408
        %v1460 = vrcp.pop %v1412
        %v1461 = vmul.f32 %v934, %v1413
        %v1462 = vmul.f32 %v936, %v1413
        %v1463 = vmul.f32 %v938, %v1413
        %v1464 = vmul.f32 %v940, %v1414
        %v1465 = vmul.f32 %v942, %v1414
        %v1466 = vmul.f32 %v944, %v1414
        %v1467 = vmul.f32 %v946, %v1415
        %v1468 = vmul.f32 %v948, %v1415
        %v1469 = vmul.f32 %v950, %v1415
        %v1470 = vmul.f32 %v952, %v1416
        %v1471 = vmul.f32 %v954, %v1416
        %v1472 = vmul.f32 %v956, %v1416
        %v1473 = vmul.f32 %v958, %v1417
        %v1474 = vmul.f32 %v960, %v1417
        %v1475 = vmul.f32 %v962, %v1417
        %v1476 = vmul.f32 %v964, %v1418
        %v1477 = vmul.f32 %v966, %v1418
        %v1478 = vmul.f32 %v968, %v1418
        %v1479 = vmul.f32 %v970, %v1419
        %v1480 = vmul.f32 %v972, %v1419
        %v1481 = vmul.f32 %v974, %v1419
        %v1482 = vmul.f32 %v976, %v1420
        %v1483 = vmul.f32 %v978, %v1420
        %v1484 = vmul.f32 %v980, %v1420
        %v1485 = vmul.f32 %v982, %v1421
        %v1486 = vmul.f32 %v984, %v1421
        %v1487 = vmul.f32 %v986, %v1421
        %v1488 = vmul.f32 %v988, %v1422
        %v1489 = vmul.f32 %v990, %v1422
        %v1490 = vmul.f32 %v992, %v1422
        %v1491 = vmul.f32 %v994, %v1423
        %v1492 = vmul.f32 %v996, %v1423
        %v1493 = vmul.f32 %v998, %v1423
        %v1494 = vmul.f32 %v1000, %v1424
        %v1495 = vmul.f32 %v1002, %v1424
        %v1496 = vmul.f32 %v1004, %v1424
        %v1497 = vmul.f32 %v1006, %v1425
        %v1498 = vmul.f32 %v1008, %v1425
        %v1499 = vmul.f32 %v1010, %v1425
        %v1500 = vmul.f32 %v1012, %v1426
        %v1501 = vmul.f32 %v1014, %v1426
        %v1502 = vmul.f32 %v1016, %v1426
        %v1503 = vmul.f32 %v1018, %v1427
        %v1504 = vmul.f32 %v1020, %v1427
        %v1505 = vmul.f32 %v1022, %v1427
        %v1506 = vmul.f32 %v1024, %v1428
        %v1507 = vmul.f32 %v1026, %v1428
        %v1508 = vmul.f32 %v1028, %v1428
        %v1509 = vmul.f32 %v1030, %v1429
        %v1510 = vmul.f32 %v1032, %v1429
        %v1511 = vmul.f32 %v1034, %v1429
        %v1512 = vmul.f32 %v1036, %v1430
        %v1513 = vmul.f32 %v1038, %v1430
        %v1514 = vmul.f32 %v1040, %v1430
        %v1515 = vmul.f32 %v1042, %v1431
        %v1516 = vmul.f32 %v1044, %v1431
        %v1517 = vmul.f32 %v1046, %v1431
        %v1518 = vmul.f32 %v1048, %v1432
        %v1519 = vmul.f32 %v1050, %v1432
        %v1520 = vmul.f32 %v1052, %v1432
        %v1521 = vmul.f32 %v1054, %v1433
        %v1522 = vmul.f32 %v1056, %v1433
        %v1523 = vmul.f32 %v1058, %v1433
        %v1524 = vmul.f32 %v1060, %v1434
        %v1525 = vmul.f32 %v1062, %v1434
        %v1526 = vmul.f32 %v1064, %v1434
        %v1527 = vmul.f32 %v1066, %v1435
        %v1528 = vmul.f32 %v1068, %v1435
        %v1529 = vmul.f32 %v1070, %v1435
        %v1530 = vmul.f32 %v1072, %v1436
        %v1531 = vmul.f32 %v1074, %v1436
        %v1532 = vmul.f32 %v1076, %v1436
        %v1533 = vmul.f32 %v1078, %v1437
        %v1534 = vmul.f32 %v1080, %v1437
        %v1535 = vmul.f32 %v1082, %v1437
        %v1536 = vmul.f32 %v1084, %v1438
        %v1537 = vmul.f32 %v1086, %v1438
        %v1538 = vmul.f32 %v1088, %v1438
        %v1539 = vmul.f32 %v1090, %v1439
        %v1540 = vmul.f32 %v1092, %v1439
        %v1541 = vmul.f32 %v1094, %v1439
        %v1542 = vmul.f32 %v1096, %v1440
        %v1543 = vmul.f32 %v1098, %v1440
        %v1544 = vmul.f32 %v1100, %v1440
        %v1545 = vmul.f32 %v1102, %v1441
        %v1546 = vmul.f32 %v1104, %v1441
        %v1547 = vmul.f32 %v1106, %v1441
        %v1548 = vmul.f32 %v1108, %v1442
        %v1549 = vmul.f32 %v1110, %v1442
        %v1550 = vmul.f32 %v1112, %v1442
        %v1551 = vmul.f32 %v1114, %v1443
        %v1552 = vmul.f32 %v1116, %v1443
        %v1553 = vmul.f32 %v1118, %v1443
        %v1554 = vmul.f32 %v1120, %v1444
        %v1555 = vmul.f32 %v1122, %v1444
        %v1556 = vmul.f32 %v1124, %v1444
        %v1557 = vmul.f32 %v1126, %v1445
        %v1558 = vmul.f32 %v1128, %v1445
        %v1559 = vmul.f32 %v1130, %v1445
        %v1560 = vmul.f32 %v1132, %v1446
        %v1561 = vmul.f32 %v1134, %v1446
        %v1562 = vmul.f32 %v1136, %v1446
        %v1563 = vmul.f32 %v1138, %v1447
        %v1564 = vmul.f32 %v1140, %v1447
        %v1565 = vmul.f32 %v1142, %v1447
        %v1566 = vmul.f32 %v1144, %v1448
        %v1567 = vmul.f32 %v1146, %v1448
        %v1568 = vmul.f32 %v1148, %v1448
        %v1569 = vmul.f32 %v1150, %v1449
        %v1570 = vmul.f32 %v1152, %v1449
        %v1571 = vmul.f32 %v1154, %v1449
        %v1572 = vmul.f32 %v1156, %v1450
        %v1573 = vmul.f32 %v1158, %v1450
        %v1574 = vmul.f32 %v1160, %v1450
        %v1575 = vmul.f32 %v1162, %v1451
        %v1576 = vmul.f32 %v1164, %v1451
        %v1577 = vmul.f32 %v1166, %v1451
        %v1578 = vmul.f32 %v1168, %v1452
        %v1579 = vmul.f32 %v1170, %v1452
        %v1580 = vmul.f32 %v1172, %v1452
        %v1581 = vmul.f32 %v1174, %v1453
        %v1582 = vmul.f32 %v1176, %v1453
        %v1583 = vmul.f32 %v1178, %v1453
        %v1584 = vmul.f32 %v1180, %v1454
        %v1585 = vmul.f32 %v1182, %v1454
        %v1586 = vmul.f32 %v1184, %v1454
        %v1587 = vmul.f32 %v1186, %v1455
        %v1588 = vmul.f32 %v1188, %v1455
        %v1589 = vmul.f32 %v1190, %v1455
        %v1590 = vmul.f32 %v1192, %v1456
        %v1591 = vmul.f32 %v1194, %v1456
        %v1592 = vmul.f32 %v1196, %v1456
        %v1593 = vmul.f32 %v1198, %v1457
        %v1594 = vmul.f32 %v1200, %v1457
        %v1595 = vmul.f32 %v1202, %v1457
        %v1596 = vmul.f32 %v1204, %v1458
        %v1597 = vmul.f32 %v1206, %v1458
        %v1598 = vmul.f32 %v1208, %v1458
        %v1599 = vmul.f32 %v1210, %v1459
        %v1600 = vmul.f32 %v1212, %v1459
        %v1601 = vmul.f32 %v1214, %v1459
        %v1602 = vmul.f32 %v1216, %v1460
        %v1603 = vmul.f32 %v1218, %v1460
        %v1604 = vmul.f32 %v1220, %v1460
        %v1605 = vld [vmem:[%s255] sm:$0xff]
        %v1606 = vld [vmem:[%s255 + $0x8] sm:$0xff]
        %v1607 = vld [vmem:[%s255 + $0x10] sm:$0xff]
        %v1608 = vld [vmem:[%s255 + $0x18] sm:$0xff]
        %v1609 = vld [vmem:[%s255 + $0x20] sm:$0xff]
        %v1610 = vld [vmem:[%s255 + $0x28] sm:$0xff]
        %v1611 = vld [vmem:[%s255 + $0x30] sm:$0xff]
        %v1612 = vld [vmem:[%s255 + $0x38] sm:$0xff]
        %v1613 = vld [vmem:[%s255 + $0x40] sm:$0xff]
        %v1614 = vld [vmem:[%s255 + $0x48] sm:$0xff]
        %v1615 = vld [vmem:[%s255 + $0x50] sm:$0xff]
        %v1616 = vld [vmem:[%s255 + $0x58] sm:$0xff]
        %v1617 = vld [vmem:[%s255 + $0x60] sm:$0xff]
        %v1618 = vld [vmem:[%s255 + $0x68] sm:$0xff]
        %v1619 = vld [vmem:[%s255 + $0x70] sm:$0xff]
        %v1620 = vld [vmem:[%s255 + $0x78] sm:$0xff]
        %v1621 = vld [vmem:[%s255 + $0x80] sm:$0xff]
        %v1622 = vld [vmem:[%s255 + $0x88] sm:$0xff]
        %v1623 = vld [vmem:[%s255 + $0x90] sm:$0xff]
        %v1624 = vld [vmem:[%s255 + $0x98] sm:$0xff]
        %v1625 = vld [vmem:[%s255 + $0xa0] sm:$0xff]
        %v1626 = vld [vmem:[%s255 + $0xa8] sm:$0xff]
        %v1627 = vld [vmem:[%s255 + $0xb0] sm:$0xff]
        %v1628 = vld [vmem:[%s255 + $0xb8] sm:$0xff]
        %v1629 = vld [vmem:[%s255 + $0xc0] sm:$0xff]
        %v1630 = vld [vmem:[%s255 + $0xc8] sm:$0xff]
        %v1631 = vld [vmem:[%s255 + $0xd0] sm:$0xff]
        %v1632 = vld [vmem:[%s255 + $0xd8] sm:$0xff]
        %v1633 = vld [vmem:[%s255 + $0xe0] sm:$0xff]
        %v1634 = vld [vmem:[%s255 + $0xe8] sm:$0xff]
        %v1635 = vld [vmem:[%s255 + $0xf0] sm:$0xff]
        %v1636 = vld [vmem:[%s255 + $0xf8] sm:$0xff]
        %v1637 = vld [vmem:[%s255 + $0x100] sm:$0xff]
        %v1638 = vld [vmem:[%s255 + $0x108] sm:$0xff]
        %v1639 = vld [vmem:[%s255 + $0x110] sm:$0xff]
        %v1640 = vld [vmem:[%s255 + $0x118] sm:$0xff]
        %v1641 = vld [vmem:[%s255 + $0x120] sm:$0xff]
        %v1642 = vld [vmem:[%s255 + $0x128] sm:$0xff]
        %v1643 = vld [vmem:[%s255 + $0x130] sm:$0xff]
        %v1644 = vld [vmem:[%s255 + $0x138] sm:$0xff]
        %v1645 = vld [vmem:[%s255 + $0x140] sm:$0xff]
        %v1646 = vld [vmem:[%s255 + $0x148] sm:$0xff]
        %v1647 = vld [vmem:[%s255 + $0x150] sm:$0xff]
        %v1648 = vld [vmem:[%s255 + $0x158] sm:$0xff]
        %v1649 = vld [vmem:[%s255 + $0x160] sm:$0xff]
        %v1650 = vld [vmem:[%s255 + $0x168] sm:$0xff]
        %v1651 = vld [vmem:[%s255 + $0x170] sm:$0xff]
        %v1652 = vld [vmem:[%s255 + $0x178] sm:$0xff]
        %v1653 = vld [vmem:[%s255 + $0x180] sm:$0xff]
        %v1654 = vld [vmem:[%s255 + $0x188] sm:$0xff]
        %v1655 = vld [vmem:[%s255 + $0x190] sm:$0xff]
        %v1656 = vld [vmem:[%s255 + $0x198] sm:$0xff]
        %v1657 = vld [vmem:[%s255 + $0x1a0] sm:$0xff]
        %v1658 = vld [vmem:[%s255 + $0x1a8] sm:$0xff]
        %v1659 = vld [vmem:[%s255 + $0x1b0] sm:$0xff]
        %v1660 = vld [vmem:[%s255 + $0x1b8] sm:$0xff]
        %v1661 = vld [vmem:[%s255 + $0x1c0] sm:$0xff]
        %v1662 = vld [vmem:[%s255 + $0x1c8] sm:$0xff]
        %v1663 = vld [vmem:[%s255 + $0x1d0] sm:$0xff]
        %v1664 = vld [vmem:[%s255 + $0x1d8] sm:$0xff]
        %v1665 = vld [vmem:[%s255 + $0x1e0] sm:$0xff]
        %v1666 = vld [vmem:[%s255 + $0x1e8] sm:$0xff]
        %v1667 = vld [vmem:[%s255 + $0x1f0] sm:$0xff]
        %v1668 = vld [vmem:[%s255 + $0x1f8] sm:$0xff]
        %v1669 = vld [vmem:[%s255 + $0x200] sm:$0xff]
        %v1670 = vld [vmem:[%s255 + $0x208] sm:$0xff]
        %v1671 = vld [vmem:[%s255 + $0x210] sm:$0xff]
        %v1672 = vld [vmem:[%s255 + $0x218] sm:$0xff]
        %v1673 = vld [vmem:[%s255 + $0x220] sm:$0xff]
        %v1674 = vld [vmem:[%s255 + $0x228] sm:$0xff]
        %v1675 = vld [vmem:[%s255 + $0x230] sm:$0xff]
        %v1676 = vld [vmem:[%s255 + $0x238] sm:$0xff]
        %v1677 = vld [vmem:[%s255 + $0x240] sm:$0xff]
        %v1678 = vld [vmem:[%s255 + $0x248] sm:$0xff]
        %v1679 = vld [vmem:[%s255 + $0x250] sm:$0xff]
        %v1680 = vld [vmem:[%s255 + $0x258] sm:$0xff]
        %v1681 = vld [vmem:[%s255 + $0x260] sm:$0xff]
        %v1682 = vld [vmem:[%s255 + $0x268] sm:$0xff]
        %v1683 = vld [vmem:[%s255 + $0x270] sm:$0xff]
        %v1684 = vld [vmem:[%s255 + $0x278] sm:$0xff]
        %v1685 = vld [vmem:[%s255 + $0x280] sm:$0xff]
        %v1686 = vld [vmem:[%s255 + $0x288] sm:$0xff]
        %v1687 = vld [vmem:[%s255 + $0x290] sm:$0xff]
        %v1688 = vld [vmem:[%s255 + $0x298] sm:$0xff]
        %v1689 = vld [vmem:[%s255 + $0x2a0] sm:$0xff]
        %v1690 = vld [vmem:[%s255 + $0x2a8] sm:$0xff]
        %v1691 = vld [vmem:[%s255 + $0x2b0] sm:$0xff]
        %v1692 = vld [vmem:[%s255 + $0x2b8] sm:$0xff]
        %v1693 = vld [vmem:[%s255 + $0x2c0] sm:$0xff]
        %v1694 = vld [vmem:[%s255 + $0x2c8] sm:$0xff]
        %v1695 = vld [vmem:[%s255 + $0x2d0] sm:$0xff]
        %v1696 = vld [vmem:[%s255 + $0x2d8] sm:$0xff]
        %v1697 = vld [vmem:[%s255 + $0x2e0] sm:$0xff]
        %v1698 = vld [vmem:[%s255 + $0x2e8] sm:$0xff]
        %v1699 = vld [vmem:[%s255 + $0x2f0] sm:$0xff]
        %v1700 = vld [vmem:[%s255 + $0x2f8] sm:$0xff]
        %v1701 = vld [vmem:[%s255 + $0x300] sm:$0xff]
        %v1702 = vld [vmem:[%s255 + $0x308] sm:$0xff]
        %v1703 = vld [vmem:[%s255 + $0x310] sm:$0xff]
        %v1704 = vld [vmem:[%s255 + $0x318] sm:$0xff]
        %v1705 = vld [vmem:[%s255 + $0x320] sm:$0xff]
        %v1706 = vld [vmem:[%s255 + $0x328] sm:$0xff]
        %v1707 = vld [vmem:[%s255 + $0x330] sm:$0xff]
        %v1708 = vld [vmem:[%s255 + $0x338] sm:$0xff]
        %v1709 = vld [vmem:[%s255 + $0x340] sm:$0xff]
        %v1710 = vld [vmem:[%s255 + $0x348] sm:$0xff]
        %v1711 = vld [vmem:[%s255 + $0x350] sm:$0xff]
        %v1712 = vld [vmem:[%s255 + $0x358] sm:$0xff]
        %v1713 = vld [vmem:[%s255 + $0x360] sm:$0xff]
        %v1714 = vld [vmem:[%s255 + $0x368] sm:$0xff]
        %v1715 = vld [vmem:[%s255 + $0x370] sm:$0xff]
        %v1716 = vld [vmem:[%s255 + $0x378] sm:$0xff]
        %v1717 = vld [vmem:[%s255 + $0x380] sm:$0xff]
        %v1718 = vld [vmem:[%s255 + $0x388] sm:$0xff]
        %v1719 = vld [vmem:[%s255 + $0x390] sm:$0xff]
        %v1720 = vld [vmem:[%s255 + $0x398] sm:$0xff]
        %v1721 = vld [vmem:[%s255 + $0x3a0] sm:$0xff]
        %v1722 = vld [vmem:[%s255 + $0x3a8] sm:$0xff]
        %v1723 = vld [vmem:[%s255 + $0x3b0] sm:$0xff]
        %v1724 = vld [vmem:[%s255 + $0x3b8] sm:$0xff]
        %v1725 = vld [vmem:[%s255 + $0x3c0] sm:$0xff]
        %v1726 = vld [vmem:[%s255 + $0x3c8] sm:$0xff]
        %v1727 = vld [vmem:[%s255 + $0x3d0] sm:$0xff]
        %v1728 = vld [vmem:[%s255 + $0x3d8] sm:$0xff]
        %v1729 = vld [vmem:[%s255 + $0x3e0] sm:$0xff]
        %v1730 = vld [vmem:[%s255 + $0x3e8] sm:$0xff]
        %v1731 = vld [vmem:[%s255 + $0x3f0] sm:$0xff]
        %v1732 = vld [vmem:[%s255 + $0x3f8] sm:$0xff]
        %v1733 = vld [vmem:[%s255 + $0x400] sm:$0xff]
        %v1734 = vld [vmem:[%s255 + $0x408] sm:$0xff]
        %v1735 = vld [vmem:[%s255 + $0x410] sm:$0xff]
        %v1736 = vld [vmem:[%s255 + $0x418] sm:$0xff]
        %v1737 = vld [vmem:[%s255 + $0x420] sm:$0xff]
        %v1738 = vld [vmem:[%s255 + $0x428] sm:$0xff]
        %v1739 = vld [vmem:[%s255 + $0x430] sm:$0xff]
        %v1740 = vld [vmem:[%s255 + $0x438] sm:$0xff]
        %v1741 = vld [vmem:[%s255 + $0x440] sm:$0xff]
        %v1742 = vld [vmem:[%s255 + $0x448] sm:$0xff]
        %v1743 = vld [vmem:[%s255 + $0x450] sm:$0xff]
        %v1744 = vld [vmem:[%s255 + $0x458] sm:$0xff]
        %v1745 = vld [vmem:[%s255 + $0x460] sm:$0xff]
        %v1746 = vld [vmem:[%s255 + $0x468] sm:$0xff]
        %v1747 = vld [vmem:[%s255 + $0x470] sm:$0xff]
        %v1748 = vld [vmem:[%s255 + $0x478] sm:$0xff]
        %v1749 = vmul.f32 %v1461, %v1605
        %v1750 = vmul.f32 %v1462, %v1606
        %v1751 = vmul.f32 %v1463, %v1607
        %v1752 = vmul.f32 %v1464, %v1608
        %v1753 = vmul.f32 %v1465, %v1609
        %v1754 = vmul.f32 %v1466, %v1610
        %v1755 = vmul.f32 %v1467, %v1611
        %v1756 = vmul.f32 %v1468, %v1612
        %v1757 = vmul.f32 %v1469, %v1613
        %v1758 = vmul.f32 %v1470, %v1614
        %v1759 = vmul.f32 %v1471, %v1615
        %v1760 = vmul.f32 %v1472, %v1616
        %v1761 = vmul.f32 %v1473, %v1617
        %v1762 = vmul.f32 %v1474, %v1618
        %v1763 = vmul.f32 %v1475, %v1619
        %v1764 = vmul.f32 %v1476, %v1620
        %v1765 = vmul.f32 %v1477, %v1621
        %v1766 = vmul.f32 %v1478, %v1622
        %v1767 = vmul.f32 %v1479, %v1623
        %v1768 = vmul.f32 %v1480, %v1624
        %v1769 = vmul.f32 %v1481, %v1625
        %v1770 = vmul.f32 %v1482, %v1626
        %v1771 = vmul.f32 %v1483, %v1627
        %v1772 = vmul.f32 %v1484, %v1628
        %v1773 = vmul.f32 %v1485, %v1629
        %v1774 = vmul.f32 %v1486, %v1630
        %v1775 = vmul.f32 %v1487, %v1631
        %v1776 = vmul.f32 %v1488, %v1632
        %v1777 = vmul.f32 %v1489, %v1633
        %v1778 = vmul.f32 %v1490, %v1634
        %v1779 = vmul.f32 %v1491, %v1635
        %v1780 = vmul.f32 %v1492, %v1636
        %v1781 = vmul.f32 %v1493, %v1637
        %v1782 = vmul.f32 %v1494, %v1638
        %v1783 = vmul.f32 %v1495, %v1639
        %v1784 = vmul.f32 %v1496, %v1640
        %v1785 = vmul.f32 %v1497, %v1641
        %v1786 = vmul.f32 %v1498, %v1642
        %v1787 = vmul.f32 %v1499, %v1643
        %v1788 = vmul.f32 %v1500, %v1644
        %v1789 = vmul.f32 %v1501, %v1645
        %v1790 = vmul.f32 %v1502, %v1646
        %v1791 = vmul.f32 %v1503, %v1647
        %v1792 = vmul.f32 %v1504, %v1648
        %v1793 = vmul.f32 %v1505, %v1649
        %v1794 = vmul.f32 %v1506, %v1650
        %v1795 = vmul.f32 %v1507, %v1651
        %v1796 = vmul.f32 %v1508, %v1652
        %v1797 = vmul.f32 %v1509, %v1653
        %v1798 = vmul.f32 %v1510, %v1654
        %v1799 = vmul.f32 %v1511, %v1655
        %v1800 = vmul.f32 %v1512, %v1656
        %v1801 = vmul.f32 %v1513, %v1657
        %v1802 = vmul.f32 %v1514, %v1658
        %v1803 = vmul.f32 %v1515, %v1659
        %v1804 = vmul.f32 %v1516, %v1660
        %v1805 = vmul.f32 %v1517, %v1661
        %v1806 = vmul.f32 %v1518, %v1662
        %v1807 = vmul.f32 %v1519, %v1663
        %v1808 = vmul.f32 %v1520, %v1664
        %v1809 = vmul.f32 %v1521, %v1665
        %v1810 = vmul.f32 %v1522, %v1666
        %v1811 = vmul.f32 %v1523, %v1667
        %v1812 = vmul.f32 %v1524, %v1668
        %v1813 = vmul.f32 %v1525, %v1669
        %v1814 = vmul.f32 %v1526, %v1670
        %v1815 = vmul.f32 %v1527, %v1671
        %v1816 = vmul.f32 %v1528, %v1672
        %v1817 = vmul.f32 %v1529, %v1673
        %v1818 = vmul.f32 %v1530, %v1674
        %v1819 = vmul.f32 %v1531, %v1675
        %v1820 = vmul.f32 %v1532, %v1676
        %v1821 = vmul.f32 %v1533, %v1677
        %v1822 = vmul.f32 %v1534, %v1678
        %v1823 = vmul.f32 %v1535, %v1679
        %v1824 = vmul.f32 %v1536, %v1680
        %v1825 = vmul.f32 %v1537, %v1681
        %v1826 = vmul.f32 %v1538, %v1682
        %v1827 = vmul.f32 %v1539, %v1683
        %v1828 = vmul.f32 %v1540, %v1684
        %v1829 = vmul.f32 %v1541, %v1685
        %v1830 = vmul.f32 %v1542, %v1686
        %v1831 = vmul.f32 %v1543, %v1687
        %v1832 = vmul.f32 %v1544, %v1688
        %v1833 = vmul.f32 %v1545, %v1689
        %v1834 = vmul.f32 %v1546, %v1690
        %v1835 = vmul.f32 %v1547, %v1691
        %v1836 = vmul.f32 %v1548, %v1692
        %v1837 = vmul.f32 %v1549, %v1693
        %v1838 = vmul.f32 %v1550, %v1694
        %v1839 = vmul.f32 %v1551, %v1695
        %v1840 = vmul.f32 %v1552, %v1696
        %v1841 = vmul.f32 %v1553, %v1697
        %v1842 = vmul.f32 %v1554, %v1698
        %v1843 = vmul.f32 %v1555, %v1699
        %v1844 = vmul.f32 %v1556, %v1700
        %v1845 = vmul.f32 %v1557, %v1701
        %v1846 = vmul.f32 %v1558, %v1702
        %v1847 = vmul.f32 %v1559, %v1703
        %v1848 = vmul.f32 %v1560, %v1704
        %v1849 = vmul.f32 %v1561, %v1705
        %v1850 = vmul.f32 %v1562, %v1706
        %v1851 = vmul.f32 %v1563, %v1707
        %v1852 = vmul.f32 %v1564, %v1708
        %v1853 = vmul.f32 %v1565, %v1709
        %v1854 = vmul.f32 %v1566, %v1710
        %v1855 = vmul.f32 %v1567, %v1711
        %v1856 = vmul.f32 %v1568, %v1712
        %v1857 = vmul.f32 %v1569, %v1713
        %v1858 = vmul.f32 %v1570, %v1714
        %v1859 = vmul.f32 %v1571, %v1715
        %v1860 = vmul.f32 %v1572, %v1716
        %v1861 = vmul.f32 %v1573, %v1717
        %v1862 = vmul.f32 %v1574, %v1718
        %v1863 = vmul.f32 %v1575, %v1719
        %v1864 = vmul.f32 %v1576, %v1720
        %v1865 = vmul.f32 %v1577, %v1721
        %v1866 = vmul.f32 %v1578, %v1722
        %v1867 = vmul.f32 %v1579, %v1723
        %v1868 = vmul.f32 %v1580, %v1724
        %v1869 = vmul.f32 %v1581, %v1725
        %v1870 = vmul.f32 %v1582, %v1726
        %v1871 = vmul.f32 %v1583, %v1727
        %v1872 = vmul.f32 %v1584, %v1728
        %v1873 = vmul.f32 %v1585, %v1729
        %v1874 = vmul.f32 %v1586, %v1730
        %v1875 = vmul.f32 %v1587, %v1731
        %v1876 = vmul.f32 %v1588, %v1732
        %v1877 = vmul.f32 %v1589, %v1733
        %v1878 = vmul.f32 %v1590, %v1734
        %v1879 = vmul.f32 %v1591, %v1735
        %v1880 = vmul.f32 %v1592, %v1736
        %v1881 = vmul.f32 %v1593, %v1737
        %v1882 = vmul.f32 %v1594, %v1738
        %v1883 = vmul.f32 %v1595, %v1739
        %v1884 = vmul.f32 %v1596, %v1740
        %v1885 = vmul.f32 %v1597, %v1741
        %v1886 = vmul.f32 %v1598, %v1742
        %v1887 = vmul.f32 %v1599, %v1743
        %v1888 = vmul.f32 %v1600, %v1744
        %v1889 = vmul.f32 %v1601, %v1745
        %v1890 = vmul.f32 %v1602, %v1746
        %v1891 = vmul.f32 %v1603, %v1747
        %v1892 = vmul.f32 %v1604, %v1748
        %v1893 = vpack.c.bf16 %v1752, %v1749
        %v1894 = vpack.c.bf16 %v1753, %v1750
        %v1895 = vpack.c.bf16 %v1754, %v1751
        %v1896 = vpack.c.bf16 %v1758, %v1755
        %v1897 = vpack.c.bf16 %v1759, %v1756
        %v1898 = vpack.c.bf16 %v1760, %v1757
        %v1899 = vpack.c.bf16 %v1764, %v1761
        %v1900 = vpack.c.bf16 %v1765, %v1762
        %v1901 = vpack.c.bf16 %v1766, %v1763
        %v1902 = vpack.c.bf16 %v1770, %v1767
        %v1903 = vpack.c.bf16 %v1771, %v1768
        %v1904 = vpack.c.bf16 %v1772, %v1769
        %v1905 = vpack.c.bf16 %v1776, %v1773
        %v1906 = vpack.c.bf16 %v1777, %v1774
        %v1907 = vpack.c.bf16 %v1778, %v1775
        %v1908 = vpack.c.bf16 %v1782, %v1779
        %v1909 = vpack.c.bf16 %v1783, %v1780
        %v1910 = vpack.c.bf16 %v1784, %v1781
        %v1911 = vpack.c.bf16 %v1788, %v1785
        %v1912 = vpack.c.bf16 %v1789, %v1786
        %v1913 = vpack.c.bf16 %v1790, %v1787
        %v1914 = vpack.c.bf16 %v1794, %v1791
        %v1915 = vpack.c.bf16 %v1795, %v1792
        %v1916 = vpack.c.bf16 %v1796, %v1793
        %v1917 = vpack.c.bf16 %v1800, %v1797
        %v1918 = vpack.c.bf16 %v1801, %v1798
        %v1919 = vpack.c.bf16 %v1802, %v1799
        %v1920 = vpack.c.bf16 %v1806, %v1803
        %v1921 = vpack.c.bf16 %v1807, %v1804
        %v1922 = vpack.c.bf16 %v1808, %v1805
        %v1923 = vpack.c.bf16 %v1812, %v1809
        %v1924 = vpack.c.bf16 %v1813, %v1810
        %v1925 = vpack.c.bf16 %v1814, %v1811
        %v1926 = vpack.c.bf16 %v1818, %v1815
        %v1927 = vpack.c.bf16 %v1819, %v1816
        %v1928 = vpack.c.bf16 %v1820, %v1817
        %v1929 = vpack.c.bf16 %v1824, %v1821
        %v1930 = vpack.c.bf16 %v1825, %v1822
        %v1931 = vpack.c.bf16 %v1826, %v1823
        %v1932 = vpack.c.bf16 %v1830, %v1827
        %v1933 = vpack.c.bf16 %v1831, %v1828
        %v1934 = vpack.c.bf16 %v1832, %v1829
        %v1935 = vpack.c.bf16 %v1836, %v1833
        %v1936 = vpack.c.bf16 %v1837, %v1834
        %v1937 = vpack.c.bf16 %v1838, %v1835
        %v1938 = vpack.c.bf16 %v1842, %v1839
        %v1939 = vpack.c.bf16 %v1843, %v1840
        %v1940 = vpack.c.bf16 %v1844, %v1841
        %v1941 = vpack.c.bf16 %v1848, %v1845
        %v1942 = vpack.c.bf16 %v1849, %v1846
        %v1943 = vpack.c.bf16 %v1850, %v1847
        %v1944 = vpack.c.bf16 %v1854, %v1851
        %v1945 = vpack.c.bf16 %v1855, %v1852
        %v1946 = vpack.c.bf16 %v1856, %v1853
        %v1947 = vpack.c.bf16 %v1860, %v1857
        %v1948 = vpack.c.bf16 %v1861, %v1858
        %v1949 = vpack.c.bf16 %v1862, %v1859
        %v1950 = vpack.c.bf16 %v1866, %v1863
        %v1951 = vpack.c.bf16 %v1867, %v1864
        %v1952 = vpack.c.bf16 %v1868, %v1865
        %v1953 = vpack.c.bf16 %v1872, %v1869
        %v1954 = vpack.c.bf16 %v1873, %v1870
        %v1955 = vpack.c.bf16 %v1874, %v1871
        %v1956 = vpack.c.bf16 %v1878, %v1875
        %v1957 = vpack.c.bf16 %v1879, %v1876
        %v1958 = vpack.c.bf16 %v1880, %v1877
        %v1959 = vpack.c.bf16 %v1884, %v1881
        %v1960 = vpack.c.bf16 %v1885, %v1882
        %v1961 = vpack.c.bf16 %v1886, %v1883
        %v1962 = vpack.c.bf16 %v1890, %v1887
        %v1963 = vpack.c.bf16 %v1891, %v1888
        %v1964 = vpack.c.bf16 %v1892, %v1889
        %v1965 = vld [vmem:[%s299] sm:$0xff]
        %v1966 = vld [vmem:[%s299 + $0x8] sm:$0xff]
        %v1967 = vld [vmem:[%s299 + $0x10] sm:$0xff]
        %v1968 = vld [vmem:[%s299 + $0x18] sm:$0xff]
        %v1969 = vld [vmem:[%s299 + $0x20] sm:$0xff]
        %v1970 = vld [vmem:[%s299 + $0x28] sm:$0xff]
        %v1971 = vld [vmem:[%s299 + $0x30] sm:$0xff]
        %v1972 = vld [vmem:[%s299 + $0x38] sm:$0xff]
        %v1973 = vld [vmem:[%s299 + $0x40] sm:$0xff]
        %v1974 = vld [vmem:[%s299 + $0x48] sm:$0xff]
        %v1975 = vld [vmem:[%s299 + $0x50] sm:$0xff]
        %v1976 = vld [vmem:[%s299 + $0x58] sm:$0xff]
        %v1977 = vld [vmem:[%s299 + $0x60] sm:$0xff]
        %v1978 = vld [vmem:[%s299 + $0x68] sm:$0xff]
        %v1979 = vld [vmem:[%s299 + $0x70] sm:$0xff]
        %v1980 = vld [vmem:[%s299 + $0x78] sm:$0xff]
        %v1981 = vld [vmem:[%s299 + $0x80] sm:$0xff]
        %v1982 = vld [vmem:[%s299 + $0x88] sm:$0xff]
        %v1983 = vld [vmem:[%s299 + $0x90] sm:$0xff]
        %v1984 = vld [vmem:[%s299 + $0x98] sm:$0xff]
        %v1985 = vld [vmem:[%s299 + $0xa0] sm:$0xff]
        %v1986 = vld [vmem:[%s299 + $0xa8] sm:$0xff]
        %v1987 = vld [vmem:[%s299 + $0xb0] sm:$0xff]
        %v1988 = vld [vmem:[%s299 + $0xb8] sm:$0xff]
        %v1989 = vld [vmem:[%s299 + $0xc0] sm:$0xff]
        %v1990 = vld [vmem:[%s299 + $0xc8] sm:$0xff]
        %v1991 = vld [vmem:[%s299 + $0xd0] sm:$0xff]
        %v1992 = vld [vmem:[%s299 + $0xd8] sm:$0xff]
        %v1993 = vld [vmem:[%s299 + $0xe0] sm:$0xff]
        %v1994 = vld [vmem:[%s299 + $0xe8] sm:$0xff]
        %v1995 = vld [vmem:[%s299 + $0xf0] sm:$0xff]
        %v1996 = vld [vmem:[%s299 + $0xf8] sm:$0xff]
        %v1997 = vld [vmem:[%s299 + $0x100] sm:$0xff]
        %v1998 = vld [vmem:[%s299 + $0x108] sm:$0xff]
        %v1999 = vld [vmem:[%s299 + $0x110] sm:$0xff]
        %v2000 = vld [vmem:[%s299 + $0x118] sm:$0xff]
        %v2001 = vld [vmem:[%s299 + $0x120] sm:$0xff]
        %v2002 = vld [vmem:[%s299 + $0x128] sm:$0xff]
        %v2003 = vld [vmem:[%s299 + $0x130] sm:$0xff]
        %v2004 = vld [vmem:[%s299 + $0x138] sm:$0xff]
        %v2005 = vld [vmem:[%s299 + $0x140] sm:$0xff]
        %v2006 = vld [vmem:[%s299 + $0x148] sm:$0xff]
        %v2007 = vld [vmem:[%s299 + $0x150] sm:$0xff]
        %v2008 = vld [vmem:[%s299 + $0x158] sm:$0xff]
        %v2009 = vld [vmem:[%s299 + $0x160] sm:$0xff]
        %v2010 = vld [vmem:[%s299 + $0x168] sm:$0xff]
        %v2011 = vld [vmem:[%s299 + $0x170] sm:$0xff]
        %v2012 = vld [vmem:[%s299 + $0x178] sm:$0xff]
        %v2013 = vpack.c.bf16 %v1966, %v1965
        %v2014 = vpack.c.bf16 %v1968, %v1967
        %v2015 = vpack.c.bf16 %v1970, %v1969
        %v2016 = vpack.c.bf16 %v1972, %v1971
        %v2017 = vpack.c.bf16 %v1974, %v1973
        %v2018 = vpack.c.bf16 %v1976, %v1975
        %v2019 = vpack.c.bf16 %v1978, %v1977
        %v2020 = vpack.c.bf16 %v1980, %v1979
        %v2021 = vpack.c.bf16 %v1982, %v1981
        %v2022 = vpack.c.bf16 %v1984, %v1983
        %v2023 = vpack.c.bf16 %v1986, %v1985
        %v2024 = vpack.c.bf16 %v1988, %v1987
        %v2025 = vpack.c.bf16 %v1990, %v1989
        %v2026 = vpack.c.bf16 %v1992, %v1991
        %v2027 = vpack.c.bf16 %v1994, %v1993
        %v2028 = vpack.c.bf16 %v1996, %v1995
        %v2029 = vpack.c.bf16 %v1998, %v1997
        %v2030 = vpack.c.bf16 %v2000, %v1999
        %v2031 = vpack.c.bf16 %v2002, %v2001
        %v2032 = vpack.c.bf16 %v2004, %v2003
        %v2033 = vpack.c.bf16 %v2006, %v2005
        %v2034 = vpack.c.bf16 %v2008, %v2007
        %v2035 = vpack.c.bf16 %v2010, %v2009
        %v2036 = vpack.c.bf16 %v2012, %v2011
        %2037 = vmatpush.bf16.msra.mxu0 %v2020
        %2038 = vmatpush.bf16.msra.mxu0 %v2019
        %2039 = vmatpush.bf16.msra.mxu0 %v2018
        %2040 = vmatpush.bf16.msra.mxu0 %v2017
        %2041 = vmatpush.bf16.msra.mxu0 %v2016
        %2042 = vmatpush.bf16.msra.mxu0 %v2015
        %2043 = vmatpush.bf16.msra.mxu0 %v2014
        %2044 = vmatpush.bf16.msra.mxu0 %v2013
        %2045 = vmatmul.bf16.gmra.mxu0 %v1893
        %v2046 = vpop.f32.mrf.mxu0
        %v2047 = vadd.f32 0.0, %v2046
        %v2048 = vpop.f32.mrf.mxu0
        %v2049 = vadd.f32 0.0, %v2048
        %2050 = vmatmul.bf16.gmra.mxu0 %v1896
        %v2051 = vpop.f32.mrf.mxu0
        %v2052 = vadd.f32 0.0, %v2051
        %v2053 = vpop.f32.mrf.mxu0
        %v2054 = vadd.f32 0.0, %v2053
        %2055 = vmatmul.bf16.gmra.mxu0 %v1899
        %v2056 = vpop.f32.mrf.mxu0
        %v2057 = vadd.f32 0.0, %v2056
        %v2058 = vpop.f32.mrf.mxu0
        %v2059 = vadd.f32 0.0, %v2058
        %2060 = vmatmul.bf16.gmra.mxu0 %v1902
        %v2061 = vpop.f32.mrf.mxu0
        %v2062 = vadd.f32 0.0, %v2061
        %v2063 = vpop.f32.mrf.mxu0
        %v2064 = vadd.f32 0.0, %v2063
        %2065 = vmatmul.bf16.gmra.mxu0 %v1905
        %v2066 = vpop.f32.mrf.mxu0
        %v2067 = vadd.f32 0.0, %v2066
        %v2068 = vpop.f32.mrf.mxu0
        %v2069 = vadd.f32 0.0, %v2068
        %2070 = vmatmul.bf16.gmra.mxu0 %v1908
        %v2071 = vpop.f32.mrf.mxu0
        %v2072 = vadd.f32 0.0, %v2071
        %v2073 = vpop.f32.mrf.mxu0
        %v2074 = vadd.f32 0.0, %v2073
        %2075 = vmatmul.bf16.gmra.mxu0 %v1911
        %v2076 = vpop.f32.mrf.mxu0
        %v2077 = vadd.f32 0.0, %v2076
        %v2078 = vpop.f32.mrf.mxu0
        %v2079 = vadd.f32 0.0, %v2078
        %2080 = vmatmul.bf16.gmra.mxu0 %v1914
        %v2081 = vpop.f32.mrf.mxu0
        %v2082 = vadd.f32 0.0, %v2081
        %v2083 = vpop.f32.mrf.mxu0
        %v2084 = vadd.f32 0.0, %v2083
        %2085 = vmatmul.bf16.gmra.mxu0 %v1917
        %v2086 = vpop.f32.mrf.mxu0
        %v2087 = vadd.f32 0.0, %v2086
        %v2088 = vpop.f32.mrf.mxu0
        %v2089 = vadd.f32 0.0, %v2088
        %2090 = vmatmul.bf16.gmra.mxu0 %v1920
        %v2091 = vpop.f32.mrf.mxu0
        %v2092 = vadd.f32 0.0, %v2091
        %v2093 = vpop.f32.mrf.mxu0
        %v2094 = vadd.f32 0.0, %v2093
        %2095 = vmatmul.bf16.gmra.mxu0 %v1923
        %v2096 = vpop.f32.mrf.mxu0
        %v2097 = vadd.f32 0.0, %v2096
        %v2098 = vpop.f32.mrf.mxu0
        %v2099 = vadd.f32 0.0, %v2098
        %2100 = vmatmul.bf16.gmra.mxu0 %v1926
        %v2101 = vpop.f32.mrf.mxu0
        %v2102 = vadd.f32 0.0, %v2101
        %v2103 = vpop.f32.mrf.mxu0
        %v2104 = vadd.f32 0.0, %v2103
        %2105 = vmatmul.bf16.gmra.mxu0 %v1929
        %v2106 = vpop.f32.mrf.mxu0
        %v2107 = vadd.f32 0.0, %v2106
        %v2108 = vpop.f32.mrf.mxu0
        %v2109 = vadd.f32 0.0, %v2108
        %2110 = vmatmul.bf16.gmra.mxu0 %v1932
        %v2111 = vpop.f32.mrf.mxu0
        %v2112 = vadd.f32 0.0, %v2111
        %v2113 = vpop.f32.mrf.mxu0
        %v2114 = vadd.f32 0.0, %v2113
        %2115 = vmatmul.bf16.gmra.mxu0 %v1935
        %v2116 = vpop.f32.mrf.mxu0
        %v2117 = vadd.f32 0.0, %v2116
        %v2118 = vpop.f32.mrf.mxu0
        %v2119 = vadd.f32 0.0, %v2118
        %2120 = vmatmul.bf16.gmra.mxu0 %v1938
        %v2121 = vpop.f32.mrf.mxu0
        %v2122 = vadd.f32 0.0, %v2121
        %v2123 = vpop.f32.mrf.mxu0
        %v2124 = vadd.f32 0.0, %v2123
        %2125 = vmatmul.bf16.gmra.mxu0 %v1941
        %v2126 = vpop.f32.mrf.mxu0
        %v2127 = vadd.f32 0.0, %v2126
        %v2128 = vpop.f32.mrf.mxu0
        %v2129 = vadd.f32 0.0, %v2128
        %2130 = vmatmul.bf16.gmra.mxu0 %v1944
        %v2131 = vpop.f32.mrf.mxu0
        %v2132 = vadd.f32 0.0, %v2131
        %v2133 = vpop.f32.mrf.mxu0
        %v2134 = vadd.f32 0.0, %v2133
        %2135 = vmatmul.bf16.gmra.mxu0 %v1947
        %v2136 = vpop.f32.mrf.mxu0
        %v2137 = vadd.f32 0.0, %v2136
        %v2138 = vpop.f32.mrf.mxu0
        %v2139 = vadd.f32 0.0, %v2138
        %2140 = vmatmul.bf16.gmra.mxu0 %v1950
        %v2141 = vpop.f32.mrf.mxu0
        %v2142 = vadd.f32 0.0, %v2141
        %v2143 = vpop.f32.mrf.mxu0
        %v2144 = vadd.f32 0.0, %v2143
        %2145 = vmatmul.bf16.gmra.mxu0 %v1953
        %v2146 = vpop.f32.mrf.mxu0
        %v2147 = vadd.f32 0.0, %v2146
        %v2148 = vpop.f32.mrf.mxu0
        %v2149 = vadd.f32 0.0, %v2148
        %2150 = vmatmul.bf16.gmra.mxu0 %v1956
        %v2151 = vpop.f32.mrf.mxu0
        %v2152 = vadd.f32 0.0, %v2151
        %v2153 = vpop.f32.mrf.mxu0
        %v2154 = vadd.f32 0.0, %v2153
        %2155 = vmatmul.bf16.gmra.mxu0 %v1959
        %v2156 = vpop.f32.mrf.mxu0
        %v2157 = vadd.f32 0.0, %v2156
        %v2158 = vpop.f32.mrf.mxu0
        %v2159 = vadd.f32 0.0, %v2158
        %2160 = vmatmul.bf16.gmra.mxu0 %v1962
        %v2161 = vpop.f32.mrf.mxu0
        %v2162 = vadd.f32 0.0, %v2161
        %v2163 = vpop.f32.mrf.mxu0
        %v2164 = vadd.f32 0.0, %v2163
        %2165 = vdwg.mxu0
        %2166 = vmatpush.bf16.msra.mxu0 %v2028
        %2167 = vmatpush.bf16.msra.mxu0 %v2027
        %2168 = vmatpush.bf16.msra.mxu0 %v2026
        %2169 = vmatpush.bf16.msra.mxu0 %v2025
        %2170 = vmatpush.bf16.msra.mxu0 %v2024
        %2171 = vmatpush.bf16.msra.mxu0 %v2023
        %2172 = vmatpush.bf16.msra.mxu0 %v2022
        %2173 = vmatpush.bf16.msra.mxu0 %v2021
        %2174 = vmatmul.bf16.gmra.mxu0 %v1894
        %v2175 = vpop.f32.mrf.mxu0
        %v2176 = vadd.f32 %v2047, %v2175
        %v2177 = vpop.f32.mrf.mxu0
        %v2178 = vadd.f32 %v2049, %v2177
        %2179 = vmatmul.bf16.gmra.mxu0 %v1897
        %v2180 = vpop.f32.mrf.mxu0
        %v2181 = vadd.f32 %v2052, %v2180
        %v2182 = vpop.f32.mrf.mxu0
        %v2183 = vadd.f32 %v2054, %v2182
        %2184 = vmatmul.bf16.gmra.mxu0 %v1900
        %v2185 = vpop.f32.mrf.mxu0
        %v2186 = vadd.f32 %v2057, %v2185
        %v2187 = vpop.f32.mrf.mxu0
        %v2188 = vadd.f32 %v2059, %v2187
        %2189 = vmatmul.bf16.gmra.mxu0 %v1903
        %v2190 = vpop.f32.mrf.mxu0
        %v2191 = vadd.f32 %v2062, %v2190
        %v2192 = vpop.f32.mrf.mxu0
        %v2193 = vadd.f32 %v2064, %v2192
        %2194 = vmatmul.bf16.gmra.mxu0 %v1906
        %v2195 = vpop.f32.mrf.mxu0
        %v2196 = vadd.f32 %v2067, %v2195
        %v2197 = vpop.f32.mrf.mxu0
        %v2198 = vadd.f32 %v2069, %v2197
        %2199 = vmatmul.bf16.gmra.mxu0 %v1909
        %v2200 = vpop.f32.mrf.mxu0
        %v2201 = vadd.f32 %v2072, %v2200
        %v2202 = vpop.f32.mrf.mxu0
        %v2203 = vadd.f32 %v2074, %v2202
        %2204 = vmatmul.bf16.gmra.mxu0 %v1912
        %v2205 = vpop.f32.mrf.mxu0
        %v2206 = vadd.f32 %v2077, %v2205
        %v2207 = vpop.f32.mrf.mxu0
        %v2208 = vadd.f32 %v2079, %v2207
        %2209 = vmatmul.bf16.gmra.mxu0 %v1915
        %v2210 = vpop.f32.mrf.mxu0
        %v2211 = vadd.f32 %v2082, %v2210
        %v2212 = vpop.f32.mrf.mxu0
        %v2213 = vadd.f32 %v2084, %v2212
        %2214 = vmatmul.bf16.gmra.mxu0 %v1918
        %v2215 = vpop.f32.mrf.mxu0
        %v2216 = vadd.f32 %v2087, %v2215
        %v2217 = vpop.f32.mrf.mxu0
        %v2218 = vadd.f32 %v2089, %v2217
        %2219 = vmatmul.bf16.gmra.mxu0 %v1921
        %v2220 = vpop.f32.mrf.mxu0
        %v2221 = vadd.f32 %v2092, %v2220
        %v2222 = vpop.f32.mrf.mxu0
        %v2223 = vadd.f32 %v2094, %v2222
        %2224 = vmatmul.bf16.gmra.mxu0 %v1924
        %v2225 = vpop.f32.mrf.mxu0
        %v2226 = vadd.f32 %v2097, %v2225
        %v2227 = vpop.f32.mrf.mxu0
        %v2228 = vadd.f32 %v2099, %v2227
        %2229 = vmatmul.bf16.gmra.mxu0 %v1927
        %v2230 = vpop.f32.mrf.mxu0
        %v2231 = vadd.f32 %v2102, %v2230
        %v2232 = vpop.f32.mrf.mxu0
        %v2233 = vadd.f32 %v2104, %v2232
        %2234 = vmatmul.bf16.gmra.mxu0 %v1930
        %v2235 = vpop.f32.mrf.mxu0
        %v2236 = vadd.f32 %v2107, %v2235
        %v2237 = vpop.f32.mrf.mxu0
        %v2238 = vadd.f32 %v2109, %v2237
        %2239 = vmatmul.bf16.gmra.mxu0 %v1933
        %v2240 = vpop.f32.mrf.mxu0
        %v2241 = vadd.f32 %v2112, %v2240
        %v2242 = vpop.f32.mrf.mxu0
        %v2243 = vadd.f32 %v2114, %v2242
        %2244 = vmatmul.bf16.gmra.mxu0 %v1936
        %v2245 = vpop.f32.mrf.mxu0
        %v2246 = vadd.f32 %v2117, %v2245
        %v2247 = vpop.f32.mrf.mxu0
        %v2248 = vadd.f32 %v2119, %v2247
        %2249 = vmatmul.bf16.gmra.mxu0 %v1939
        %v2250 = vpop.f32.mrf.mxu0
        %v2251 = vadd.f32 %v2122, %v2250
        %v2252 = vpop.f32.mrf.mxu0
        %v2253 = vadd.f32 %v2124, %v2252
        %2254 = vmatmul.bf16.gmra.mxu0 %v1942
        %v2255 = vpop.f32.mrf.mxu0
        %v2256 = vadd.f32 %v2127, %v2255
        %v2257 = vpop.f32.mrf.mxu0
        %v2258 = vadd.f32 %v2129, %v2257
        %2259 = vmatmul.bf16.gmra.mxu0 %v1945
        %v2260 = vpop.f32.mrf.mxu0
        %v2261 = vadd.f32 %v2132, %v2260
        %v2262 = vpop.f32.mrf.mxu0
        %v2263 = vadd.f32 %v2134, %v2262
        %2264 = vmatmul.bf16.gmra.mxu0 %v1948
        %v2265 = vpop.f32.mrf.mxu0
        %v2266 = vadd.f32 %v2137, %v2265
        %v2267 = vpop.f32.mrf.mxu0
        %v2268 = vadd.f32 %v2139, %v2267
        %2269 = vmatmul.bf16.gmra.mxu0 %v1951
        %v2270 = vpop.f32.mrf.mxu0
        %v2271 = vadd.f32 %v2142, %v2270
        %v2272 = vpop.f32.mrf.mxu0
        %v2273 = vadd.f32 %v2144, %v2272
        %2274 = vmatmul.bf16.gmra.mxu0 %v1954
        %v2275 = vpop.f32.mrf.mxu0
        %v2276 = vadd.f32 %v2147, %v2275
        %v2277 = vpop.f32.mrf.mxu0
        %v2278 = vadd.f32 %v2149, %v2277
        %2279 = vmatmul.bf16.gmra.mxu0 %v1957
        %v2280 = vpop.f32.mrf.mxu0
        %v2281 = vadd.f32 %v2152, %v2280
        %v2282 = vpop.f32.mrf.mxu0
        %v2283 = vadd.f32 %v2154, %v2282
        %2284 = vmatmul.bf16.gmra.mxu0 %v1960
        %v2285 = vpop.f32.mrf.mxu0
        %v2286 = vadd.f32 %v2157, %v2285
        %v2287 = vpop.f32.mrf.mxu0
        %v2288 = vadd.f32 %v2159, %v2287
        %2289 = vmatmul.bf16.gmra.mxu0 %v1963
        %v2290 = vpop.f32.mrf.mxu0
        %v2291 = vadd.f32 %v2162, %v2290
        %v2292 = vpop.f32.mrf.mxu0
        %v2293 = vadd.f32 %v2164, %v2292
        %2294 = vdwg.mxu0
        %2295 = vmatpush.bf16.msra.mxu0 %v2036
        %2296 = vmatpush.bf16.msra.mxu0 %v2035
        %2297 = vmatpush.bf16.msra.mxu0 %v2034
        %2298 = vmatpush.bf16.msra.mxu0 %v2033
        %2299 = vmatpush.bf16.msra.mxu0 %v2032
        %2300 = vmatpush.bf16.msra.mxu0 %v2031
        %2301 = vmatpush.bf16.msra.mxu0 %v2030
        %2302 = vmatpush.bf16.msra.mxu0 %v2029
        %2303 = vmatmul.bf16.gmra.mxu0 %v1895
        %v2304 = vpop.f32.mrf.mxu0
        %v2305 = vadd.f32 %v2176, %v2304
        %v2306 = vpop.f32.mrf.mxu0
        %v2307 = vadd.f32 %v2178, %v2306
        %2308 = vmatmul.bf16.gmra.mxu0 %v1898
        %v2309 = vpop.f32.mrf.mxu0
        %v2310 = vadd.f32 %v2181, %v2309
        %v2311 = vpop.f32.mrf.mxu0
        %v2312 = vadd.f32 %v2183, %v2311
        %2313 = vmatmul.bf16.gmra.mxu0 %v1901
        %v2314 = vpop.f32.mrf.mxu0
        %v2315 = vadd.f32 %v2186, %v2314
        %v2316 = vpop.f32.mrf.mxu0
        %v2317 = vadd.f32 %v2188, %v2316
        %2318 = vmatmul.bf16.gmra.mxu0 %v1904
        %v2319 = vpop.f32.mrf.mxu0
        %v2320 = vadd.f32 %v2191, %v2319
        %v2321 = vpop.f32.mrf.mxu0
        %v2322 = vadd.f32 %v2193, %v2321
        %2323 = vmatmul.bf16.gmra.mxu0 %v1907
        %v2324 = vpop.f32.mrf.mxu0
        %v2325 = vadd.f32 %v2196, %v2324
        %v2326 = vpop.f32.mrf.mxu0
        %v2327 = vadd.f32 %v2198, %v2326
        %2328 = vmatmul.bf16.gmra.mxu0 %v1910
        %v2329 = vpop.f32.mrf.mxu0
        %v2330 = vadd.f32 %v2201, %v2329
        %v2331 = vpop.f32.mrf.mxu0
        %v2332 = vadd.f32 %v2203, %v2331
        %2333 = vmatmul.bf16.gmra.mxu0 %v1913
        %v2334 = vpop.f32.mrf.mxu0
        %v2335 = vadd.f32 %v2206, %v2334
        %v2336 = vpop.f32.mrf.mxu0
        %v2337 = vadd.f32 %v2208, %v2336
        %2338 = vmatmul.bf16.gmra.mxu0 %v1916
        %v2339 = vpop.f32.mrf.mxu0
        %v2340 = vadd.f32 %v2211, %v2339
        %v2341 = vpop.f32.mrf.mxu0
        %v2342 = vadd.f32 %v2213, %v2341
        %2343 = vmatmul.bf16.gmra.mxu0 %v1919
        %v2344 = vpop.f32.mrf.mxu0
        %v2345 = vadd.f32 %v2216, %v2344
        %v2346 = vpop.f32.mrf.mxu0
        %v2347 = vadd.f32 %v2218, %v2346
        %2348 = vmatmul.bf16.gmra.mxu0 %v1922
        %v2349 = vpop.f32.mrf.mxu0
        %v2350 = vadd.f32 %v2221, %v2349
        %v2351 = vpop.f32.mrf.mxu0
        %v2352 = vadd.f32 %v2223, %v2351
        %2353 = vmatmul.bf16.gmra.mxu0 %v1925
        %v2354 = vpop.f32.mrf.mxu0
        %v2355 = vadd.f32 %v2226, %v2354
        %v2356 = vpop.f32.mrf.mxu0
        %v2357 = vadd.f32 %v2228, %v2356
        %2358 = vmatmul.bf16.gmra.mxu0 %v1928
        %v2359 = vpop.f32.mrf.mxu0
        %v2360 = vadd.f32 %v2231, %v2359
        %v2361 = vpop.f32.mrf.mxu0
        %v2362 = vadd.f32 %v2233, %v2361
        %2363 = vmatmul.bf16.gmra.mxu0 %v1931
        %v2364 = vpop.f32.mrf.mxu0
        %v2365 = vadd.f32 %v2236, %v2364
        %v2366 = vpop.f32.mrf.mxu0
        %v2367 = vadd.f32 %v2238, %v2366
        %2368 = vmatmul.bf16.gmra.mxu0 %v1934
        %v2369 = vpop.f32.mrf.mxu0
        %v2370 = vadd.f32 %v2241, %v2369
        %v2371 = vpop.f32.mrf.mxu0
        %v2372 = vadd.f32 %v2243, %v2371
        %2373 = vmatmul.bf16.gmra.mxu0 %v1937
        %v2374 = vpop.f32.mrf.mxu0
        %v2375 = vadd.f32 %v2246, %v2374
        %v2376 = vpop.f32.mrf.mxu0
        %v2377 = vadd.f32 %v2248, %v2376
        %2378 = vmatmul.bf16.gmra.mxu0 %v1940
        %v2379 = vpop.f32.mrf.mxu0
        %v2380 = vadd.f32 %v2251, %v2379
        %v2381 = vpop.f32.mrf.mxu0
        %v2382 = vadd.f32 %v2253, %v2381
        %2383 = vmatmul.bf16.gmra.mxu0 %v1943
        %v2384 = vpop.f32.mrf.mxu0
        %v2385 = vadd.f32 %v2256, %v2384
        %v2386 = vpop.f32.mrf.mxu0
        %v2387 = vadd.f32 %v2258, %v2386
        %2388 = vmatmul.bf16.gmra.mxu0 %v1946
        %v2389 = vpop.f32.mrf.mxu0
        %v2390 = vadd.f32 %v2261, %v2389
        %v2391 = vpop.f32.mrf.mxu0
        %v2392 = vadd.f32 %v2263, %v2391
        %2393 = vmatmul.bf16.gmra.mxu0 %v1949
        %v2394 = vpop.f32.mrf.mxu0
        %v2395 = vadd.f32 %v2266, %v2394
        %v2396 = vpop.f32.mrf.mxu0
        %v2397 = vadd.f32 %v2268, %v2396
        %2398 = vmatmul.bf16.gmra.mxu0 %v1952
        %v2399 = vpop.f32.mrf.mxu0
        %v2400 = vadd.f32 %v2271, %v2399
        %v2401 = vpop.f32.mrf.mxu0
        %v2402 = vadd.f32 %v2273, %v2401
        %2403 = vmatmul.bf16.gmra.mxu0 %v1955
        %v2404 = vpop.f32.mrf.mxu0
        %v2405 = vadd.f32 %v2276, %v2404
        %v2406 = vpop.f32.mrf.mxu0
        %v2407 = vadd.f32 %v2278, %v2406
        %2408 = vmatmul.bf16.gmra.mxu0 %v1958
        %v2409 = vpop.f32.mrf.mxu0
        %v2410 = vadd.f32 %v2281, %v2409
        %v2411 = vpop.f32.mrf.mxu0
        %v2412 = vadd.f32 %v2283, %v2411
        %2413 = vmatmul.bf16.gmra.mxu0 %v1961
        %v2414 = vpop.f32.mrf.mxu0
        %v2415 = vadd.f32 %v2286, %v2414
        %v2416 = vpop.f32.mrf.mxu0
        %v2417 = vadd.f32 %v2288, %v2416
        %2418 = vmatmul.bf16.gmra.mxu0 %v1964
        %v2419 = vpop.f32.mrf.mxu0
        %v2420 = vadd.f32 %v2291, %v2419
        %v2421 = vpop.f32.mrf.mxu0
        %v2422 = vadd.f32 %v2293, %v2421
        %2423 = vdwg.mxu0
        %s2424 = scalar_lea.vmem %s240, 1152 [#allocation2]
        %v2425 = vld [vmem:[%s2424] sm:$0xff]
        %v2426 = vld [vmem:[%s2424 + $0x8] sm:$0xff]
        %v2427 = vld [vmem:[%s2424 + $0x10] sm:$0xff]
        %v2428 = vld [vmem:[%s2424 + $0x18] sm:$0xff]
        %v2429 = vld [vmem:[%s2424 + $0x20] sm:$0xff]
        %v2430 = vld [vmem:[%s2424 + $0x28] sm:$0xff]
        %v2431 = vld [vmem:[%s2424 + $0x30] sm:$0xff]
        %v2432 = vld [vmem:[%s2424 + $0x38] sm:$0xff]
        %v2433 = vld [vmem:[%s2424 + $0x40] sm:$0xff]
        %v2434 = vld [vmem:[%s2424 + $0x48] sm:$0xff]
        %v2435 = vld [vmem:[%s2424 + $0x50] sm:$0xff]
        %v2436 = vld [vmem:[%s2424 + $0x58] sm:$0xff]
        %v2437 = vld [vmem:[%s2424 + $0x60] sm:$0xff]
        %v2438 = vld [vmem:[%s2424 + $0x68] sm:$0xff]
        %v2439 = vld [vmem:[%s2424 + $0x70] sm:$0xff]
        %v2440 = vld [vmem:[%s2424 + $0x78] sm:$0xff]
        %v2441 = vld [vmem:[%s2424 + $0x80] sm:$0xff]
        %v2442 = vld [vmem:[%s2424 + $0x88] sm:$0xff]
        %v2443 = vld [vmem:[%s2424 + $0x90] sm:$0xff]
        %v2444 = vld [vmem:[%s2424 + $0x98] sm:$0xff]
        %v2445 = vld [vmem:[%s2424 + $0xa0] sm:$0xff]
        %v2446 = vld [vmem:[%s2424 + $0xa8] sm:$0xff]
        %v2447 = vld [vmem:[%s2424 + $0xb0] sm:$0xff]
        %v2448 = vld [vmem:[%s2424 + $0xb8] sm:$0xff]
        %v2449 = vld [vmem:[%s2424 + $0xc0] sm:$0xff]
        %v2450 = vld [vmem:[%s2424 + $0xc8] sm:$0xff]
        %v2451 = vld [vmem:[%s2424 + $0xd0] sm:$0xff]
        %v2452 = vld [vmem:[%s2424 + $0xd8] sm:$0xff]
        %v2453 = vld [vmem:[%s2424 + $0xe0] sm:$0xff]
        %v2454 = vld [vmem:[%s2424 + $0xe8] sm:$0xff]
        %v2455 = vld [vmem:[%s2424 + $0xf0] sm:$0xff]
        %v2456 = vld [vmem:[%s2424 + $0xf8] sm:$0xff]
        %v2457 = vld [vmem:[%s2424 + $0x100] sm:$0xff]
        %v2458 = vld [vmem:[%s2424 + $0x108] sm:$0xff]
        %v2459 = vld [vmem:[%s2424 + $0x110] sm:$0xff]
        %v2460 = vld [vmem:[%s2424 + $0x118] sm:$0xff]
        %v2461 = vld [vmem:[%s2424 + $0x120] sm:$0xff]
        %v2462 = vld [vmem:[%s2424 + $0x128] sm:$0xff]
        %v2463 = vld [vmem:[%s2424 + $0x130] sm:$0xff]
        %v2464 = vld [vmem:[%s2424 + $0x138] sm:$0xff]
        %v2465 = vld [vmem:[%s2424 + $0x140] sm:$0xff]
        %v2466 = vld [vmem:[%s2424 + $0x148] sm:$0xff]
        %v2467 = vld [vmem:[%s2424 + $0x150] sm:$0xff]
        %v2468 = vld [vmem:[%s2424 + $0x158] sm:$0xff]
        %v2469 = vld [vmem:[%s2424 + $0x160] sm:$0xff]
        %v2470 = vld [vmem:[%s2424 + $0x168] sm:$0xff]
        %v2471 = vld [vmem:[%s2424 + $0x170] sm:$0xff]
        %v2472 = vld [vmem:[%s2424 + $0x178] sm:$0xff]
        %v2473 = vld [vmem:[%s2424 + $0x180] sm:$0xff]
        %v2474 = vld [vmem:[%s2424 + $0x188] sm:$0xff]
        %v2475 = vld [vmem:[%s2424 + $0x190] sm:$0xff]
        %v2476 = vld [vmem:[%s2424 + $0x198] sm:$0xff]
        %v2477 = vld [vmem:[%s2424 + $0x1a0] sm:$0xff]
        %v2478 = vld [vmem:[%s2424 + $0x1a8] sm:$0xff]
        %v2479 = vld [vmem:[%s2424 + $0x1b0] sm:$0xff]
        %v2480 = vld [vmem:[%s2424 + $0x1b8] sm:$0xff]
        %v2481 = vld [vmem:[%s2424 + $0x1c0] sm:$0xff]
        %v2482 = vld [vmem:[%s2424 + $0x1c8] sm:$0xff]
        %v2483 = vld [vmem:[%s2424 + $0x1d0] sm:$0xff]
        %v2484 = vld [vmem:[%s2424 + $0x1d8] sm:$0xff]
        %v2485 = vld [vmem:[%s2424 + $0x1e0] sm:$0xff]
        %v2486 = vld [vmem:[%s2424 + $0x1e8] sm:$0xff]
        %v2487 = vld [vmem:[%s2424 + $0x1f0] sm:$0xff]
        %v2488 = vld [vmem:[%s2424 + $0x1f8] sm:$0xff]
        %v2489 = vld [vmem:[%s2424 + $0x200] sm:$0xff]
        %v2490 = vld [vmem:[%s2424 + $0x208] sm:$0xff]
        %v2491 = vld [vmem:[%s2424 + $0x210] sm:$0xff]
        %v2492 = vld [vmem:[%s2424 + $0x218] sm:$0xff]
        %v2493 = vld [vmem:[%s2424 + $0x220] sm:$0xff]
        %v2494 = vld [vmem:[%s2424 + $0x228] sm:$0xff]
        %v2495 = vld [vmem:[%s2424 + $0x230] sm:$0xff]
        %v2496 = vld [vmem:[%s2424 + $0x238] sm:$0xff]
        %v2497 = vld [vmem:[%s2424 + $0x240] sm:$0xff]
        %v2498 = vld [vmem:[%s2424 + $0x248] sm:$0xff]
        %v2499 = vld [vmem:[%s2424 + $0x250] sm:$0xff]
        %v2500 = vld [vmem:[%s2424 + $0x258] sm:$0xff]
        %v2501 = vld [vmem:[%s2424 + $0x260] sm:$0xff]
        %v2502 = vld [vmem:[%s2424 + $0x268] sm:$0xff]
        %v2503 = vld [vmem:[%s2424 + $0x270] sm:$0xff]
        %v2504 = vld [vmem:[%s2424 + $0x278] sm:$0xff]
        %v2505 = vld [vmem:[%s2424 + $0x280] sm:$0xff]
        %v2506 = vld [vmem:[%s2424 + $0x288] sm:$0xff]
        %v2507 = vld [vmem:[%s2424 + $0x290] sm:$0xff]
        %v2508 = vld [vmem:[%s2424 + $0x298] sm:$0xff]
        %v2509 = vld [vmem:[%s2424 + $0x2a0] sm:$0xff]
        %v2510 = vld [vmem:[%s2424 + $0x2a8] sm:$0xff]
        %v2511 = vld [vmem:[%s2424 + $0x2b0] sm:$0xff]
        %v2512 = vld [vmem:[%s2424 + $0x2b8] sm:$0xff]
        %v2513 = vld [vmem:[%s2424 + $0x2c0] sm:$0xff]
        %v2514 = vld [vmem:[%s2424 + $0x2c8] sm:$0xff]
        %v2515 = vld [vmem:[%s2424 + $0x2d0] sm:$0xff]
        %v2516 = vld [vmem:[%s2424 + $0x2d8] sm:$0xff]
        %v2517 = vld [vmem:[%s2424 + $0x2e0] sm:$0xff]
        %v2518 = vld [vmem:[%s2424 + $0x2e8] sm:$0xff]
        %v2519 = vld [vmem:[%s2424 + $0x2f0] sm:$0xff]
        %v2520 = vld [vmem:[%s2424 + $0x2f8] sm:$0xff]
        %v2521 = vld [vmem:[%s2424 + $0x300] sm:$0xff]
        %v2522 = vld [vmem:[%s2424 + $0x308] sm:$0xff]
        %v2523 = vld [vmem:[%s2424 + $0x310] sm:$0xff]
        %v2524 = vld [vmem:[%s2424 + $0x318] sm:$0xff]
        %v2525 = vld [vmem:[%s2424 + $0x320] sm:$0xff]
        %v2526 = vld [vmem:[%s2424 + $0x328] sm:$0xff]
        %v2527 = vld [vmem:[%s2424 + $0x330] sm:$0xff]
        %v2528 = vld [vmem:[%s2424 + $0x338] sm:$0xff]
        %v2529 = vld [vmem:[%s2424 + $0x340] sm:$0xff]
        %v2530 = vld [vmem:[%s2424 + $0x348] sm:$0xff]
        %v2531 = vld [vmem:[%s2424 + $0x350] sm:$0xff]
        %v2532 = vld [vmem:[%s2424 + $0x358] sm:$0xff]
        %v2533 = vld [vmem:[%s2424 + $0x360] sm:$0xff]
        %v2534 = vld [vmem:[%s2424 + $0x368] sm:$0xff]
        %v2535 = vld [vmem:[%s2424 + $0x370] sm:$0xff]
        %v2536 = vld [vmem:[%s2424 + $0x378] sm:$0xff]
        %v2537 = vld [vmem:[%s2424 + $0x380] sm:$0xff]
        %v2538 = vld [vmem:[%s2424 + $0x388] sm:$0xff]
        %v2539 = vld [vmem:[%s2424 + $0x390] sm:$0xff]
        %v2540 = vld [vmem:[%s2424 + $0x398] sm:$0xff]
        %v2541 = vld [vmem:[%s2424 + $0x3a0] sm:$0xff]
        %v2542 = vld [vmem:[%s2424 + $0x3a8] sm:$0xff]
        %v2543 = vld [vmem:[%s2424 + $0x3b0] sm:$0xff]
        %v2544 = vld [vmem:[%s2424 + $0x3b8] sm:$0xff]
        %v2545 = vld [vmem:[%s2424 + $0x3c0] sm:$0xff]
        %v2546 = vld [vmem:[%s2424 + $0x3c8] sm:$0xff]
        %v2547 = vld [vmem:[%s2424 + $0x3d0] sm:$0xff]
        %v2548 = vld [vmem:[%s2424 + $0x3d8] sm:$0xff]
        %v2549 = vld [vmem:[%s2424 + $0x3e0] sm:$0xff]
        %v2550 = vld [vmem:[%s2424 + $0x3e8] sm:$0xff]
        %v2551 = vld [vmem:[%s2424 + $0x3f0] sm:$0xff]
        %v2552 = vld [vmem:[%s2424 + $0x3f8] sm:$0xff]
        %v2553 = vld [vmem:[%s2424 + $0x400] sm:$0xff]
        %v2554 = vld [vmem:[%s2424 + $0x408] sm:$0xff]
        %v2555 = vld [vmem:[%s2424 + $0x410] sm:$0xff]
        %v2556 = vld [vmem:[%s2424 + $0x418] sm:$0xff]
        %v2557 = vld [vmem:[%s2424 + $0x420] sm:$0xff]
        %v2558 = vld [vmem:[%s2424 + $0x428] sm:$0xff]
        %v2559 = vld [vmem:[%s2424 + $0x430] sm:$0xff]
        %v2560 = vld [vmem:[%s2424 + $0x438] sm:$0xff]
        %v2561 = vld [vmem:[%s2424 + $0x440] sm:$0xff]
        %v2562 = vld [vmem:[%s2424 + $0x448] sm:$0xff]
        %v2563 = vld [vmem:[%s2424 + $0x450] sm:$0xff]
        %v2564 = vld [vmem:[%s2424 + $0x458] sm:$0xff]
        %v2565 = vld [vmem:[%s2424 + $0x460] sm:$0xff]
        %v2566 = vld [vmem:[%s2424 + $0x468] sm:$0xff]
        %v2567 = vld [vmem:[%s2424 + $0x470] sm:$0xff]
        %v2568 = vld [vmem:[%s2424 + $0x478] sm:$0xff]
        %v2569 = vadd.f32 %v2425, %v447
        %v2570 = vadd.f32 %v2426, %v448
        %v2571 = vadd.f32 %v2427, %v449
        %v2572 = vadd.f32 %v2428, %v447
        %v2573 = vadd.f32 %v2429, %v448
        %v2574 = vadd.f32 %v2430, %v449
        %v2575 = vadd.f32 %v2431, %v447
        %v2576 = vadd.f32 %v2432, %v448
        %v2577 = vadd.f32 %v2433, %v449
        %v2578 = vadd.f32 %v2434, %v447
        %v2579 = vadd.f32 %v2435, %v448
        %v2580 = vadd.f32 %v2436, %v449
        %v2581 = vadd.f32 %v2437, %v447
        %v2582 = vadd.f32 %v2438, %v448
        %v2583 = vadd.f32 %v2439, %v449
        %v2584 = vadd.f32 %v2440, %v447
        %v2585 = vadd.f32 %v2441, %v448
        %v2586 = vadd.f32 %v2442, %v449
        %v2587 = vadd.f32 %v2443, %v447
        %v2588 = vadd.f32 %v2444, %v448
        %v2589 = vadd.f32 %v2445, %v449
        %v2590 = vadd.f32 %v2446, %v447
        %v2591 = vadd.f32 %v2447, %v448
        %v2592 = vadd.f32 %v2448, %v449
        %v2593 = vadd.f32 %v2449, %v447
        %v2594 = vadd.f32 %v2450, %v448
        %v2595 = vadd.f32 %v2451, %v449
        %v2596 = vadd.f32 %v2452, %v447
        %v2597 = vadd.f32 %v2453, %v448
        %v2598 = vadd.f32 %v2454, %v449
        %v2599 = vadd.f32 %v2455, %v447
        %v2600 = vadd.f32 %v2456, %v448
        %v2601 = vadd.f32 %v2457, %v449
        %v2602 = vadd.f32 %v2458, %v447
        %v2603 = vadd.f32 %v2459, %v448
        %v2604 = vadd.f32 %v2460, %v449
        %v2605 = vadd.f32 %v2461, %v447
        %v2606 = vadd.f32 %v2462, %v448
        %v2607 = vadd.f32 %v2463, %v449
        %v2608 = vadd.f32 %v2464, %v447
        %v2609 = vadd.f32 %v2465, %v448
        %v2610 = vadd.f32 %v2466, %v449
        %v2611 = vadd.f32 %v2467, %v447
        %v2612 = vadd.f32 %v2468, %v448
        %v2613 = vadd.f32 %v2469, %v449
        %v2614 = vadd.f32 %v2470, %v447
        %v2615 = vadd.f32 %v2471, %v448
        %v2616 = vadd.f32 %v2472, %v449
        %v2617 = vadd.f32 %v2473, %v447
        %v2618 = vadd.f32 %v2474, %v448
        %v2619 = vadd.f32 %v2475, %v449
        %v2620 = vadd.f32 %v2476, %v447
        %v2621 = vadd.f32 %v2477, %v448
        %v2622 = vadd.f32 %v2478, %v449
        %v2623 = vadd.f32 %v2479, %v447
        %v2624 = vadd.f32 %v2480, %v448
        %v2625 = vadd.f32 %v2481, %v449
        %v2626 = vadd.f32 %v2482, %v447
        %v2627 = vadd.f32 %v2483, %v448
        %v2628 = vadd.f32 %v2484, %v449
        %v2629 = vadd.f32 %v2485, %v447
        %v2630 = vadd.f32 %v2486, %v448
        %v2631 = vadd.f32 %v2487, %v449
        %v2632 = vadd.f32 %v2488, %v447
        %v2633 = vadd.f32 %v2489, %v448
        %v2634 = vadd.f32 %v2490, %v449
        %v2635 = vadd.f32 %v2491, %v447
        %v2636 = vadd.f32 %v2492, %v448
        %v2637 = vadd.f32 %v2493, %v449
        %v2638 = vadd.f32 %v2494, %v447
        %v2639 = vadd.f32 %v2495, %v448
        %v2640 = vadd.f32 %v2496, %v449
        %v2641 = vadd.f32 %v2497, %v447
        %v2642 = vadd.f32 %v2498, %v448
        %v2643 = vadd.f32 %v2499, %v449
        %v2644 = vadd.f32 %v2500, %v447
        %v2645 = vadd.f32 %v2501, %v448
        %v2646 = vadd.f32 %v2502, %v449
        %v2647 = vadd.f32 %v2503, %v447
        %v2648 = vadd.f32 %v2504, %v448
        %v2649 = vadd.f32 %v2505, %v449
        %v2650 = vadd.f32 %v2506, %v447
        %v2651 = vadd.f32 %v2507, %v448
        %v2652 = vadd.f32 %v2508, %v449
        %v2653 = vadd.f32 %v2509, %v447
        %v2654 = vadd.f32 %v2510, %v448
        %v2655 = vadd.f32 %v2511, %v449
        %v2656 = vadd.f32 %v2512, %v447
        %v2657 = vadd.f32 %v2513, %v448
        %v2658 = vadd.f32 %v2514, %v449
        %v2659 = vadd.f32 %v2515, %v447
        %v2660 = vadd.f32 %v2516, %v448
        %v2661 = vadd.f32 %v2517, %v449
        %v2662 = vadd.f32 %v2518, %v447
        %v2663 = vadd.f32 %v2519, %v448
        %v2664 = vadd.f32 %v2520, %v449
        %v2665 = vadd.f32 %v2521, %v447
        %v2666 = vadd.f32 %v2522, %v448
        %v2667 = vadd.f32 %v2523, %v449
        %v2668 = vadd.f32 %v2524, %v447
        %v2669 = vadd.f32 %v2525, %v448
        %v2670 = vadd.f32 %v2526, %v449
        %v2671 = vadd.f32 %v2527, %v447
        %v2672 = vadd.f32 %v2528, %v448
        %v2673 = vadd.f32 %v2529, %v449
        %v2674 = vadd.f32 %v2530, %v447
        %v2675 = vadd.f32 %v2531, %v448
        %v2676 = vadd.f32 %v2532, %v449
        %v2677 = vadd.f32 %v2533, %v447
        %v2678 = vadd.f32 %v2534, %v448
        %v2679 = vadd.f32 %v2535, %v449
        %v2680 = vadd.f32 %v2536, %v447
        %v2681 = vadd.f32 %v2537, %v448
        %v2682 = vadd.f32 %v2538, %v449
        %v2683 = vadd.f32 %v2539, %v447
        %v2684 = vadd.f32 %v2540, %v448
        %v2685 = vadd.f32 %v2541, %v449
        %v2686 = vadd.f32 %v2542, %v447
        %v2687 = vadd.f32 %v2543, %v448
        %v2688 = vadd.f32 %v2544, %v449
        %v2689 = vadd.f32 %v2545, %v447
        %v2690 = vadd.f32 %v2546, %v448
        %v2691 = vadd.f32 %v2547, %v449
        %v2692 = vadd.f32 %v2548, %v447
        %v2693 = vadd.f32 %v2549, %v448
        %v2694 = vadd.f32 %v2550, %v449
        %v2695 = vadd.f32 %v2551, %v447
        %v2696 = vadd.f32 %v2552, %v448
        %v2697 = vadd.f32 %v2553, %v449
        %v2698 = vadd.f32 %v2554, %v447
        %v2699 = vadd.f32 %v2555, %v448
        %v2700 = vadd.f32 %v2556, %v449
        %v2701 = vadd.f32 %v2557, %v447
        %v2702 = vadd.f32 %v2558, %v448
        %v2703 = vadd.f32 %v2559, %v449
        %v2704 = vadd.f32 %v2560, %v447
        %v2705 = vadd.f32 %v2561, %v448
        %v2706 = vadd.f32 %v2562, %v449
        %v2707 = vadd.f32 %v2563, %v447
        %v2708 = vadd.f32 %v2564, %v448
        %v2709 = vadd.f32 %v2565, %v449
        %v2710 = vadd.f32 %v2566, %v447
        %v2711 = vadd.f32 %v2567, %v448
        %v2712 = vadd.f32 %v2568, %v449
        %v2713 = vmax.f32 %v2569, %v2570
        %v2714 = vmax.f32 %v2713, %v2571
        %2715 = vmax.xlane.f32.xlu0 %v2714
        %v2716 = vpop.xlane.xlu0 %2715
        %v2717 = vmax.f32 %v2572, %v2573
        %v2718 = vmax.f32 %v2717, %v2574
        %2719 = vmax.xlane.f32.xlu0 %v2718
        %v2720 = vpop.xlane.xlu0 %2719
        %v2721 = vmax.f32 %v2575, %v2576
        %v2722 = vmax.f32 %v2721, %v2577
        %2723 = vmax.xlane.f32.xlu0 %v2722
        %v2724 = vpop.xlane.xlu0 %2723
        %v2725 = vmax.f32 %v2578, %v2579
        %v2726 = vmax.f32 %v2725, %v2580
        %2727 = vmax.xlane.f32.xlu0 %v2726
        %v2728 = vpop.xlane.xlu0 %2727
        %v2729 = vmax.f32 %v2581, %v2582
        %v2730 = vmax.f32 %v2729, %v2583
        %2731 = vmax.xlane.f32.xlu0 %v2730
        %v2732 = vpop.xlane.xlu0 %2731
        %v2733 = vmax.f32 %v2584, %v2585
        %v2734 = vmax.f32 %v2733, %v2586
        %2735 = vmax.xlane.f32.xlu0 %v2734
        %v2736 = vpop.xlane.xlu0 %2735
        %v2737 = vmax.f32 %v2587, %v2588
        %v2738 = vmax.f32 %v2737, %v2589
        %2739 = vmax.xlane.f32.xlu0 %v2738
        %v2740 = vpop.xlane.xlu0 %2739
        %v2741 = vmax.f32 %v2590, %v2591
        %v2742 = vmax.f32 %v2741, %v2592
        %2743 = vmax.xlane.f32.xlu0 %v2742
        %v2744 = vpop.xlane.xlu0 %2743
        %v2745 = vmax.f32 %v2593, %v2594
        %v2746 = vmax.f32 %v2745, %v2595
        %2747 = vmax.xlane.f32.xlu0 %v2746
        %v2748 = vpop.xlane.xlu0 %2747
        %v2749 = vmax.f32 %v2596, %v2597
        %v2750 = vmax.f32 %v2749, %v2598
        %2751 = vmax.xlane.f32.xlu0 %v2750
        %v2752 = vpop.xlane.xlu0 %2751
        %v2753 = vmax.f32 %v2599, %v2600
        %v2754 = vmax.f32 %v2753, %v2601
        %2755 = vmax.xlane.f32.xlu0 %v2754
        %v2756 = vpop.xlane.xlu0 %2755
        %v2757 = vmax.f32 %v2602, %v2603
        %v2758 = vmax.f32 %v2757, %v2604
        %2759 = vmax.xlane.f32.xlu0 %v2758
        %v2760 = vpop.xlane.xlu0 %2759
        %v2761 = vmax.f32 %v2605, %v2606
        %v2762 = vmax.f32 %v2761, %v2607
        %2763 = vmax.xlane.f32.xlu0 %v2762
        %v2764 = vpop.xlane.xlu0 %2763
        %v2765 = vmax.f32 %v2608, %v2609
        %v2766 = vmax.f32 %v2765, %v2610
        %2767 = vmax.xlane.f32.xlu0 %v2766
        %v2768 = vpop.xlane.xlu0 %2767
        %v2769 = vmax.f32 %v2611, %v2612
        %v2770 = vmax.f32 %v2769, %v2613
        %2771 = vmax.xlane.f32.xlu0 %v2770
        %v2772 = vpop.xlane.xlu0 %2771
        %v2773 = vmax.f32 %v2614, %v2615
        %v2774 = vmax.f32 %v2773, %v2616
        %2775 = vmax.xlane.f32.xlu0 %v2774
        %v2776 = vpop.xlane.xlu0 %2775
        %v2777 = vmax.f32 %v2617, %v2618
        %v2778 = vmax.f32 %v2777, %v2619
        %2779 = vmax.xlane.f32.xlu0 %v2778
        %v2780 = vpop.xlane.xlu0 %2779
        %v2781 = vmax.f32 %v2620, %v2621
        %v2782 = vmax.f32 %v2781, %v2622
        %2783 = vmax.xlane.f32.xlu0 %v2782
        %v2784 = vpop.xlane.xlu0 %2783
        %v2785 = vmax.f32 %v2623, %v2624
        %v2786 = vmax.f32 %v2785, %v2625
        %2787 = vmax.xlane.f32.xlu0 %v2786
        %v2788 = vpop.xlane.xlu0 %2787
        %v2789 = vmax.f32 %v2626, %v2627
        %v2790 = vmax.f32 %v2789, %v2628
        %2791 = vmax.xlane.f32.xlu0 %v2790
        %v2792 = vpop.xlane.xlu0 %2791
        %v2793 = vmax.f32 %v2629, %v2630
        %v2794 = vmax.f32 %v2793, %v2631
        %2795 = vmax.xlane.f32.xlu0 %v2794
        %v2796 = vpop.xlane.xlu0 %2795
        %v2797 = vmax.f32 %v2632, %v2633
        %v2798 = vmax.f32 %v2797, %v2634
        %2799 = vmax.xlane.f32.xlu0 %v2798
        %v2800 = vpop.xlane.xlu0 %2799
        %v2801 = vmax.f32 %v2635, %v2636
        %v2802 = vmax.f32 %v2801, %v2637
        %2803 = vmax.xlane.f32.xlu0 %v2802
        %v2804 = vpop.xlane.xlu0 %2803
        %v2805 = vmax.f32 %v2638, %v2639
        %v2806 = vmax.f32 %v2805, %v2640
        %2807 = vmax.xlane.f32.xlu0 %v2806
        %v2808 = vpop.xlane.xlu0 %2807
        %v2809 = vmax.f32 %v2641, %v2642
        %v2810 = vmax.f32 %v2809, %v2643
        %2811 = vmax.xlane.f32.xlu0 %v2810
        %v2812 = vpop.xlane.xlu0 %2811
        %v2813 = vmax.f32 %v2644, %v2645
        %v2814 = vmax.f32 %v2813, %v2646
        %2815 = vmax.xlane.f32.xlu0 %v2814
        %v2816 = vpop.xlane.xlu0 %2815
        %v2817 = vmax.f32 %v2647, %v2648
        %v2818 = vmax.f32 %v2817, %v2649
        %2819 = vmax.xlane.f32.xlu0 %v2818
        %v2820 = vpop.xlane.xlu0 %2819
        %v2821 = vmax.f32 %v2650, %v2651
        %v2822 = vmax.f32 %v2821, %v2652
        %2823 = vmax.xlane.f32.xlu0 %v2822
        %v2824 = vpop.xlane.xlu0 %2823
        %v2825 = vmax.f32 %v2653, %v2654
        %v2826 = vmax.f32 %v2825, %v2655
        %2827 = vmax.xlane.f32.xlu0 %v2826
        %v2828 = vpop.xlane.xlu0 %2827
        %v2829 = vmax.f32 %v2656, %v2657
        %v2830 = vmax.f32 %v2829, %v2658
        %2831 = vmax.xlane.f32.xlu0 %v2830
        %v2832 = vpop.xlane.xlu0 %2831
        %v2833 = vmax.f32 %v2659, %v2660
        %v2834 = vmax.f32 %v2833, %v2661
        %2835 = vmax.xlane.f32.xlu0 %v2834
        %v2836 = vpop.xlane.xlu0 %2835
        %v2837 = vmax.f32 %v2662, %v2663
        %v2838 = vmax.f32 %v2837, %v2664
        %2839 = vmax.xlane.f32.xlu0 %v2838
        %v2840 = vpop.xlane.xlu0 %2839
        %v2841 = vmax.f32 %v2665, %v2666
        %v2842 = vmax.f32 %v2841, %v2667
        %2843 = vmax.xlane.f32.xlu0 %v2842
        %v2844 = vpop.xlane.xlu0 %2843
        %v2845 = vmax.f32 %v2668, %v2669
        %v2846 = vmax.f32 %v2845, %v2670
        %2847 = vmax.xlane.f32.xlu0 %v2846
        %v2848 = vpop.xlane.xlu0 %2847
        %v2849 = vmax.f32 %v2671, %v2672
        %v2850 = vmax.f32 %v2849, %v2673
        %2851 = vmax.xlane.f32.xlu0 %v2850
        %v2852 = vpop.xlane.xlu0 %2851
        %v2853 = vmax.f32 %v2674, %v2675
        %v2854 = vmax.f32 %v2853, %v2676
        %2855 = vmax.xlane.f32.xlu0 %v2854
        %v2856 = vpop.xlane.xlu0 %2855
        %v2857 = vmax.f32 %v2677, %v2678
        %v2858 = vmax.f32 %v2857, %v2679
        %2859 = vmax.xlane.f32.xlu0 %v2858
        %v2860 = vpop.xlane.xlu0 %2859
        %v2861 = vmax.f32 %v2680, %v2681
        %v2862 = vmax.f32 %v2861, %v2682
        %2863 = vmax.xlane.f32.xlu0 %v2862
        %v2864 = vpop.xlane.xlu0 %2863
        %v2865 = vmax.f32 %v2683, %v2684
        %v2866 = vmax.f32 %v2865, %v2685
        %2867 = vmax.xlane.f32.xlu0 %v2866
        %v2868 = vpop.xlane.xlu0 %2867
        %v2869 = vmax.f32 %v2686, %v2687
        %v2870 = vmax.f32 %v2869, %v2688
        %2871 = vmax.xlane.f32.xlu0 %v2870
        %v2872 = vpop.xlane.xlu0 %2871
        %v2873 = vmax.f32 %v2689, %v2690
        %v2874 = vmax.f32 %v2873, %v2691
        %2875 = vmax.xlane.f32.xlu0 %v2874
        %v2876 = vpop.xlane.xlu0 %2875
        %v2877 = vmax.f32 %v2692, %v2693
        %v2878 = vmax.f32 %v2877, %v2694
        %2879 = vmax.xlane.f32.xlu0 %v2878
        %v2880 = vpop.xlane.xlu0 %2879
        %v2881 = vmax.f32 %v2695, %v2696
        %v2882 = vmax.f32 %v2881, %v2697
        %2883 = vmax.xlane.f32.xlu0 %v2882
        %v2884 = vpop.xlane.xlu0 %2883
        %v2885 = vmax.f32 %v2698, %v2699
        %v2886 = vmax.f32 %v2885, %v2700
        %2887 = vmax.xlane.f32.xlu0 %v2886
        %v2888 = vpop.xlane.xlu0 %2887
        %v2889 = vmax.f32 %v2701, %v2702
        %v2890 = vmax.f32 %v2889, %v2703
        %2891 = vmax.xlane.f32.xlu0 %v2890
        %v2892 = vpop.xlane.xlu0 %2891
        %v2893 = vmax.f32 %v2704, %v2705
        %v2894 = vmax.f32 %v2893, %v2706
        %2895 = vmax.xlane.f32.xlu0 %v2894
        %v2896 = vpop.xlane.xlu0 %2895
        %v2897 = vmax.f32 %v2707, %v2708
        %v2898 = vmax.f32 %v2897, %v2709
        %2899 = vmax.xlane.f32.xlu0 %v2898
        %v2900 = vpop.xlane.xlu0 %2899
        %v2901 = vmax.f32 %v2710, %v2711
        %v2902 = vmax.f32 %v2901, %v2712
        %2903 = vmax.xlane.f32.xlu0 %v2902
        %v2904 = vpop.xlane.xlu0 %2903
        %v2905 = vsub.f32 %v2569, %v2716
        %v2906 = vsub.f32 %v2570, %v2716
        %v2907 = vsub.f32 %v2571, %v2716
        %v2908 = vsub.f32 %v2572, %v2720
        %v2909 = vsub.f32 %v2573, %v2720
        %v2910 = vsub.f32 %v2574, %v2720
        %v2911 = vsub.f32 %v2575, %v2724
        %v2912 = vsub.f32 %v2576, %v2724
        %v2913 = vsub.f32 %v2577, %v2724
        %v2914 = vsub.f32 %v2578, %v2728
        %v2915 = vsub.f32 %v2579, %v2728
        %v2916 = vsub.f32 %v2580, %v2728
        %v2917 = vsub.f32 %v2581, %v2732
        %v2918 = vsub.f32 %v2582, %v2732
        %v2919 = vsub.f32 %v2583, %v2732
        %v2920 = vsub.f32 %v2584, %v2736
        %v2921 = vsub.f32 %v2585, %v2736
        %v2922 = vsub.f32 %v2586, %v2736
        %v2923 = vsub.f32 %v2587, %v2740
        %v2924 = vsub.f32 %v2588, %v2740
        %v2925 = vsub.f32 %v2589, %v2740
        %v2926 = vsub.f32 %v2590, %v2744
        %v2927 = vsub.f32 %v2591, %v2744
        %v2928 = vsub.f32 %v2592, %v2744
        %v2929 = vsub.f32 %v2593, %v2748
        %v2930 = vsub.f32 %v2594, %v2748
        %v2931 = vsub.f32 %v2595, %v2748
        %v2932 = vsub.f32 %v2596, %v2752
        %v2933 = vsub.f32 %v2597, %v2752
        %v2934 = vsub.f32 %v2598, %v2752
        %v2935 = vsub.f32 %v2599, %v2756
        %v2936 = vsub.f32 %v2600, %v2756
        %v2937 = vsub.f32 %v2601, %v2756
        %v2938 = vsub.f32 %v2602, %v2760
        %v2939 = vsub.f32 %v2603, %v2760
        %v2940 = vsub.f32 %v2604, %v2760
        %v2941 = vsub.f32 %v2605, %v2764
        %v2942 = vsub.f32 %v2606, %v2764
        %v2943 = vsub.f32 %v2607, %v2764
        %v2944 = vsub.f32 %v2608, %v2768
        %v2945 = vsub.f32 %v2609, %v2768
        %v2946 = vsub.f32 %v2610, %v2768
        %v2947 = vsub.f32 %v2611, %v2772
        %v2948 = vsub.f32 %v2612, %v2772
        %v2949 = vsub.f32 %v2613, %v2772
        %v2950 = vsub.f32 %v2614, %v2776
        %v2951 = vsub.f32 %v2615, %v2776
        %v2952 = vsub.f32 %v2616, %v2776
        %v2953 = vsub.f32 %v2617, %v2780
        %v2954 = vsub.f32 %v2618, %v2780
        %v2955 = vsub.f32 %v2619, %v2780
        %v2956 = vsub.f32 %v2620, %v2784
        %v2957 = vsub.f32 %v2621, %v2784
        %v2958 = vsub.f32 %v2622, %v2784
        %v2959 = vsub.f32 %v2623, %v2788
        %v2960 = vsub.f32 %v2624, %v2788
        %v2961 = vsub.f32 %v2625, %v2788
        %v2962 = vsub.f32 %v2626, %v2792
        %v2963 = vsub.f32 %v2627, %v2792
        %v2964 = vsub.f32 %v2628, %v2792
        %v2965 = vsub.f32 %v2629, %v2796
        %v2966 = vsub.f32 %v2630, %v2796
        %v2967 = vsub.f32 %v2631, %v2796
        %v2968 = vsub.f32 %v2632, %v2800
        %v2969 = vsub.f32 %v2633, %v2800
        %v2970 = vsub.f32 %v2634, %v2800
        %v2971 = vsub.f32 %v2635, %v2804
        %v2972 = vsub.f32 %v2636, %v2804
        %v2973 = vsub.f32 %v2637, %v2804
        %v2974 = vsub.f32 %v2638, %v2808
        %v2975 = vsub.f32 %v2639, %v2808
        %v2976 = vsub.f32 %v2640, %v2808
        %v2977 = vsub.f32 %v2641, %v2812
        %v2978 = vsub.f32 %v2642, %v2812
        %v2979 = vsub.f32 %v2643, %v2812
        %v2980 = vsub.f32 %v2644, %v2816
        %v2981 = vsub.f32 %v2645, %v2816
        %v2982 = vsub.f32 %v2646, %v2816
        %v2983 = vsub.f32 %v2647, %v2820
        %v2984 = vsub.f32 %v2648, %v2820
        %v2985 = vsub.f32 %v2649, %v2820
        %v2986 = vsub.f32 %v2650, %v2824
        %v2987 = vsub.f32 %v2651, %v2824
        %v2988 = vsub.f32 %v2652, %v2824
        %v2989 = vsub.f32 %v2653, %v2828
        %v2990 = vsub.f32 %v2654, %v2828
        %v2991 = vsub.f32 %v2655, %v2828
        %v2992 = vsub.f32 %v2656, %v2832
        %v2993 = vsub.f32 %v2657, %v2832
        %v2994 = vsub.f32 %v2658, %v2832
        %v2995 = vsub.f32 %v2659, %v2836
        %v2996 = vsub.f32 %v2660, %v2836
        %v2997 = vsub.f32 %v2661, %v2836
        %v2998 = vsub.f32 %v2662, %v2840
        %v2999 = vsub.f32 %v2663, %v2840
        %v3000 = vsub.f32 %v2664, %v2840
        %v3001 = vsub.f32 %v2665, %v2844
        %v3002 = vsub.f32 %v2666, %v2844
        %v3003 = vsub.f32 %v2667, %v2844
        %v3004 = vsub.f32 %v2668, %v2848
        %v3005 = vsub.f32 %v2669, %v2848
        %v3006 = vsub.f32 %v2670, %v2848
        %v3007 = vsub.f32 %v2671, %v2852
        %v3008 = vsub.f32 %v2672, %v2852
        %v3009 = vsub.f32 %v2673, %v2852
        %v3010 = vsub.f32 %v2674, %v2856
        %v3011 = vsub.f32 %v2675, %v2856
        %v3012 = vsub.f32 %v2676, %v2856
        %v3013 = vsub.f32 %v2677, %v2860
        %v3014 = vsub.f32 %v2678, %v2860
        %v3015 = vsub.f32 %v2679, %v2860
        %v3016 = vsub.f32 %v2680, %v2864
        %v3017 = vsub.f32 %v2681, %v2864
        %v3018 = vsub.f32 %v2682, %v2864
        %v3019 = vsub.f32 %v2683, %v2868
        %v3020 = vsub.f32 %v2684, %v2868
        %v3021 = vsub.f32 %v2685, %v2868
        %v3022 = vsub.f32 %v2686, %v2872
        %v3023 = vsub.f32 %v2687, %v2872
        %v3024 = vsub.f32 %v2688, %v2872
        %v3025 = vsub.f32 %v2689, %v2876
        %v3026 = vsub.f32 %v2690, %v2876
        %v3027 = vsub.f32 %v2691, %v2876
        %v3028 = vsub.f32 %v2692, %v2880
        %v3029 = vsub.f32 %v2693, %v2880
        %v3030 = vsub.f32 %v2694, %v2880
        %v3031 = vsub.f32 %v2695, %v2884
        %v3032 = vsub.f32 %v2696, %v2884
        %v3033 = vsub.f32 %v2697, %v2884
        %v3034 = vsub.f32 %v2698, %v2888
        %v3035 = vsub.f32 %v2699, %v2888
        %v3036 = vsub.f32 %v2700, %v2888
        %v3037 = vsub.f32 %v2701, %v2892
        %v3038 = vsub.f32 %v2702, %v2892
        %v3039 = vsub.f32 %v2703, %v2892
        %v3040 = vsub.f32 %v2704, %v2896
        %v3041 = vsub.f32 %v2705, %v2896
        %v3042 = vsub.f32 %v2706, %v2896
        %v3043 = vsub.f32 %v2707, %v2900
        %v3044 = vsub.f32 %v2708, %v2900
        %v3045 = vsub.f32 %v2709, %v2900
        %v3046 = vsub.f32 %v2710, %v2904
        %v3047 = vsub.f32 %v2711, %v2904
        %v3048 = vsub.f32 %v2712, %v2904
        %v3049 = vmul.f32 %v2905, 1.442695
        %v3050 = vpow.pop %v3049
        %v3051 = vmul.f32 %v2906, 1.442695
        %v3052 = vpow.pop %v3051
        %v3053 = vmul.f32 %v2907, 1.442695
        %v3054 = vpow.pop %v3053
        %v3055 = vmul.f32 %v2908, 1.442695
        %v3056 = vpow.pop %v3055
        %v3057 = vmul.f32 %v2909, 1.442695
        %v3058 = vpow.pop %v3057
        %v3059 = vmul.f32 %v2910, 1.442695
        %v3060 = vpow.pop %v3059
        %v3061 = vmul.f32 %v2911, 1.442695
        %v3062 = vpow.pop %v3061
        %v3063 = vmul.f32 %v2912, 1.442695
        %v3064 = vpow.pop %v3063
        %v3065 = vmul.f32 %v2913, 1.442695
        %v3066 = vpow.pop %v3065
        %v3067 = vmul.f32 %v2914, 1.442695
        %v3068 = vpow.pop %v3067
        %v3069 = vmul.f32 %v2915, 1.442695
        %v3070 = vpow.pop %v3069
        %v3071 = vmul.f32 %v2916, 1.442695
        %v3072 = vpow.pop %v3071
        %v3073 = vmul.f32 %v2917, 1.442695
        %v3074 = vpow.pop %v3073
        %v3075 = vmul.f32 %v2918, 1.442695
        %v3076 = vpow.pop %v3075
        %v3077 = vmul.f32 %v2919, 1.442695
        %v3078 = vpow.pop %v3077
        %v3079 = vmul.f32 %v2920, 1.442695
        %v3080 = vpow.pop %v3079
        %v3081 = vmul.f32 %v2921, 1.442695
        %v3082 = vpow.pop %v3081
        %v3083 = vmul.f32 %v2922, 1.442695
        %v3084 = vpow.pop %v3083
        %v3085 = vmul.f32 %v2923, 1.442695
        %v3086 = vpow.pop %v3085
        %v3087 = vmul.f32 %v2924, 1.442695
        %v3088 = vpow.pop %v3087
        %v3089 = vmul.f32 %v2925, 1.442695
        %v3090 = vpow.pop %v3089
        %v3091 = vmul.f32 %v2926, 1.442695
        %v3092 = vpow.pop %v3091
        %v3093 = vmul.f32 %v2927, 1.442695
        %v3094 = vpow.pop %v3093
        %v3095 = vmul.f32 %v2928, 1.442695
        %v3096 = vpow.pop %v3095
        %v3097 = vmul.f32 %v2929, 1.442695
        %v3098 = vpow.pop %v3097
        %v3099 = vmul.f32 %v2930, 1.442695
        %v3100 = vpow.pop %v3099
        %v3101 = vmul.f32 %v2931, 1.442695
        %v3102 = vpow.pop %v3101
        %v3103 = vmul.f32 %v2932, 1.442695
        %v3104 = vpow.pop %v3103
        %v3105 = vmul.f32 %v2933, 1.442695
        %v3106 = vpow.pop %v3105
        %v3107 = vmul.f32 %v2934, 1.442695
        %v3108 = vpow.pop %v3107
        %v3109 = vmul.f32 %v2935, 1.442695
        %v3110 = vpow.pop %v3109
        %v3111 = vmul.f32 %v2936, 1.442695
        %v3112 = vpow.pop %v3111
        %v3113 = vmul.f32 %v2937, 1.442695
        %v3114 = vpow.pop %v3113
        %v3115 = vmul.f32 %v2938, 1.442695
        %v3116 = vpow.pop %v3115
        %v3117 = vmul.f32 %v2939, 1.442695
        %v3118 = vpow.pop %v3117
        %v3119 = vmul.f32 %v2940, 1.442695
        %v3120 = vpow.pop %v3119
        %v3121 = vmul.f32 %v2941, 1.442695
        %v3122 = vpow.pop %v3121
        %v3123 = vmul.f32 %v2942, 1.442695
        %v3124 = vpow.pop %v3123
        %v3125 = vmul.f32 %v2943, 1.442695
        %v3126 = vpow.pop %v3125
        %v3127 = vmul.f32 %v2944, 1.442695
        %v3128 = vpow.pop %v3127
        %v3129 = vmul.f32 %v2945, 1.442695
        %v3130 = vpow.pop %v3129
        %v3131 = vmul.f32 %v2946, 1.442695
        %v3132 = vpow.pop %v3131
        %v3133 = vmul.f32 %v2947, 1.442695
        %v3134 = vpow.pop %v3133
        %v3135 = vmul.f32 %v2948, 1.442695
        %v3136 = vpow.pop %v3135
        %v3137 = vmul.f32 %v2949, 1.442695
        %v3138 = vpow.pop %v3137
        %v3139 = vmul.f32 %v2950, 1.442695
        %v3140 = vpow.pop %v3139
        %v3141 = vmul.f32 %v2951, 1.442695
        %v3142 = vpow.pop %v3141
        %v3143 = vmul.f32 %v2952, 1.442695
        %v3144 = vpow.pop %v3143
        %v3145 = vmul.f32 %v2953, 1.442695
        %v3146 = vpow.pop %v3145
        %v3147 = vmul.f32 %v2954, 1.442695
        %v3148 = vpow.pop %v3147
        %v3149 = vmul.f32 %v2955, 1.442695
        %v3150 = vpow.pop %v3149
        %v3151 = vmul.f32 %v2956, 1.442695
        %v3152 = vpow.pop %v3151
        %v3153 = vmul.f32 %v2957, 1.442695
        %v3154 = vpow.pop %v3153
        %v3155 = vmul.f32 %v2958, 1.442695
        %v3156 = vpow.pop %v3155
        %v3157 = vmul.f32 %v2959, 1.442695
        %v3158 = vpow.pop %v3157
        %v3159 = vmul.f32 %v2960, 1.442695
        %v3160 = vpow.pop %v3159
        %v3161 = vmul.f32 %v2961, 1.442695
        %v3162 = vpow.pop %v3161
        %v3163 = vmul.f32 %v2962, 1.442695
        %v3164 = vpow.pop %v3163
        %v3165 = vmul.f32 %v2963, 1.442695
        %v3166 = vpow.pop %v3165
        %v3167 = vmul.f32 %v2964, 1.442695
        %v3168 = vpow.pop %v3167
        %v3169 = vmul.f32 %v2965, 1.442695
        %v3170 = vpow.pop %v3169
        %v3171 = vmul.f32 %v2966, 1.442695
        %v3172 = vpow.pop %v3171
        %v3173 = vmul.f32 %v2967, 1.442695
        %v3174 = vpow.pop %v3173
        %v3175 = vmul.f32 %v2968, 1.442695
        %v3176 = vpow.pop %v3175
        %v3177 = vmul.f32 %v2969, 1.442695
        %v3178 = vpow.pop %v3177
        %v3179 = vmul.f32 %v2970, 1.442695
        %v3180 = vpow.pop %v3179
        %v3181 = vmul.f32 %v2971, 1.442695
        %v3182 = vpow.pop %v3181
        %v3183 = vmul.f32 %v2972, 1.442695
        %v3184 = vpow.pop %v3183
        %v3185 = vmul.f32 %v2973, 1.442695
        %v3186 = vpow.pop %v3185
        %v3187 = vmul.f32 %v2974, 1.442695
        %v3188 = vpow.pop %v3187
        %v3189 = vmul.f32 %v2975, 1.442695
        %v3190 = vpow.pop %v3189
        %v3191 = vmul.f32 %v2976, 1.442695
        %v3192 = vpow.pop %v3191
        %v3193 = vmul.f32 %v2977, 1.442695
        %v3194 = vpow.pop %v3193
        %v3195 = vmul.f32 %v2978, 1.442695
        %v3196 = vpow.pop %v3195
        %v3197 = vmul.f32 %v2979, 1.442695
        %v3198 = vpow.pop %v3197
        %v3199 = vmul.f32 %v2980, 1.442695
        %v3200 = vpow.pop %v3199
        %v3201 = vmul.f32 %v2981, 1.442695
        %v3202 = vpow.pop %v3201
        %v3203 = vmul.f32 %v2982, 1.442695
        %v3204 = vpow.pop %v3203
        %v3205 = vmul.f32 %v2983, 1.442695
        %v3206 = vpow.pop %v3205
        %v3207 = vmul.f32 %v2984, 1.442695
        %v3208 = vpow.pop %v3207
        %v3209 = vmul.f32 %v2985, 1.442695
        %v3210 = vpow.pop %v3209
        %v3211 = vmul.f32 %v2986, 1.442695
        %v3212 = vpow.pop %v3211
        %v3213 = vmul.f32 %v2987, 1.442695
        %v3214 = vpow.pop %v3213
        %v3215 = vmul.f32 %v2988, 1.442695
        %v3216 = vpow.pop %v3215
        %v3217 = vmul.f32 %v2989, 1.442695
        %v3218 = vpow.pop %v3217
        %v3219 = vmul.f32 %v2990, 1.442695
        %v3220 = vpow.pop %v3219
        %v3221 = vmul.f32 %v2991, 1.442695
        %v3222 = vpow.pop %v3221
        %v3223 = vmul.f32 %v2992, 1.442695
        %v3224 = vpow.pop %v3223
        %v3225 = vmul.f32 %v2993, 1.442695
        %v3226 = vpow.pop %v3225
        %v3227 = vmul.f32 %v2994, 1.442695
        %v3228 = vpow.pop %v3227
        %v3229 = vmul.f32 %v2995, 1.442695
        %v3230 = vpow.pop %v3229
        %v3231 = vmul.f32 %v2996, 1.442695
        %v3232 = vpow.pop %v3231
        %v3233 = vmul.f32 %v2997, 1.442695
        %v3234 = vpow.pop %v3233
        %v3235 = vmul.f32 %v2998, 1.442695
        %v3236 = vpow.pop %v3235
        %v3237 = vmul.f32 %v2999, 1.442695
        %v3238 = vpow.pop %v3237
        %v3239 = vmul.f32 %v3000, 1.442695
        %v3240 = vpow.pop %v3239
        %v3241 = vmul.f32 %v3001, 1.442695
        %v3242 = vpow.pop %v3241
        %v3243 = vmul.f32 %v3002, 1.442695
        %v3244 = vpow.pop %v3243
        %v3245 = vmul.f32 %v3003, 1.442695
        %v3246 = vpow.pop %v3245
        %v3247 = vmul.f32 %v3004, 1.442695
        %v3248 = vpow.pop %v3247
        %v3249 = vmul.f32 %v3005, 1.442695
        %v3250 = vpow.pop %v3249
        %v3251 = vmul.f32 %v3006, 1.442695
        %v3252 = vpow.pop %v3251
        %v3253 = vmul.f32 %v3007, 1.442695
        %v3254 = vpow.pop %v3253
        %v3255 = vmul.f32 %v3008, 1.442695
        %v3256 = vpow.pop %v3255
        %v3257 = vmul.f32 %v3009, 1.442695
        %v3258 = vpow.pop %v3257
        %v3259 = vmul.f32 %v3010, 1.442695
        %v3260 = vpow.pop %v3259
        %v3261 = vmul.f32 %v3011, 1.442695
        %v3262 = vpow.pop %v3261
        %v3263 = vmul.f32 %v3012, 1.442695
        %v3264 = vpow.pop %v3263
        %v3265 = vmul.f32 %v3013, 1.442695
        %v3266 = vpow.pop %v3265
        %v3267 = vmul.f32 %v3014, 1.442695
        %v3268 = vpow.pop %v3267
        %v3269 = vmul.f32 %v3015, 1.442695
        %v3270 = vpow.pop %v3269
        %v3271 = vmul.f32 %v3016, 1.442695
        %v3272 = vpow.pop %v3271
        %v3273 = vmul.f32 %v3017, 1.442695
        %v3274 = vpow.pop %v3273
        %v3275 = vmul.f32 %v3018, 1.442695
        %v3276 = vpow.pop %v3275
        %v3277 = vmul.f32 %v3019, 1.442695
        %v3278 = vpow.pop %v3277
        %v3279 = vmul.f32 %v3020, 1.442695
        %v3280 = vpow.pop %v3279
        %v3281 = vmul.f32 %v3021, 1.442695
        %v3282 = vpow.pop %v3281
        %v3283 = vmul.f32 %v3022, 1.442695
        %v3284 = vpow.pop %v3283
        %v3285 = vmul.f32 %v3023, 1.442695
        %v3286 = vpow.pop %v3285
        %v3287 = vmul.f32 %v3024, 1.442695
        %v3288 = vpow.pop %v3287
        %v3289 = vmul.f32 %v3025, 1.442695
        %v3290 = vpow.pop %v3289
        %v3291 = vmul.f32 %v3026, 1.442695
        %v3292 = vpow.pop %v3291
        %v3293 = vmul.f32 %v3027, 1.442695
        %v3294 = vpow.pop %v3293
        %v3295 = vmul.f32 %v3028, 1.442695
        %v3296 = vpow.pop %v3295
        %v3297 = vmul.f32 %v3029, 1.442695
        %v3298 = vpow.pop %v3297
        %v3299 = vmul.f32 %v3030, 1.442695
        %v3300 = vpow.pop %v3299
        %v3301 = vmul.f32 %v3031, 1.442695
        %v3302 = vpow.pop %v3301
        %v3303 = vmul.f32 %v3032, 1.442695
        %v3304 = vpow.pop %v3303
        %v3305 = vmul.f32 %v3033, 1.442695
        %v3306 = vpow.pop %v3305
        %v3307 = vmul.f32 %v3034, 1.442695
        %v3308 = vpow.pop %v3307
        %v3309 = vmul.f32 %v3035, 1.442695
        %v3310 = vpow.pop %v3309
        %v3311 = vmul.f32 %v3036, 1.442695
        %v3312 = vpow.pop %v3311
        %v3313 = vmul.f32 %v3037, 1.442695
        %v3314 = vpow.pop %v3313
        %v3315 = vmul.f32 %v3038, 1.442695
        %v3316 = vpow.pop %v3315
        %v3317 = vmul.f32 %v3039, 1.442695
        %v3318 = vpow.pop %v3317
        %v3319 = vmul.f32 %v3040, 1.442695
        %v3320 = vpow.pop %v3319
        %v3321 = vmul.f32 %v3041, 1.442695
        %v3322 = vpow.pop %v3321
        %v3323 = vmul.f32 %v3042, 1.442695
        %v3324 = vpow.pop %v3323
        %v3325 = vmul.f32 %v3043, 1.442695
        %v3326 = vpow.pop %v3325
        %v3327 = vmul.f32 %v3044, 1.442695
        %v3328 = vpow.pop %v3327
        %v3329 = vmul.f32 %v3045, 1.442695
        %v3330 = vpow.pop %v3329
        %v3331 = vmul.f32 %v3046, 1.442695
        %v3332 = vpow.pop %v3331
        %v3333 = vmul.f32 %v3047, 1.442695
        %v3334 = vpow.pop %v3333
        %v3335 = vmul.f32 %v3048, 1.442695
        %v3336 = vpow.pop %v3335
        %v3337 = vadd.f32 %v3050, %v3052
        %v3338 = vadd.f32 %v3337, %v3054
        %3339 = vadd.xlane.f32.xlu0 %v3338
        %v3340 = vpop.xlane.xlu0 %3339
        %v3341 = vadd.f32 %v3056, %v3058
        %v3342 = vadd.f32 %v3341, %v3060
        %3343 = vadd.xlane.f32.xlu0 %v3342
        %v3344 = vpop.xlane.xlu0 %3343
        %v3345 = vadd.f32 %v3062, %v3064
        %v3346 = vadd.f32 %v3345, %v3066
        %3347 = vadd.xlane.f32.xlu0 %v3346
        %v3348 = vpop.xlane.xlu0 %3347
        %v3349 = vadd.f32 %v3068, %v3070
        %v3350 = vadd.f32 %v3349, %v3072
        %3351 = vadd.xlane.f32.xlu0 %v3350
        %v3352 = vpop.xlane.xlu0 %3351
        %v3353 = vadd.f32 %v3074, %v3076
        %v3354 = vadd.f32 %v3353, %v3078
        %3355 = vadd.xlane.f32.xlu0 %v3354
        %v3356 = vpop.xlane.xlu0 %3355
        %v3357 = vadd.f32 %v3080, %v3082
        %v3358 = vadd.f32 %v3357, %v3084
        %3359 = vadd.xlane.f32.xlu0 %v3358
        %v3360 = vpop.xlane.xlu0 %3359
        %v3361 = vadd.f32 %v3086, %v3088
        %v3362 = vadd.f32 %v3361, %v3090
        %3363 = vadd.xlane.f32.xlu0 %v3362
        %v3364 = vpop.xlane.xlu0 %3363
        %v3365 = vadd.f32 %v3092, %v3094
        %v3366 = vadd.f32 %v3365, %v3096
        %3367 = vadd.xlane.f32.xlu0 %v3366
        %v3368 = vpop.xlane.xlu0 %3367
        %v3369 = vadd.f32 %v3098, %v3100
        %v3370 = vadd.f32 %v3369, %v3102
        %3371 = vadd.xlane.f32.xlu0 %v3370
        %v3372 = vpop.xlane.xlu0 %3371
        %v3373 = vadd.f32 %v3104, %v3106
        %v3374 = vadd.f32 %v3373, %v3108
        %3375 = vadd.xlane.f32.xlu0 %v3374
        %v3376 = vpop.xlane.xlu0 %3375
        %v3377 = vadd.f32 %v3110, %v3112
        %v3378 = vadd.f32 %v3377, %v3114
        %3379 = vadd.xlane.f32.xlu0 %v3378
        %v3380 = vpop.xlane.xlu0 %3379
        %v3381 = vadd.f32 %v3116, %v3118
        %v3382 = vadd.f32 %v3381, %v3120
        %3383 = vadd.xlane.f32.xlu0 %v3382
        %v3384 = vpop.xlane.xlu0 %3383
        %v3385 = vadd.f32 %v3122, %v3124
        %v3386 = vadd.f32 %v3385, %v3126
        %3387 = vadd.xlane.f32.xlu0 %v3386
        %v3388 = vpop.xlane.xlu0 %3387
        %v3389 = vadd.f32 %v3128, %v3130
        %v3390 = vadd.f32 %v3389, %v3132
        %3391 = vadd.xlane.f32.xlu0 %v3390
        %v3392 = vpop.xlane.xlu0 %3391
        %v3393 = vadd.f32 %v3134, %v3136
        %v3394 = vadd.f32 %v3393, %v3138
        %3395 = vadd.xlane.f32.xlu0 %v3394
        %v3396 = vpop.xlane.xlu0 %3395
        %v3397 = vadd.f32 %v3140, %v3142
        %v3398 = vadd.f32 %v3397, %v3144
        %3399 = vadd.xlane.f32.xlu0 %v3398
        %v3400 = vpop.xlane.xlu0 %3399
        %v3401 = vadd.f32 %v3146, %v3148
        %v3402 = vadd.f32 %v3401, %v3150
        %3403 = vadd.xlane.f32.xlu0 %v3402
        %v3404 = vpop.xlane.xlu0 %3403
        %v3405 = vadd.f32 %v3152, %v3154
        %v3406 = vadd.f32 %v3405, %v3156
        %3407 = vadd.xlane.f32.xlu0 %v3406
        %v3408 = vpop.xlane.xlu0 %3407
        %v3409 = vadd.f32 %v3158, %v3160
        %v3410 = vadd.f32 %v3409, %v3162
        %3411 = vadd.xlane.f32.xlu0 %v3410
        %v3412 = vpop.xlane.xlu0 %3411
        %v3413 = vadd.f32 %v3164, %v3166
        %v3414 = vadd.f32 %v3413, %v3168
        %3415 = vadd.xlane.f32.xlu0 %v3414
        %v3416 = vpop.xlane.xlu0 %3415
        %v3417 = vadd.f32 %v3170, %v3172
        %v3418 = vadd.f32 %v3417, %v3174
        %3419 = vadd.xlane.f32.xlu0 %v3418
        %v3420 = vpop.xlane.xlu0 %3419
        %v3421 = vadd.f32 %v3176, %v3178
        %v3422 = vadd.f32 %v3421, %v3180
        %3423 = vadd.xlane.f32.xlu0 %v3422
        %v3424 = vpop.xlane.xlu0 %3423
        %v3425 = vadd.f32 %v3182, %v3184
        %v3426 = vadd.f32 %v3425, %v3186
        %3427 = vadd.xlane.f32.xlu0 %v3426
        %v3428 = vpop.xlane.xlu0 %3427
        %v3429 = vadd.f32 %v3188, %v3190
        %v3430 = vadd.f32 %v3429, %v3192
        %3431 = vadd.xlane.f32.xlu0 %v3430
        %v3432 = vpop.xlane.xlu0 %3431
        %v3433 = vadd.f32 %v3194, %v3196
        %v3434 = vadd.f32 %v3433, %v3198
        %3435 = vadd.xlane.f32.xlu0 %v3434
        %v3436 = vpop.xlane.xlu0 %3435
        %v3437 = vadd.f32 %v3200, %v3202
        %v3438 = vadd.f32 %v3437, %v3204
        %3439 = vadd.xlane.f32.xlu0 %v3438
        %v3440 = vpop.xlane.xlu0 %3439
        %v3441 = vadd.f32 %v3206, %v3208
        %v3442 = vadd.f32 %v3441, %v3210
        %3443 = vadd.xlane.f32.xlu0 %v3442
        %v3444 = vpop.xlane.xlu0 %3443
        %v3445 = vadd.f32 %v3212, %v3214
        %v3446 = vadd.f32 %v3445, %v3216
        %3447 = vadd.xlane.f32.xlu0 %v3446
        %v3448 = vpop.xlane.xlu0 %3447
        %v3449 = vadd.f32 %v3218, %v3220
        %v3450 = vadd.f32 %v3449, %v3222
        %3451 = vadd.xlane.f32.xlu0 %v3450
        %v3452 = vpop.xlane.xlu0 %3451
        %v3453 = vadd.f32 %v3224, %v3226
        %v3454 = vadd.f32 %v3453, %v3228
        %3455 = vadd.xlane.f32.xlu0 %v3454
        %v3456 = vpop.xlane.xlu0 %3455
        %v3457 = vadd.f32 %v3230, %v3232
        %v3458 = vadd.f32 %v3457, %v3234
        %3459 = vadd.xlane.f32.xlu0 %v3458
        %v3460 = vpop.xlane.xlu0 %3459
        %v3461 = vadd.f32 %v3236, %v3238
        %v3462 = vadd.f32 %v3461, %v3240
        %3463 = vadd.xlane.f32.xlu0 %v3462
        %v3464 = vpop.xlane.xlu0 %3463
        %v3465 = vadd.f32 %v3242, %v3244
        %v3466 = vadd.f32 %v3465, %v3246
        %3467 = vadd.xlane.f32.xlu0 %v3466
        %v3468 = vpop.xlane.xlu0 %3467
        %v3469 = vadd.f32 %v3248, %v3250
        %v3470 = vadd.f32 %v3469, %v3252
        %3471 = vadd.xlane.f32.xlu0 %v3470
        %v3472 = vpop.xlane.xlu0 %3471
        %v3473 = vadd.f32 %v3254, %v3256
        %v3474 = vadd.f32 %v3473, %v3258
        %3475 = vadd.xlane.f32.xlu0 %v3474
        %v3476 = vpop.xlane.xlu0 %3475
        %v3477 = vadd.f32 %v3260, %v3262
        %v3478 = vadd.f32 %v3477, %v3264
        %3479 = vadd.xlane.f32.xlu0 %v3478
        %v3480 = vpop.xlane.xlu0 %3479
        %v3481 = vadd.f32 %v3266, %v3268
        %v3482 = vadd.f32 %v3481, %v3270
        %3483 = vadd.xlane.f32.xlu0 %v3482
        %v3484 = vpop.xlane.xlu0 %3483
        %v3485 = vadd.f32 %v3272, %v3274
        %v3486 = vadd.f32 %v3485, %v3276
        %3487 = vadd.xlane.f32.xlu0 %v3486
        %v3488 = vpop.xlane.xlu0 %3487
        %v3489 = vadd.f32 %v3278, %v3280
        %v3490 = vadd.f32 %v3489, %v3282
        %3491 = vadd.xlane.f32.xlu0 %v3490
        %v3492 = vpop.xlane.xlu0 %3491
        %v3493 = vadd.f32 %v3284, %v3286
        %v3494 = vadd.f32 %v3493, %v3288
        %3495 = vadd.xlane.f32.xlu0 %v3494
        %v3496 = vpop.xlane.xlu0 %3495
        %v3497 = vadd.f32 %v3290, %v3292
        %v3498 = vadd.f32 %v3497, %v3294
        %3499 = vadd.xlane.f32.xlu0 %v3498
        %v3500 = vpop.xlane.xlu0 %3499
        %v3501 = vadd.f32 %v3296, %v3298
        %v3502 = vadd.f32 %v3501, %v3300
        %3503 = vadd.xlane.f32.xlu0 %v3502
        %v3504 = vpop.xlane.xlu0 %3503
        %v3505 = vadd.f32 %v3302, %v3304
        %v3506 = vadd.f32 %v3505, %v3306
        %3507 = vadd.xlane.f32.xlu0 %v3506
        %v3508 = vpop.xlane.xlu0 %3507
        %v3509 = vadd.f32 %v3308, %v3310
        %v3510 = vadd.f32 %v3509, %v3312
        %3511 = vadd.xlane.f32.xlu0 %v3510
        %v3512 = vpop.xlane.xlu0 %3511
        %v3513 = vadd.f32 %v3314, %v3316
        %v3514 = vadd.f32 %v3513, %v3318
        %3515 = vadd.xlane.f32.xlu0 %v3514
        %v3516 = vpop.xlane.xlu0 %3515
        %v3517 = vadd.f32 %v3320, %v3322
        %v3518 = vadd.f32 %v3517, %v3324
        %3519 = vadd.xlane.f32.xlu0 %v3518
        %v3520 = vpop.xlane.xlu0 %3519
        %v3521 = vadd.f32 %v3326, %v3328
        %v3522 = vadd.f32 %v3521, %v3330
        %3523 = vadd.xlane.f32.xlu0 %v3522
        %v3524 = vpop.xlane.xlu0 %3523
        %v3525 = vadd.f32 %v3332, %v3334
        %v3526 = vadd.f32 %v3525, %v3336
        %3527 = vadd.xlane.f32.xlu0 %v3526
        %v3528 = vpop.xlane.xlu0 %3527
        %v3529 = vrcp.pop %v3340
        %v3530 = vrcp.pop %v3344
        %v3531 = vrcp.pop %v3348
        %v3532 = vrcp.pop %v3352
        %v3533 = vrcp.pop %v3356
        %v3534 = vrcp.pop %v3360
        %v3535 = vrcp.pop %v3364
        %v3536 = vrcp.pop %v3368
        %v3537 = vrcp.pop %v3372
        %v3538 = vrcp.pop %v3376
        %v3539 = vrcp.pop %v3380
        %v3540 = vrcp.pop %v3384
        %v3541 = vrcp.pop %v3388
        %v3542 = vrcp.pop %v3392
        %v3543 = vrcp.pop %v3396
        %v3544 = vrcp.pop %v3400
        %v3545 = vrcp.pop %v3404
        %v3546 = vrcp.pop %v3408
        %v3547 = vrcp.pop %v3412
        %v3548 = vrcp.pop %v3416
        %v3549 = vrcp.pop %v3420
        %v3550 = vrcp.pop %v3424
        %v3551 = vrcp.pop %v3428
        %v3552 = vrcp.pop %v3432
        %v3553 = vrcp.pop %v3436
        %v3554 = vrcp.pop %v3440
        %v3555 = vrcp.pop %v3444
        %v3556 = vrcp.pop %v3448
        %v3557 = vrcp.pop %v3452
        %v3558 = vrcp.pop %v3456
        %v3559 = vrcp.pop %v3460
        %v3560 = vrcp.pop %v3464
        %v3561 = vrcp.pop %v3468
        %v3562 = vrcp.pop %v3472
        %v3563 = vrcp.pop %v3476
        %v3564 = vrcp.pop %v3480
        %v3565 = vrcp.pop %v3484
        %v3566 = vrcp.pop %v3488
        %v3567 = vrcp.pop %v3492
        %v3568 = vrcp.pop %v3496
        %v3569 = vrcp.pop %v3500
        %v3570 = vrcp.pop %v3504
        %v3571 = vrcp.pop %v3508
        %v3572 = vrcp.pop %v3512
        %v3573 = vrcp.pop %v3516
        %v3574 = vrcp.pop %v3520
        %v3575 = vrcp.pop %v3524
        %v3576 = vrcp.pop %v3528
        %v3577 = vmul.f32 %v3050, %v3529
        %v3578 = vmul.f32 %v3052, %v3529
        %v3579 = vmul.f32 %v3054, %v3529
        %v3580 = vmul.f32 %v3056, %v3530
        %v3581 = vmul.f32 %v3058, %v3530
        %v3582 = vmul.f32 %v3060, %v3530
        %v3583 = vmul.f32 %v3062, %v3531
        %v3584 = vmul.f32 %v3064, %v3531
        %v3585 = vmul.f32 %v3066, %v3531
        %v3586 = vmul.f32 %v3068, %v3532
        %v3587 = vmul.f32 %v3070, %v3532
        %v3588 = vmul.f32 %v3072, %v3532
        %v3589 = vmul.f32 %v3074, %v3533
        %v3590 = vmul.f32 %v3076, %v3533
        %v3591 = vmul.f32 %v3078, %v3533
        %v3592 = vmul.f32 %v3080, %v3534
        %v3593 = vmul.f32 %v3082, %v3534
        %v3594 = vmul.f32 %v3084, %v3534
        %v3595 = vmul.f32 %v3086, %v3535
        %v3596 = vmul.f32 %v3088, %v3535
        %v3597 = vmul.f32 %v3090, %v3535
        %v3598 = vmul.f32 %v3092, %v3536
        %v3599 = vmul.f32 %v3094, %v3536
        %v3600 = vmul.f32 %v3096, %v3536
        %v3601 = vmul.f32 %v3098, %v3537
        %v3602 = vmul.f32 %v3100, %v3537
        %v3603 = vmul.f32 %v3102, %v3537
        %v3604 = vmul.f32 %v3104, %v3538
        %v3605 = vmul.f32 %v3106, %v3538
        %v3606 = vmul.f32 %v3108, %v3538
        %v3607 = vmul.f32 %v3110, %v3539
        %v3608 = vmul.f32 %v3112, %v3539
        %v3609 = vmul.f32 %v3114, %v3539
        %v3610 = vmul.f32 %v3116, %v3540
        %v3611 = vmul.f32 %v3118, %v3540
        %v3612 = vmul.f32 %v3120, %v3540
        %v3613 = vmul.f32 %v3122, %v3541
        %v3614 = vmul.f32 %v3124, %v3541
        %v3615 = vmul.f32 %v3126, %v3541
        %v3616 = vmul.f32 %v3128, %v3542
        %v3617 = vmul.f32 %v3130, %v3542
        %v3618 = vmul.f32 %v3132, %v3542
        %v3619 = vmul.f32 %v3134, %v3543
        %v3620 = vmul.f32 %v3136, %v3543
        %v3621 = vmul.f32 %v3138, %v3543
        %v3622 = vmul.f32 %v3140, %v3544
        %v3623 = vmul.f32 %v3142, %v3544
        %v3624 = vmul.f32 %v3144, %v3544
        %v3625 = vmul.f32 %v3146, %v3545
        %v3626 = vmul.f32 %v3148, %v3545
        %v3627 = vmul.f32 %v3150, %v3545
        %v3628 = vmul.f32 %v3152, %v3546
        %v3629 = vmul.f32 %v3154, %v3546
        %v3630 = vmul.f32 %v3156, %v3546
        %v3631 = vmul.f32 %v3158, %v3547
        %v3632 = vmul.f32 %v3160, %v3547
        %v3633 = vmul.f32 %v3162, %v3547
        %v3634 = vmul.f32 %v3164, %v3548
        %v3635 = vmul.f32 %v3166, %v3548
        %v3636 = vmul.f32 %v3168, %v3548
        %v3637 = vmul.f32 %v3170, %v3549
        %v3638 = vmul.f32 %v3172, %v3549
        %v3639 = vmul.f32 %v3174, %v3549
        %v3640 = vmul.f32 %v3176, %v3550
        %v3641 = vmul.f32 %v3178, %v3550
        %v3642 = vmul.f32 %v3180, %v3550
        %v3643 = vmul.f32 %v3182, %v3551
        %v3644 = vmul.f32 %v3184, %v3551
        %v3645 = vmul.f32 %v3186, %v3551
        %v3646 = vmul.f32 %v3188, %v3552
        %v3647 = vmul.f32 %v3190, %v3552
        %v3648 = vmul.f32 %v3192, %v3552
        %v3649 = vmul.f32 %v3194, %v3553
        %v3650 = vmul.f32 %v3196, %v3553
        %v3651 = vmul.f32 %v3198, %v3553
        %v3652 = vmul.f32 %v3200, %v3554
        %v3653 = vmul.f32 %v3202, %v3554
        %v3654 = vmul.f32 %v3204, %v3554
        %v3655 = vmul.f32 %v3206, %v3555
        %v3656 = vmul.f32 %v3208, %v3555
        %v3657 = vmul.f32 %v3210, %v3555
        %v3658 = vmul.f32 %v3212, %v3556
        %v3659 = vmul.f32 %v3214, %v3556
        %v3660 = vmul.f32 %v3216, %v3556
        %v3661 = vmul.f32 %v3218, %v3557
        %v3662 = vmul.f32 %v3220, %v3557
        %v3663 = vmul.f32 %v3222, %v3557
        %v3664 = vmul.f32 %v3224, %v3558
        %v3665 = vmul.f32 %v3226, %v3558
        %v3666 = vmul.f32 %v3228, %v3558
        %v3667 = vmul.f32 %v3230, %v3559
        %v3668 = vmul.f32 %v3232, %v3559
        %v3669 = vmul.f32 %v3234, %v3559
        %v3670 = vmul.f32 %v3236, %v3560
        %v3671 = vmul.f32 %v3238, %v3560
        %v3672 = vmul.f32 %v3240, %v3560
        %v3673 = vmul.f32 %v3242, %v3561
        %v3674 = vmul.f32 %v3244, %v3561
        %v3675 = vmul.f32 %v3246, %v3561
        %v3676 = vmul.f32 %v3248, %v3562
        %v3677 = vmul.f32 %v3250, %v3562
        %v3678 = vmul.f32 %v3252, %v3562
        %v3679 = vmul.f32 %v3254, %v3563
        %v3680 = vmul.f32 %v3256, %v3563
        %v3681 = vmul.f32 %v3258, %v3563
        %v3682 = vmul.f32 %v3260, %v3564
        %v3683 = vmul.f32 %v3262, %v3564
        %v3684 = vmul.f32 %v3264, %v3564
        %v3685 = vmul.f32 %v3266, %v3565
        %v3686 = vmul.f32 %v3268, %v3565
        %v3687 = vmul.f32 %v3270, %v3565
        %v3688 = vmul.f32 %v3272, %v3566
        %v3689 = vmul.f32 %v3274, %v3566
        %v3690 = vmul.f32 %v3276, %v3566
        %v3691 = vmul.f32 %v3278, %v3567
        %v3692 = vmul.f32 %v3280, %v3567
        %v3693 = vmul.f32 %v3282, %v3567
        %v3694 = vmul.f32 %v3284, %v3568
        %v3695 = vmul.f32 %v3286, %v3568
        %v3696 = vmul.f32 %v3288, %v3568
        %v3697 = vmul.f32 %v3290, %v3569
        %v3698 = vmul.f32 %v3292, %v3569
        %v3699 = vmul.f32 %v3294, %v3569
        %v3700 = vmul.f32 %v3296, %v3570
        %v3701 = vmul.f32 %v3298, %v3570
        %v3702 = vmul.f32 %v3300, %v3570
        %v3703 = vmul.f32 %v3302, %v3571
        %v3704 = vmul.f32 %v3304, %v3571
        %v3705 = vmul.f32 %v3306, %v3571
        %v3706 = vmul.f32 %v3308, %v3572
        %v3707 = vmul.f32 %v3310, %v3572
        %v3708 = vmul.f32 %v3312, %v3572
        %v3709 = vmul.f32 %v3314, %v3573
        %v3710 = vmul.f32 %v3316, %v3573
        %v3711 = vmul.f32 %v3318, %v3573
        %v3712 = vmul.f32 %v3320, %v3574
        %v3713 = vmul.f32 %v3322, %v3574
        %v3714 = vmul.f32 %v3324, %v3574
        %v3715 = vmul.f32 %v3326, %v3575
        %v3716 = vmul.f32 %v3328, %v3575
        %v3717 = vmul.f32 %v3330, %v3575
        %v3718 = vmul.f32 %v3332, %v3576
        %v3719 = vmul.f32 %v3334, %v3576
        %v3720 = vmul.f32 %v3336, %v3576
        %s3721 = scalar_lea.vmem %s255, 1152 [#allocation7]
        %v3722 = vld [vmem:[%s3721] sm:$0xff]
        %v3723 = vld [vmem:[%s3721 + $0x8] sm:$0xff]
        %v3724 = vld [vmem:[%s3721 + $0x10] sm:$0xff]
        %v3725 = vld [vmem:[%s3721 + $0x18] sm:$0xff]
        %v3726 = vld [vmem:[%s3721 + $0x20] sm:$0xff]
        %v3727 = vld [vmem:[%s3721 + $0x28] sm:$0xff]
        %v3728 = vld [vmem:[%s3721 + $0x30] sm:$0xff]
        %v3729 = vld [vmem:[%s3721 + $0x38] sm:$0xff]
        %v3730 = vld [vmem:[%s3721 + $0x40] sm:$0xff]
        %v3731 = vld [vmem:[%s3721 + $0x48] sm:$0xff]
        %v3732 = vld [vmem:[%s3721 + $0x50] sm:$0xff]
        %v3733 = vld [vmem:[%s3721 + $0x58] sm:$0xff]
        %v3734 = vld [vmem:[%s3721 + $0x60] sm:$0xff]
        %v3735 = vld [vmem:[%s3721 + $0x68] sm:$0xff]
        %v3736 = vld [vmem:[%s3721 + $0x70] sm:$0xff]
        %v3737 = vld [vmem:[%s3721 + $0x78] sm:$0xff]
        %v3738 = vld [vmem:[%s3721 + $0x80] sm:$0xff]
        %v3739 = vld [vmem:[%s3721 + $0x88] sm:$0xff]
        %v3740 = vld [vmem:[%s3721 + $0x90] sm:$0xff]
        %v3741 = vld [vmem:[%s3721 + $0x98] sm:$0xff]
        %v3742 = vld [vmem:[%s3721 + $0xa0] sm:$0xff]
        %v3743 = vld [vmem:[%s3721 + $0xa8] sm:$0xff]
        %v3744 = vld [vmem:[%s3721 + $0xb0] sm:$0xff]
        %v3745 = vld [vmem:[%s3721 + $0xb8] sm:$0xff]
        %v3746 = vld [vmem:[%s3721 + $0xc0] sm:$0xff]
        %v3747 = vld [vmem:[%s3721 + $0xc8] sm:$0xff]
        %v3748 = vld [vmem:[%s3721 + $0xd0] sm:$0xff]
        %v3749 = vld [vmem:[%s3721 + $0xd8] sm:$0xff]
        %v3750 = vld [vmem:[%s3721 + $0xe0] sm:$0xff]
        %v3751 = vld [vmem:[%s3721 + $0xe8] sm:$0xff]
        %v3752 = vld [vmem:[%s3721 + $0xf0] sm:$0xff]
        %v3753 = vld [vmem:[%s3721 + $0xf8] sm:$0xff]
        %v3754 = vld [vmem:[%s3721 + $0x100] sm:$0xff]
        %v3755 = vld [vmem:[%s3721 + $0x108] sm:$0xff]
        %v3756 = vld [vmem:[%s3721 + $0x110] sm:$0xff]
        %v3757 = vld [vmem:[%s3721 + $0x118] sm:$0xff]
        %v3758 = vld [vmem:[%s3721 + $0x120] sm:$0xff]
        %v3759 = vld [vmem:[%s3721 + $0x128] sm:$0xff]
        %v3760 = vld [vmem:[%s3721 + $0x130] sm:$0xff]
        %v3761 = vld [vmem:[%s3721 + $0x138] sm:$0xff]
        %v3762 = vld [vmem:[%s3721 + $0x140] sm:$0xff]
        %v3763 = vld [vmem:[%s3721 + $0x148] sm:$0xff]
        %v3764 = vld [vmem:[%s3721 + $0x150] sm:$0xff]
        %v3765 = vld [vmem:[%s3721 + $0x158] sm:$0xff]
        %v3766 = vld [vmem:[%s3721 + $0x160] sm:$0xff]
        %v3767 = vld [vmem:[%s3721 + $0x168] sm:$0xff]
        %v3768 = vld [vmem:[%s3721 + $0x170] sm:$0xff]
        %v3769 = vld [vmem:[%s3721 + $0x178] sm:$0xff]
        %v3770 = vld [vmem:[%s3721 + $0x180] sm:$0xff]
        %v3771 = vld [vmem:[%s3721 + $0x188] sm:$0xff]
        %v3772 = vld [vmem:[%s3721 + $0x190] sm:$0xff]
        %v3773 = vld [vmem:[%s3721 + $0x198] sm:$0xff]
        %v3774 = vld [vmem:[%s3721 + $0x1a0] sm:$0xff]
        %v3775 = vld [vmem:[%s3721 + $0x1a8] sm:$0xff]
        %v3776 = vld [vmem:[%s3721 + $0x1b0] sm:$0xff]
        %v3777 = vld [vmem:[%s3721 + $0x1b8] sm:$0xff]
        %v3778 = vld [vmem:[%s3721 + $0x1c0] sm:$0xff]
        %v3779 = vld [vmem:[%s3721 + $0x1c8] sm:$0xff]
        %v3780 = vld [vmem:[%s3721 + $0x1d0] sm:$0xff]
        %v3781 = vld [vmem:[%s3721 + $0x1d8] sm:$0xff]
        %v3782 = vld [vmem:[%s3721 + $0x1e0] sm:$0xff]
        %v3783 = vld [vmem:[%s3721 + $0x1e8] sm:$0xff]
        %v3784 = vld [vmem:[%s3721 + $0x1f0] sm:$0xff]
        %v3785 = vld [vmem:[%s3721 + $0x1f8] sm:$0xff]
        %v3786 = vld [vmem:[%s3721 + $0x200] sm:$0xff]
        %v3787 = vld [vmem:[%s3721 + $0x208] sm:$0xff]
        %v3788 = vld [vmem:[%s3721 + $0x210] sm:$0xff]
        %v3789 = vld [vmem:[%s3721 + $0x218] sm:$0xff]
        %v3790 = vld [vmem:[%s3721 + $0x220] sm:$0xff]
        %v3791 = vld [vmem:[%s3721 + $0x228] sm:$0xff]
        %v3792 = vld [vmem:[%s3721 + $0x230] sm:$0xff]
        %v3793 = vld [vmem:[%s3721 + $0x238] sm:$0xff]
        %v3794 = vld [vmem:[%s3721 + $0x240] sm:$0xff]
        %v3795 = vld [vmem:[%s3721 + $0x248] sm:$0xff]
        %v3796 = vld [vmem:[%s3721 + $0x250] sm:$0xff]
        %v3797 = vld [vmem:[%s3721 + $0x258] sm:$0xff]
        %v3798 = vld [vmem:[%s3721 + $0x260] sm:$0xff]
        %v3799 = vld [vmem:[%s3721 + $0x268] sm:$0xff]
        %v3800 = vld [vmem:[%s3721 + $0x270] sm:$0xff]
        %v3801 = vld [vmem:[%s3721 + $0x278] sm:$0xff]
        %v3802 = vld [vmem:[%s3721 + $0x280] sm:$0xff]
        %v3803 = vld [vmem:[%s3721 + $0x288] sm:$0xff]
        %v3804 = vld [vmem:[%s3721 + $0x290] sm:$0xff]
        %v3805 = vld [vmem:[%s3721 + $0x298] sm:$0xff]
        %v3806 = vld [vmem:[%s3721 + $0x2a0] sm:$0xff]
        %v3807 = vld [vmem:[%s3721 + $0x2a8] sm:$0xff]
        %v3808 = vld [vmem:[%s3721 + $0x2b0] sm:$0xff]
        %v3809 = vld [vmem:[%s3721 + $0x2b8] sm:$0xff]
        %v3810 = vld [vmem:[%s3721 + $0x2c0] sm:$0xff]
        %v3811 = vld [vmem:[%s3721 + $0x2c8] sm:$0xff]
        %v3812 = vld [vmem:[%s3721 + $0x2d0] sm:$0xff]
        %v3813 = vld [vmem:[%s3721 + $0x2d8] sm:$0xff]
        %v3814 = vld [vmem:[%s3721 + $0x2e0] sm:$0xff]
        %v3815 = vld [vmem:[%s3721 + $0x2e8] sm:$0xff]
        %v3816 = vld [vmem:[%s3721 + $0x2f0] sm:$0xff]
        %v3817 = vld [vmem:[%s3721 + $0x2f8] sm:$0xff]
        %v3818 = vld [vmem:[%s3721 + $0x300] sm:$0xff]
        %v3819 = vld [vmem:[%s3721 + $0x308] sm:$0xff]
        %v3820 = vld [vmem:[%s3721 + $0x310] sm:$0xff]
        %v3821 = vld [vmem:[%s3721 + $0x318] sm:$0xff]
        %v3822 = vld [vmem:[%s3721 + $0x320] sm:$0xff]
        %v3823 = vld [vmem:[%s3721 + $0x328] sm:$0xff]
        %v3824 = vld [vmem:[%s3721 + $0x330] sm:$0xff]
        %v3825 = vld [vmem:[%s3721 + $0x338] sm:$0xff]
        %v3826 = vld [vmem:[%s3721 + $0x340] sm:$0xff]
        %v3827 = vld [vmem:[%s3721 + $0x348] sm:$0xff]
        %v3828 = vld [vmem:[%s3721 + $0x350] sm:$0xff]
        %v3829 = vld [vmem:[%s3721 + $0x358] sm:$0xff]
        %v3830 = vld [vmem:[%s3721 + $0x360] sm:$0xff]
        %v3831 = vld [vmem:[%s3721 + $0x368] sm:$0xff]
        %v3832 = vld [vmem:[%s3721 + $0x370] sm:$0xff]
        %v3833 = vld [vmem:[%s3721 + $0x378] sm:$0xff]
        %v3834 = vld [vmem:[%s3721 + $0x380] sm:$0xff]
        %v3835 = vld [vmem:[%s3721 + $0x388] sm:$0xff]
        %v3836 = vld [vmem:[%s3721 + $0x390] sm:$0xff]
        %v3837 = vld [vmem:[%s3721 + $0x398] sm:$0xff]
        %v3838 = vld [vmem:[%s3721 + $0x3a0] sm:$0xff]
        %v3839 = vld [vmem:[%s3721 + $0x3a8] sm:$0xff]
        %v3840 = vld [vmem:[%s3721 + $0x3b0] sm:$0xff]
        %v3841 = vld [vmem:[%s3721 + $0x3b8] sm:$0xff]
        %v3842 = vld [vmem:[%s3721 + $0x3c0] sm:$0xff]
        %v3843 = vld [vmem:[%s3721 + $0x3c8] sm:$0xff]
        %v3844 = vld [vmem:[%s3721 + $0x3d0] sm:$0xff]
        %v3845 = vld [vmem:[%s3721 + $0x3d8] sm:$0xff]
        %v3846 = vld [vmem:[%s3721 + $0x3e0] sm:$0xff]
        %v3847 = vld [vmem:[%s3721 + $0x3e8] sm:$0xff]
        %v3848 = vld [vmem:[%s3721 + $0x3f0] sm:$0xff]
        %v3849 = vld [vmem:[%s3721 + $0x3f8] sm:$0xff]
        %v3850 = vld [vmem:[%s3721 + $0x400] sm:$0xff]
        %v3851 = vld [vmem:[%s3721 + $0x408] sm:$0xff]
        %v3852 = vld [vmem:[%s3721 + $0x410] sm:$0xff]
        %v3853 = vld [vmem:[%s3721 + $0x418] sm:$0xff]
        %v3854 = vld [vmem:[%s3721 + $0x420] sm:$0xff]
        %v3855 = vld [vmem:[%s3721 + $0x428] sm:$0xff]
        %v3856 = vld [vmem:[%s3721 + $0x430] sm:$0xff]
        %v3857 = vld [vmem:[%s3721 + $0x438] sm:$0xff]
        %v3858 = vld [vmem:[%s3721 + $0x440] sm:$0xff]
        %v3859 = vld [vmem:[%s3721 + $0x448] sm:$0xff]
        %v3860 = vld [vmem:[%s3721 + $0x450] sm:$0xff]
        %v3861 = vld [vmem:[%s3721 + $0x458] sm:$0xff]
        %v3862 = vld [vmem:[%s3721 + $0x460] sm:$0xff]
        %v3863 = vld [vmem:[%s3721 + $0x468] sm:$0xff]
        %v3864 = vld [vmem:[%s3721 + $0x470] sm:$0xff]
        %v3865 = vld [vmem:[%s3721 + $0x478] sm:$0xff]
        %v3866 = vmul.f32 %v3577, %v3722
        %v3867 = vmul.f32 %v3578, %v3723
        %v3868 = vmul.f32 %v3579, %v3724
        %v3869 = vmul.f32 %v3580, %v3725
        %v3870 = vmul.f32 %v3581, %v3726
        %v3871 = vmul.f32 %v3582, %v3727
        %v3872 = vmul.f32 %v3583, %v3728
        %v3873 = vmul.f32 %v3584, %v3729
        %v3874 = vmul.f32 %v3585, %v3730
        %v3875 = vmul.f32 %v3586, %v3731
        %v3876 = vmul.f32 %v3587, %v3732
        %v3877 = vmul.f32 %v3588, %v3733
        %v3878 = vmul.f32 %v3589, %v3734
        %v3879 = vmul.f32 %v3590, %v3735
        %v3880 = vmul.f32 %v3591, %v3736
        %v3881 = vmul.f32 %v3592, %v3737
        %v3882 = vmul.f32 %v3593, %v3738
        %v3883 = vmul.f32 %v3594, %v3739
        %v3884 = vmul.f32 %v3595, %v3740
        %v3885 = vmul.f32 %v3596, %v3741
        %v3886 = vmul.f32 %v3597, %v3742
        %v3887 = vmul.f32 %v3598, %v3743
        %v3888 = vmul.f32 %v3599, %v3744
        %v3889 = vmul.f32 %v3600, %v3745
        %v3890 = vmul.f32 %v3601, %v3746
        %v3891 = vmul.f32 %v3602, %v3747
        %v3892 = vmul.f32 %v3603, %v3748
        %v3893 = vmul.f32 %v3604, %v3749
        %v3894 = vmul.f32 %v3605, %v3750
        %v3895 = vmul.f32 %v3606, %v3751
        %v3896 = vmul.f32 %v3607, %v3752
        %v3897 = vmul.f32 %v3608, %v3753
        %v3898 = vmul.f32 %v3609, %v3754
        %v3899 = vmul.f32 %v3610, %v3755
        %v3900 = vmul.f32 %v3611, %v3756
        %v3901 = vmul.f32 %v3612, %v3757
        %v3902 = vmul.f32 %v3613, %v3758
        %v3903 = vmul.f32 %v3614, %v3759
        %v3904 = vmul.f32 %v3615, %v3760
        %v3905 = vmul.f32 %v3616, %v3761
        %v3906 = vmul.f32 %v3617, %v3762
        %v3907 = vmul.f32 %v3618, %v3763
        %v3908 = vmul.f32 %v3619, %v3764
        %v3909 = vmul.f32 %v3620, %v3765
        %v3910 = vmul.f32 %v3621, %v3766
        %v3911 = vmul.f32 %v3622, %v3767
        %v3912 = vmul.f32 %v3623, %v3768
        %v3913 = vmul.f32 %v3624, %v3769
        %v3914 = vmul.f32 %v3625, %v3770
        %v3915 = vmul.f32 %v3626, %v3771
        %v3916 = vmul.f32 %v3627, %v3772
        %v3917 = vmul.f32 %v3628, %v3773
        %v3918 = vmul.f32 %v3629, %v3774
        %v3919 = vmul.f32 %v3630, %v3775
        %v3920 = vmul.f32 %v3631, %v3776
        %v3921 = vmul.f32 %v3632, %v3777
        %v3922 = vmul.f32 %v3633, %v3778
        %v3923 = vmul.f32 %v3634, %v3779
        %v3924 = vmul.f32 %v3635, %v3780
        %v3925 = vmul.f32 %v3636, %v3781
        %v3926 = vmul.f32 %v3637, %v3782
        %v3927 = vmul.f32 %v3638, %v3783
        %v3928 = vmul.f32 %v3639, %v3784
        %v3929 = vmul.f32 %v3640, %v3785
        %v3930 = vmul.f32 %v3641, %v3786
        %v3931 = vmul.f32 %v3642, %v3787
        %v3932 = vmul.f32 %v3643, %v3788
        %v3933 = vmul.f32 %v3644, %v3789
        %v3934 = vmul.f32 %v3645, %v3790
        %v3935 = vmul.f32 %v3646, %v3791
        %v3936 = vmul.f32 %v3647, %v3792
        %v3937 = vmul.f32 %v3648, %v3793
        %v3938 = vmul.f32 %v3649, %v3794
        %v3939 = vmul.f32 %v3650, %v3795
        %v3940 = vmul.f32 %v3651, %v3796
        %v3941 = vmul.f32 %v3652, %v3797
        %v3942 = vmul.f32 %v3653, %v3798
        %v3943 = vmul.f32 %v3654, %v3799
        %v3944 = vmul.f32 %v3655, %v3800
        %v3945 = vmul.f32 %v3656, %v3801
        %v3946 = vmul.f32 %v3657, %v3802
        %v3947 = vmul.f32 %v3658, %v3803
        %v3948 = vmul.f32 %v3659, %v3804
        %v3949 = vmul.f32 %v3660, %v3805
        %v3950 = vmul.f32 %v3661, %v3806
        %v3951 = vmul.f32 %v3662, %v3807
        %v3952 = vmul.f32 %v3663, %v3808
        %v3953 = vmul.f32 %v3664, %v3809
        %v3954 = vmul.f32 %v3665, %v3810
        %v3955 = vmul.f32 %v3666, %v3811
        %v3956 = vmul.f32 %v3667, %v3812
        %v3957 = vmul.f32 %v3668, %v3813
        %v3958 = vmul.f32 %v3669, %v3814
        %v3959 = vmul.f32 %v3670, %v3815
        %v3960 = vmul.f32 %v3671, %v3816
        %v3961 = vmul.f32 %v3672, %v3817
        %v3962 = vmul.f32 %v3673, %v3818
        %v3963 = vmul.f32 %v3674, %v3819
        %v3964 = vmul.f32 %v3675, %v3820
        %v3965 = vmul.f32 %v3676, %v3821
        %v3966 = vmul.f32 %v3677, %v3822
        %v3967 = vmul.f32 %v3678, %v3823
        %v3968 = vmul.f32 %v3679, %v3824
        %v3969 = vmul.f32 %v3680, %v3825
        %v3970 = vmul.f32 %v3681, %v3826
        %v3971 = vmul.f32 %v3682, %v3827
        %v3972 = vmul.f32 %v3683, %v3828
        %v3973 = vmul.f32 %v3684, %v3829
        %v3974 = vmul.f32 %v3685, %v3830
        %v3975 = vmul.f32 %v3686, %v3831
        %v3976 = vmul.f32 %v3687, %v3832
        %v3977 = vmul.f32 %v3688, %v3833
        %v3978 = vmul.f32 %v3689, %v3834
        %v3979 = vmul.f32 %v3690, %v3835
        %v3980 = vmul.f32 %v3691, %v3836
        %v3981 = vmul.f32 %v3692, %v3837
        %v3982 = vmul.f32 %v3693, %v3838
        %v3983 = vmul.f32 %v3694, %v3839
        %v3984 = vmul.f32 %v3695, %v3840
        %v3985 = vmul.f32 %v3696, %v3841
        %v3986 = vmul.f32 %v3697, %v3842
        %v3987 = vmul.f32 %v3698, %v3843
        %v3988 = vmul.f32 %v3699, %v3844
        %v3989 = vmul.f32 %v3700, %v3845
        %v3990 = vmul.f32 %v3701, %v3846
        %v3991 = vmul.f32 %v3702, %v3847
        %v3992 = vmul.f32 %v3703, %v3848
        %v3993 = vmul.f32 %v3704, %v3849
        %v3994 = vmul.f32 %v3705, %v3850
        %v3995 = vmul.f32 %v3706, %v3851
        %v3996 = vmul.f32 %v3707, %v3852
        %v3997 = vmul.f32 %v3708, %v3853
        %v3998 = vmul.f32 %v3709, %v3854
        %v3999 = vmul.f32 %v3710, %v3855
        %v4000 = vmul.f32 %v3711, %v3856
        %v4001 = vmul.f32 %v3712, %v3857
        %v4002 = vmul.f32 %v3713, %v3858
        %v4003 = vmul.f32 %v3714, %v3859
        %v4004 = vmul.f32 %v3715, %v3860
        %v4005 = vmul.f32 %v3716, %v3861
        %v4006 = vmul.f32 %v3717, %v3862
        %v4007 = vmul.f32 %v3718, %v3863
        %v4008 = vmul.f32 %v3719, %v3864
        %v4009 = vmul.f32 %v3720, %v3865
        %v4010 = vpack.c.bf16 %v3869, %v3866
        %v4011 = vpack.c.bf16 %v3870, %v3867
        %v4012 = vpack.c.bf16 %v3871, %v3868
        %v4013 = vpack.c.bf16 %v3875, %v3872
        %v4014 = vpack.c.bf16 %v3876, %v3873
        %v4015 = vpack.c.bf16 %v3877, %v3874
        %v4016 = vpack.c.bf16 %v3881, %v3878
        %v4017 = vpack.c.bf16 %v3882, %v3879
        %v4018 = vpack.c.bf16 %v3883, %v3880
        %v4019 = vpack.c.bf16 %v3887, %v3884
        %v4020 = vpack.c.bf16 %v3888, %v3885
        %v4021 = vpack.c.bf16 %v3889, %v3886
        %v4022 = vpack.c.bf16 %v3893, %v3890
        %v4023 = vpack.c.bf16 %v3894, %v3891
        %v4024 = vpack.c.bf16 %v3895, %v3892
        %v4025 = vpack.c.bf16 %v3899, %v3896
        %v4026 = vpack.c.bf16 %v3900, %v3897
        %v4027 = vpack.c.bf16 %v3901, %v3898
        %v4028 = vpack.c.bf16 %v3905, %v3902
        %v4029 = vpack.c.bf16 %v3906, %v3903
        %v4030 = vpack.c.bf16 %v3907, %v3904
        %v4031 = vpack.c.bf16 %v3911, %v3908
        %v4032 = vpack.c.bf16 %v3912, %v3909
        %v4033 = vpack.c.bf16 %v3913, %v3910
        %v4034 = vpack.c.bf16 %v3917, %v3914
        %v4035 = vpack.c.bf16 %v3918, %v3915
        %v4036 = vpack.c.bf16 %v3919, %v3916
        %v4037 = vpack.c.bf16 %v3923, %v3920
        %v4038 = vpack.c.bf16 %v3924, %v3921
        %v4039 = vpack.c.bf16 %v3925, %v3922
        %v4040 = vpack.c.bf16 %v3929, %v3926
        %v4041 = vpack.c.bf16 %v3930, %v3927
        %v4042 = vpack.c.bf16 %v3931, %v3928
        %v4043 = vpack.c.bf16 %v3935, %v3932
        %v4044 = vpack.c.bf16 %v3936, %v3933
        %v4045 = vpack.c.bf16 %v3937, %v3934
        %v4046 = vpack.c.bf16 %v3941, %v3938
        %v4047 = vpack.c.bf16 %v3942, %v3939
        %v4048 = vpack.c.bf16 %v3943, %v3940
        %v4049 = vpack.c.bf16 %v3947, %v3944
        %v4050 = vpack.c.bf16 %v3948, %v3945
        %v4051 = vpack.c.bf16 %v3949, %v3946
        %v4052 = vpack.c.bf16 %v3953, %v3950
        %v4053 = vpack.c.bf16 %v3954, %v3951
        %v4054 = vpack.c.bf16 %v3955, %v3952
        %v4055 = vpack.c.bf16 %v3959, %v3956
        %v4056 = vpack.c.bf16 %v3960, %v3957
        %v4057 = vpack.c.bf16 %v3961, %v3958
        %v4058 = vpack.c.bf16 %v3965, %v3962
        %v4059 = vpack.c.bf16 %v3966, %v3963
        %v4060 = vpack.c.bf16 %v3967, %v3964
        %v4061 = vpack.c.bf16 %v3971, %v3968
        %v4062 = vpack.c.bf16 %v3972, %v3969
        %v4063 = vpack.c.bf16 %v3973, %v3970
        %v4064 = vpack.c.bf16 %v3977, %v3974
        %v4065 = vpack.c.bf16 %v3978, %v3975
        %v4066 = vpack.c.bf16 %v3979, %v3976
        %v4067 = vpack.c.bf16 %v3983, %v3980
        %v4068 = vpack.c.bf16 %v3984, %v3981
        %v4069 = vpack.c.bf16 %v3985, %v3982
        %v4070 = vpack.c.bf16 %v3989, %v3986
        %v4071 = vpack.c.bf16 %v3990, %v3987
        %v4072 = vpack.c.bf16 %v3991, %v3988
        %v4073 = vpack.c.bf16 %v3995, %v3992
        %v4074 = vpack.c.bf16 %v3996, %v3993
        %v4075 = vpack.c.bf16 %v3997, %v3994
        %v4076 = vpack.c.bf16 %v4001, %v3998
        %v4077 = vpack.c.bf16 %v4002, %v3999
        %v4078 = vpack.c.bf16 %v4003, %v4000
        %v4079 = vpack.c.bf16 %v4007, %v4004
        %v4080 = vpack.c.bf16 %v4008, %v4005
        %v4081 = vpack.c.bf16 %v4009, %v4006
        %s4082 = scalar_lea.vmem %s299, 384
        %v4083 = vld [vmem:[%s4082] sm:$0xff]
        %v4084 = vld [vmem:[%s4082 + $0x8] sm:$0xff]
        %v4085 = vld [vmem:[%s4082 + $0x10] sm:$0xff]
        %v4086 = vld [vmem:[%s4082 + $0x18] sm:$0xff]
        %v4087 = vld [vmem:[%s4082 + $0x20] sm:$0xff]
        %v4088 = vld [vmem:[%s4082 + $0x28] sm:$0xff]
        %v4089 = vld [vmem:[%s4082 + $0x30] sm:$0xff]
        %v4090 = vld [vmem:[%s4082 + $0x38] sm:$0xff]
        %v4091 = vld [vmem:[%s4082 + $0x40] sm:$0xff]
        %v4092 = vld [vmem:[%s4082 + $0x48] sm:$0xff]
        %v4093 = vld [vmem:[%s4082 + $0x50] sm:$0xff]
        %v4094 = vld [vmem:[%s4082 + $0x58] sm:$0xff]
        %v4095 = vld [vmem:[%s4082 + $0x60] sm:$0xff]
        %v4096 = vld [vmem:[%s4082 + $0x68] sm:$0xff]
        %v4097 = vld [vmem:[%s4082 + $0x70] sm:$0xff]
        %v4098 = vld [vmem:[%s4082 + $0x78] sm:$0xff]
        %v4099 = vld [vmem:[%s4082 + $0x80] sm:$0xff]
        %v4100 = vld [vmem:[%s4082 + $0x88] sm:$0xff]
        %v4101 = vld [vmem:[%s4082 + $0x90] sm:$0xff]
        %v4102 = vld [vmem:[%s4082 + $0x98] sm:$0xff]
        %v4103 = vld [vmem:[%s4082 + $0xa0] sm:$0xff]
        %v4104 = vld [vmem:[%s4082 + $0xa8] sm:$0xff]
        %v4105 = vld [vmem:[%s4082 + $0xb0] sm:$0xff]
        %v4106 = vld [vmem:[%s4082 + $0xb8] sm:$0xff]
        %v4107 = vld [vmem:[%s4082 + $0xc0] sm:$0xff]
        %v4108 = vld [vmem:[%s4082 + $0xc8] sm:$0xff]
        %v4109 = vld [vmem:[%s4082 + $0xd0] sm:$0xff]
        %v4110 = vld [vmem:[%s4082 + $0xd8] sm:$0xff]
        %v4111 = vld [vmem:[%s4082 + $0xe0] sm:$0xff]
        %v4112 = vld [vmem:[%s4082 + $0xe8] sm:$0xff]
        %v4113 = vld [vmem:[%s4082 + $0xf0] sm:$0xff]
        %v4114 = vld [vmem:[%s4082 + $0xf8] sm:$0xff]
        %v4115 = vld [vmem:[%s4082 + $0x100] sm:$0xff]
        %v4116 = vld [vmem:[%s4082 + $0x108] sm:$0xff]
        %v4117 = vld [vmem:[%s4082 + $0x110] sm:$0xff]
        %v4118 = vld [vmem:[%s4082 + $0x118] sm:$0xff]
        %v4119 = vld [vmem:[%s4082 + $0x120] sm:$0xff]
        %v4120 = vld [vmem:[%s4082 + $0x128] sm:$0xff]
        %v4121 = vld [vmem:[%s4082 + $0x130] sm:$0xff]
        %v4122 = vld [vmem:[%s4082 + $0x138] sm:$0xff]
        %v4123 = vld [vmem:[%s4082 + $0x140] sm:$0xff]
        %v4124 = vld [vmem:[%s4082 + $0x148] sm:$0xff]
        %v4125 = vld [vmem:[%s4082 + $0x150] sm:$0xff]
        %v4126 = vld [vmem:[%s4082 + $0x158] sm:$0xff]
        %v4127 = vld [vmem:[%s4082 + $0x160] sm:$0xff]
        %v4128 = vld [vmem:[%s4082 + $0x168] sm:$0xff]
        %v4129 = vld [vmem:[%s4082 + $0x170] sm:$0xff]
        %v4130 = vld [vmem:[%s4082 + $0x178] sm:$0xff]
        %v4131 = vpack.c.bf16 %v4084, %v4083
        %v4132 = vpack.c.bf16 %v4086, %v4085
        %v4133 = vpack.c.bf16 %v4088, %v4087
        %v4134 = vpack.c.bf16 %v4090, %v4089
        %v4135 = vpack.c.bf16 %v4092, %v4091
        %v4136 = vpack.c.bf16 %v4094, %v4093
        %v4137 = vpack.c.bf16 %v4096, %v4095
        %v4138 = vpack.c.bf16 %v4098, %v4097
        %v4139 = vpack.c.bf16 %v4100, %v4099
        %v4140 = vpack.c.bf16 %v4102, %v4101
        %v4141 = vpack.c.bf16 %v4104, %v4103
        %v4142 = vpack.c.bf16 %v4106, %v4105
        %v4143 = vpack.c.bf16 %v4108, %v4107
        %v4144 = vpack.c.bf16 %v4110, %v4109
        %v4145 = vpack.c.bf16 %v4112, %v4111
        %v4146 = vpack.c.bf16 %v4114, %v4113
        %v4147 = vpack.c.bf16 %v4116, %v4115
        %v4148 = vpack.c.bf16 %v4118, %v4117
        %v4149 = vpack.c.bf16 %v4120, %v4119
        %v4150 = vpack.c.bf16 %v4122, %v4121
        %v4151 = vpack.c.bf16 %v4124, %v4123
        %v4152 = vpack.c.bf16 %v4126, %v4125
        %v4153 = vpack.c.bf16 %v4128, %v4127
        %v4154 = vpack.c.bf16 %v4130, %v4129
        %4155 = vmatpush.bf16.msra.mxu0 %v4138
        %4156 = vmatpush.bf16.msra.mxu0 %v4137
        %4157 = vmatpush.bf16.msra.mxu0 %v4136
        %4158 = vmatpush.bf16.msra.mxu0 %v4135
        %4159 = vmatpush.bf16.msra.mxu0 %v4134
        %4160 = vmatpush.bf16.msra.mxu0 %v4133
        %4161 = vmatpush.bf16.msra.mxu0 %v4132
        %4162 = vmatpush.bf16.msra.mxu0 %v4131
        %4163 = vmatmul.bf16.gmra.mxu0 %v4010
        %v4164 = vpop.f32.mrf.mxu0
        %v4165 = vadd.f32 0.0, %v4164
        %v4166 = vpop.f32.mrf.mxu0
        %v4167 = vadd.f32 0.0, %v4166
        %4168 = vmatmul.bf16.gmra.mxu0 %v4013
        %v4169 = vpop.f32.mrf.mxu0
        %v4170 = vadd.f32 0.0, %v4169
        %v4171 = vpop.f32.mrf.mxu0
        %v4172 = vadd.f32 0.0, %v4171
        %4173 = vmatmul.bf16.gmra.mxu0 %v4016
        %v4174 = vpop.f32.mrf.mxu0
        %v4175 = vadd.f32 0.0, %v4174
        %v4176 = vpop.f32.mrf.mxu0
        %v4177 = vadd.f32 0.0, %v4176
        %4178 = vmatmul.bf16.gmra.mxu0 %v4019
        %v4179 = vpop.f32.mrf.mxu0
        %v4180 = vadd.f32 0.0, %v4179
        %v4181 = vpop.f32.mrf.mxu0
        %v4182 = vadd.f32 0.0, %v4181
        %4183 = vmatmul.bf16.gmra.mxu0 %v4022
        %v4184 = vpop.f32.mrf.mxu0
        %v4185 = vadd.f32 0.0, %v4184
        %v4186 = vpop.f32.mrf.mxu0
        %v4187 = vadd.f32 0.0, %v4186
        %4188 = vmatmul.bf16.gmra.mxu0 %v4025
        %v4189 = vpop.f32.mrf.mxu0
        %v4190 = vadd.f32 0.0, %v4189
        %v4191 = vpop.f32.mrf.mxu0
        %v4192 = vadd.f32 0.0, %v4191
        %4193 = vmatmul.bf16.gmra.mxu0 %v4028
        %v4194 = vpop.f32.mrf.mxu0
        %v4195 = vadd.f32 0.0, %v4194
        %v4196 = vpop.f32.mrf.mxu0
        %v4197 = vadd.f32 0.0, %v4196
        %4198 = vmatmul.bf16.gmra.mxu0 %v4031
        %v4199 = vpop.f32.mrf.mxu0
        %v4200 = vadd.f32 0.0, %v4199
        %v4201 = vpop.f32.mrf.mxu0
        %v4202 = vadd.f32 0.0, %v4201
        %4203 = vmatmul.bf16.gmra.mxu0 %v4034
        %v4204 = vpop.f32.mrf.mxu0
        %v4205 = vadd.f32 0.0, %v4204
        %v4206 = vpop.f32.mrf.mxu0
        %v4207 = vadd.f32 0.0, %v4206
        %4208 = vmatmul.bf16.gmra.mxu0 %v4037
        %v4209 = vpop.f32.mrf.mxu0
        %v4210 = vadd.f32 0.0, %v4209
        %v4211 = vpop.f32.mrf.mxu0
        %v4212 = vadd.f32 0.0, %v4211
        %4213 = vmatmul.bf16.gmra.mxu0 %v4040
        %v4214 = vpop.f32.mrf.mxu0
        %v4215 = vadd.f32 0.0, %v4214
        %v4216 = vpop.f32.mrf.mxu0
        %v4217 = vadd.f32 0.0, %v4216
        %4218 = vmatmul.bf16.gmra.mxu0 %v4043
        %v4219 = vpop.f32.mrf.mxu0
        %v4220 = vadd.f32 0.0, %v4219
        %v4221 = vpop.f32.mrf.mxu0
        %v4222 = vadd.f32 0.0, %v4221
        %4223 = vmatmul.bf16.gmra.mxu0 %v4046
        %v4224 = vpop.f32.mrf.mxu0
        %v4225 = vadd.f32 0.0, %v4224
        %v4226 = vpop.f32.mrf.mxu0
        %v4227 = vadd.f32 0.0, %v4226
        %4228 = vmatmul.bf16.gmra.mxu0 %v4049
        %v4229 = vpop.f32.mrf.mxu0
        %v4230 = vadd.f32 0.0, %v4229
        %v4231 = vpop.f32.mrf.mxu0
        %v4232 = vadd.f32 0.0, %v4231
        %4233 = vmatmul.bf16.gmra.mxu0 %v4052
        %v4234 = vpop.f32.mrf.mxu0
        %v4235 = vadd.f32 0.0, %v4234
        %v4236 = vpop.f32.mrf.mxu0
        %v4237 = vadd.f32 0.0, %v4236
        %4238 = vmatmul.bf16.gmra.mxu0 %v4055
        %v4239 = vpop.f32.mrf.mxu0
        %v4240 = vadd.f32 0.0, %v4239
        %v4241 = vpop.f32.mrf.mxu0
        %v4242 = vadd.f32 0.0, %v4241
        %4243 = vmatmul.bf16.gmra.mxu0 %v4058
        %v4244 = vpop.f32.mrf.mxu0
        %v4245 = vadd.f32 0.0, %v4244
        %v4246 = vpop.f32.mrf.mxu0
        %v4247 = vadd.f32 0.0, %v4246
        %4248 = vmatmul.bf16.gmra.mxu0 %v4061
        %v4249 = vpop.f32.mrf.mxu0
        %v4250 = vadd.f32 0.0, %v4249
        %v4251 = vpop.f32.mrf.mxu0
        %v4252 = vadd.f32 0.0, %v4251
        %4253 = vmatmul.bf16.gmra.mxu0 %v4064
        %v4254 = vpop.f32.mrf.mxu0
        %v4255 = vadd.f32 0.0, %v4254
        %v4256 = vpop.f32.mrf.mxu0
        %v4257 = vadd.f32 0.0, %v4256
        %4258 = vmatmul.bf16.gmra.mxu0 %v4067
        %v4259 = vpop.f32.mrf.mxu0
        %v4260 = vadd.f32 0.0, %v4259
        %v4261 = vpop.f32.mrf.mxu0
        %v4262 = vadd.f32 0.0, %v4261
        %4263 = vmatmul.bf16.gmra.mxu0 %v4070
        %v4264 = vpop.f32.mrf.mxu0
        %v4265 = vadd.f32 0.0, %v4264
        %v4266 = vpop.f32.mrf.mxu0
        %v4267 = vadd.f32 0.0, %v4266
        %4268 = vmatmul.bf16.gmra.mxu0 %v4073
        %v4269 = vpop.f32.mrf.mxu0
        %v4270 = vadd.f32 0.0, %v4269
        %v4271 = vpop.f32.mrf.mxu0
        %v4272 = vadd.f32 0.0, %v4271
        %4273 = vmatmul.bf16.gmra.mxu0 %v4076
        %v4274 = vpop.f32.mrf.mxu0
        %v4275 = vadd.f32 0.0, %v4274
        %v4276 = vpop.f32.mrf.mxu0
        %v4277 = vadd.f32 0.0, %v4276
        %4278 = vmatmul.bf16.gmra.mxu0 %v4079
        %v4279 = vpop.f32.mrf.mxu0
        %v4280 = vadd.f32 0.0, %v4279
        %v4281 = vpop.f32.mrf.mxu0
        %v4282 = vadd.f32 0.0, %v4281
        %4283 = vdwg.mxu0
        %4284 = vmatpush.bf16.msra.mxu0 %v4146
        %4285 = vmatpush.bf16.msra.mxu0 %v4145
        %4286 = vmatpush.bf16.msra.mxu0 %v4144
        %4287 = vmatpush.bf16.msra.mxu0 %v4143
        %4288 = vmatpush.bf16.msra.mxu0 %v4142
        %4289 = vmatpush.bf16.msra.mxu0 %v4141
        %4290 = vmatpush.bf16.msra.mxu0 %v4140
        %4291 = vmatpush.bf16.msra.mxu0 %v4139
        %4292 = vmatmul.bf16.gmra.mxu0 %v4011
        %v4293 = vpop.f32.mrf.mxu0
        %v4294 = vadd.f32 %v4165, %v4293
        %v4295 = vpop.f32.mrf.mxu0
        %v4296 = vadd.f32 %v4167, %v4295
        %4297 = vmatmul.bf16.gmra.mxu0 %v4014
        %v4298 = vpop.f32.mrf.mxu0
        %v4299 = vadd.f32 %v4170, %v4298
        %v4300 = vpop.f32.mrf.mxu0
        %v4301 = vadd.f32 %v4172, %v4300
        %4302 = vmatmul.bf16.gmra.mxu0 %v4017
        %v4303 = vpop.f32.mrf.mxu0
        %v4304 = vadd.f32 %v4175, %v4303
        %v4305 = vpop.f32.mrf.mxu0
        %v4306 = vadd.f32 %v4177, %v4305
        %4307 = vmatmul.bf16.gmra.mxu0 %v4020
        %v4308 = vpop.f32.mrf.mxu0
        %v4309 = vadd.f32 %v4180, %v4308
        %v4310 = vpop.f32.mrf.mxu0
        %v4311 = vadd.f32 %v4182, %v4310
        %4312 = vmatmul.bf16.gmra.mxu0 %v4023
        %v4313 = vpop.f32.mrf.mxu0
        %v4314 = vadd.f32 %v4185, %v4313
        %v4315 = vpop.f32.mrf.mxu0
        %v4316 = vadd.f32 %v4187, %v4315
        %4317 = vmatmul.bf16.gmra.mxu0 %v4026
        %v4318 = vpop.f32.mrf.mxu0
        %v4319 = vadd.f32 %v4190, %v4318
        %v4320 = vpop.f32.mrf.mxu0
        %v4321 = vadd.f32 %v4192, %v4320
        %4322 = vmatmul.bf16.gmra.mxu0 %v4029
        %v4323 = vpop.f32.mrf.mxu0
        %v4324 = vadd.f32 %v4195, %v4323
        %v4325 = vpop.f32.mrf.mxu0
        %v4326 = vadd.f32 %v4197, %v4325
        %4327 = vmatmul.bf16.gmra.mxu0 %v4032
        %v4328 = vpop.f32.mrf.mxu0
        %v4329 = vadd.f32 %v4200, %v4328
        %v4330 = vpop.f32.mrf.mxu0
        %v4331 = vadd.f32 %v4202, %v4330
        %4332 = vmatmul.bf16.gmra.mxu0 %v4035
        %v4333 = vpop.f32.mrf.mxu0
        %v4334 = vadd.f32 %v4205, %v4333
        %v4335 = vpop.f32.mrf.mxu0
        %v4336 = vadd.f32 %v4207, %v4335
        %4337 = vmatmul.bf16.gmra.mxu0 %v4038
        %v4338 = vpop.f32.mrf.mxu0
        %v4339 = vadd.f32 %v4210, %v4338
        %v4340 = vpop.f32.mrf.mxu0
        %v4341 = vadd.f32 %v4212, %v4340
        %4342 = vmatmul.bf16.gmra.mxu0 %v4041
        %v4343 = vpop.f32.mrf.mxu0
        %v4344 = vadd.f32 %v4215, %v4343
        %v4345 = vpop.f32.mrf.mxu0
        %v4346 = vadd.f32 %v4217, %v4345
        %4347 = vmatmul.bf16.gmra.mxu0 %v4044
        %v4348 = vpop.f32.mrf.mxu0
        %v4349 = vadd.f32 %v4220, %v4348
        %v4350 = vpop.f32.mrf.mxu0
        %v4351 = vadd.f32 %v4222, %v4350
        %4352 = vmatmul.bf16.gmra.mxu0 %v4047
        %v4353 = vpop.f32.mrf.mxu0
        %v4354 = vadd.f32 %v4225, %v4353
        %v4355 = vpop.f32.mrf.mxu0
        %v4356 = vadd.f32 %v4227, %v4355
        %4357 = vmatmul.bf16.gmra.mxu0 %v4050
        %v4358 = vpop.f32.mrf.mxu0
        %v4359 = vadd.f32 %v4230, %v4358
        %v4360 = vpop.f32.mrf.mxu0
        %v4361 = vadd.f32 %v4232, %v4360
        %4362 = vmatmul.bf16.gmra.mxu0 %v4053
        %v4363 = vpop.f32.mrf.mxu0
        %v4364 = vadd.f32 %v4235, %v4363
        %v4365 = vpop.f32.mrf.mxu0
        %v4366 = vadd.f32 %v4237, %v4365
        %4367 = vmatmul.bf16.gmra.mxu0 %v4056
        %v4368 = vpop.f32.mrf.mxu0
        %v4369 = vadd.f32 %v4240, %v4368
        %v4370 = vpop.f32.mrf.mxu0
        %v4371 = vadd.f32 %v4242, %v4370
        %4372 = vmatmul.bf16.gmra.mxu0 %v4059
        %v4373 = vpop.f32.mrf.mxu0
        %v4374 = vadd.f32 %v4245, %v4373
        %v4375 = vpop.f32.mrf.mxu0
        %v4376 = vadd.f32 %v4247, %v4375
        %4377 = vmatmul.bf16.gmra.mxu0 %v4062
        %v4378 = vpop.f32.mrf.mxu0
        %v4379 = vadd.f32 %v4250, %v4378
        %v4380 = vpop.f32.mrf.mxu0
        %v4381 = vadd.f32 %v4252, %v4380
        %4382 = vmatmul.bf16.gmra.mxu0 %v4065
        %v4383 = vpop.f32.mrf.mxu0
        %v4384 = vadd.f32 %v4255, %v4383
        %v4385 = vpop.f32.mrf.mxu0
        %v4386 = vadd.f32 %v4257, %v4385
        %4387 = vmatmul.bf16.gmra.mxu0 %v4068
        %v4388 = vpop.f32.mrf.mxu0
        %v4389 = vadd.f32 %v4260, %v4388
        %v4390 = vpop.f32.mrf.mxu0
        %v4391 = vadd.f32 %v4262, %v4390
        %4392 = vmatmul.bf16.gmra.mxu0 %v4071
        %v4393 = vpop.f32.mrf.mxu0
        %v4394 = vadd.f32 %v4265, %v4393
        %v4395 = vpop.f32.mrf.mxu0
        %v4396 = vadd.f32 %v4267, %v4395
        %4397 = vmatmul.bf16.gmra.mxu0 %v4074
        %v4398 = vpop.f32.mrf.mxu0
        %v4399 = vadd.f32 %v4270, %v4398
        %v4400 = vpop.f32.mrf.mxu0
        %v4401 = vadd.f32 %v4272, %v4400
        %4402 = vmatmul.bf16.gmra.mxu0 %v4077
        %v4403 = vpop.f32.mrf.mxu0
        %v4404 = vadd.f32 %v4275, %v4403
        %v4405 = vpop.f32.mrf.mxu0
        %v4406 = vadd.f32 %v4277, %v4405
        %4407 = vmatmul.bf16.gmra.mxu0 %v4080
        %v4408 = vpop.f32.mrf.mxu0
        %v4409 = vadd.f32 %v4280, %v4408
        %v4410 = vpop.f32.mrf.mxu0
        %v4411 = vadd.f32 %v4282, %v4410
        %4412 = vdwg.mxu0
        %4413 = vmatpush.bf16.msra.mxu0 %v4154
        %4414 = vmatpush.bf16.msra.mxu0 %v4153
        %4415 = vmatpush.bf16.msra.mxu0 %v4152
        %4416 = vmatpush.bf16.msra.mxu0 %v4151
        %4417 = vmatpush.bf16.msra.mxu0 %v4150
        %4418 = vmatpush.bf16.msra.mxu0 %v4149
        %4419 = vmatpush.bf16.msra.mxu0 %v4148
        %4420 = vmatpush.bf16.msra.mxu0 %v4147
        %4421 = vmatmul.bf16.gmra.mxu0 %v4012
        %v4422 = vpop.f32.mrf.mxu0
        %v4423 = vadd.f32 %v4294, %v4422
        %v4424 = vpop.f32.mrf.mxu0
        %v4425 = vadd.f32 %v4296, %v4424
        %4426 = vmatmul.bf16.gmra.mxu0 %v4015
        %v4427 = vpop.f32.mrf.mxu0
        %v4428 = vadd.f32 %v4299, %v4427
        %v4429 = vpop.f32.mrf.mxu0
        %v4430 = vadd.f32 %v4301, %v4429
        %4431 = vmatmul.bf16.gmra.mxu0 %v4018
        %v4432 = vpop.f32.mrf.mxu0
        %v4433 = vadd.f32 %v4304, %v4432
        %v4434 = vpop.f32.mrf.mxu0
        %v4435 = vadd.f32 %v4306, %v4434
        %4436 = vmatmul.bf16.gmra.mxu0 %v4021
        %v4437 = vpop.f32.mrf.mxu0
        %v4438 = vadd.f32 %v4309, %v4437
        %v4439 = vpop.f32.mrf.mxu0
        %v4440 = vadd.f32 %v4311, %v4439
        %4441 = vmatmul.bf16.gmra.mxu0 %v4024
        %v4442 = vpop.f32.mrf.mxu0
        %v4443 = vadd.f32 %v4314, %v4442
        %v4444 = vpop.f32.mrf.mxu0
        %v4445 = vadd.f32 %v4316, %v4444
        %4446 = vmatmul.bf16.gmra.mxu0 %v4027
        %v4447 = vpop.f32.mrf.mxu0
        %v4448 = vadd.f32 %v4319, %v4447
        %v4449 = vpop.f32.mrf.mxu0
        %v4450 = vadd.f32 %v4321, %v4449
        %4451 = vmatmul.bf16.gmra.mxu0 %v4030
        %v4452 = vpop.f32.mrf.mxu0
        %v4453 = vadd.f32 %v4324, %v4452
        %v4454 = vpop.f32.mrf.mxu0
        %v4455 = vadd.f32 %v4326, %v4454
        %4456 = vmatmul.bf16.gmra.mxu0 %v4033
        %v4457 = vpop.f32.mrf.mxu0
        %v4458 = vadd.f32 %v4329, %v4457
        %v4459 = vpop.f32.mrf.mxu0
        %v4460 = vadd.f32 %v4331, %v4459
        %4461 = vmatmul.bf16.gmra.mxu0 %v4036
        %v4462 = vpop.f32.mrf.mxu0
        %v4463 = vadd.f32 %v4334, %v4462
        %v4464 = vpop.f32.mrf.mxu0
        %v4465 = vadd.f32 %v4336, %v4464
        %4466 = vmatmul.bf16.gmra.mxu0 %v4039
        %v4467 = vpop.f32.mrf.mxu0
        %v4468 = vadd.f32 %v4339, %v4467
        %v4469 = vpop.f32.mrf.mxu0
        %v4470 = vadd.f32 %v4341, %v4469
        %4471 = vmatmul.bf16.gmra.mxu0 %v4042
        %v4472 = vpop.f32.mrf.mxu0
        %v4473 = vadd.f32 %v4344, %v4472
        %v4474 = vpop.f32.mrf.mxu0
        %v4475 = vadd.f32 %v4346, %v4474
        %4476 = vmatmul.bf16.gmra.mxu0 %v4045
        %v4477 = vpop.f32.mrf.mxu0
        %v4478 = vadd.f32 %v4349, %v4477
        %v4479 = vpop.f32.mrf.mxu0
        %v4480 = vadd.f32 %v4351, %v4479
        %4481 = vmatmul.bf16.gmra.mxu0 %v4048
        %v4482 = vpop.f32.mrf.mxu0
        %v4483 = vadd.f32 %v4354, %v4482
        %v4484 = vpop.f32.mrf.mxu0
        %v4485 = vadd.f32 %v4356, %v4484
        %4486 = vmatmul.bf16.gmra.mxu0 %v4051
        %v4487 = vpop.f32.mrf.mxu0
        %v4488 = vadd.f32 %v4359, %v4487
        %v4489 = vpop.f32.mrf.mxu0
        %v4490 = vadd.f32 %v4361, %v4489
        %4491 = vmatmul.bf16.gmra.mxu0 %v4054
        %v4492 = vpop.f32.mrf.mxu0
        %v4493 = vadd.f32 %v4364, %v4492
        %v4494 = vpop.f32.mrf.mxu0
        %v4495 = vadd.f32 %v4366, %v4494
        %4496 = vmatmul.bf16.gmra.mxu0 %v4057
        %v4497 = vpop.f32.mrf.mxu0
        %v4498 = vadd.f32 %v4369, %v4497
        %v4499 = vpop.f32.mrf.mxu0
        %v4500 = vadd.f32 %v4371, %v4499
        %4501 = vmatmul.bf16.gmra.mxu0 %v4060
        %v4502 = vpop.f32.mrf.mxu0
        %v4503 = vadd.f32 %v4374, %v4502
        %v4504 = vpop.f32.mrf.mxu0
        %v4505 = vadd.f32 %v4376, %v4504
        %4506 = vmatmul.bf16.gmra.mxu0 %v4063
        %v4507 = vpop.f32.mrf.mxu0
        %v4508 = vadd.f32 %v4379, %v4507
        %v4509 = vpop.f32.mrf.mxu0
        %v4510 = vadd.f32 %v4381, %v4509
        %4511 = vmatmul.bf16.gmra.mxu0 %v4066
        %v4512 = vpop.f32.mrf.mxu0
        %v4513 = vadd.f32 %v4384, %v4512
        %v4514 = vpop.f32.mrf.mxu0
        %v4515 = vadd.f32 %v4386, %v4514
        %4516 = vmatmul.bf16.gmra.mxu0 %v4069
        %v4517 = vpop.f32.mrf.mxu0
        %v4518 = vadd.f32 %v4389, %v4517
        %v4519 = vpop.f32.mrf.mxu0
        %v4520 = vadd.f32 %v4391, %v4519
        %4521 = vmatmul.bf16.gmra.mxu0 %v4072
        %v4522 = vpop.f32.mrf.mxu0
        %v4523 = vadd.f32 %v4394, %v4522
        %v4524 = vpop.f32.mrf.mxu0
        %v4525 = vadd.f32 %v4396, %v4524
        %4526 = vmatmul.bf16.gmra.mxu0 %v4075
        %v4527 = vpop.f32.mrf.mxu0
        %v4528 = vadd.f32 %v4399, %v4527
        %v4529 = vpop.f32.mrf.mxu0
        %v4530 = vadd.f32 %v4401, %v4529
        %4531 = vmatmul.bf16.gmra.mxu0 %v4078
        %v4532 = vpop.f32.mrf.mxu0
        %v4533 = vadd.f32 %v4404, %v4532
        %v4534 = vpop.f32.mrf.mxu0
        %v4535 = vadd.f32 %v4406, %v4534
        %4536 = vmatmul.bf16.gmra.mxu0 %v4081
        %v4537 = vpop.f32.mrf.mxu0
        %v4538 = vadd.f32 %v4409, %v4537
        %v4539 = vpop.f32.mrf.mxu0
        %v4540 = vadd.f32 %v4411, %v4539
        %4541 = vdwg.mxu0
        %4590 = vrot.lane.b32.xlu0 %v4423, 64
        %v4591 = vpop.permute.xlu0 %4590
        %4592 = vrot.lane.b32.xlu0 %v4425, 64
        %v4593 = vpop.permute.xlu0 %4592
        %4594 = vrot.lane.b32.xlu0 %v4428, 64
        %v4595 = vpop.permute.xlu0 %4594
        %4596 = vrot.lane.b32.xlu0 %v4430, 64
        %v4597 = vpop.permute.xlu0 %4596
        %4598 = vrot.lane.b32.xlu0 %v4433, 64
        %v4599 = vpop.permute.xlu0 %4598
        %4600 = vrot.lane.b32.xlu0 %v4435, 64
        %v4601 = vpop.permute.xlu0 %4600
        %4602 = vrot.lane.b32.xlu0 %v4438, 64
        %v4603 = vpop.permute.xlu0 %4602
        %4604 = vrot.lane.b32.xlu0 %v4440, 64
        %v4605 = vpop.permute.xlu0 %4604
        %4606 = vrot.lane.b32.xlu0 %v4443, 64
        %v4607 = vpop.permute.xlu0 %4606
        %4608 = vrot.lane.b32.xlu0 %v4445, 64
        %v4609 = vpop.permute.xlu0 %4608
        %4610 = vrot.lane.b32.xlu0 %v4448, 64
        %v4611 = vpop.permute.xlu0 %4610
        %4612 = vrot.lane.b32.xlu0 %v4450, 64
        %v4613 = vpop.permute.xlu0 %4612
        %4614 = vrot.lane.b32.xlu0 %v4453, 64
        %v4615 = vpop.permute.xlu0 %4614
        %4616 = vrot.lane.b32.xlu0 %v4455, 64
        %v4617 = vpop.permute.xlu0 %4616
        %4618 = vrot.lane.b32.xlu0 %v4458, 64
        %v4619 = vpop.permute.xlu0 %4618
        %4620 = vrot.lane.b32.xlu0 %v4460, 64
        %v4621 = vpop.permute.xlu0 %4620
        %4622 = vrot.lane.b32.xlu0 %v4463, 64
        %v4623 = vpop.permute.xlu0 %4622
        %4624 = vrot.lane.b32.xlu0 %v4465, 64
        %v4625 = vpop.permute.xlu0 %4624
        %4626 = vrot.lane.b32.xlu0 %v4468, 64
        %v4627 = vpop.permute.xlu0 %4626
        %4628 = vrot.lane.b32.xlu0 %v4470, 64
        %v4629 = vpop.permute.xlu0 %4628
        %4630 = vrot.lane.b32.xlu0 %v4473, 64
        %v4631 = vpop.permute.xlu0 %4630
        %4632 = vrot.lane.b32.xlu0 %v4475, 64
        %v4633 = vpop.permute.xlu0 %4632
        %4634 = vrot.lane.b32.xlu0 %v4478, 64
        %v4635 = vpop.permute.xlu0 %4634
        %4636 = vrot.lane.b32.xlu0 %v4480, 64
        %v4637 = vpop.permute.xlu0 %4636
        %4638 = vrot.lane.b32.xlu0 %v4483, 64
        %v4639 = vpop.permute.xlu0 %4638
        %4640 = vrot.lane.b32.xlu0 %v4485, 64
        %v4641 = vpop.permute.xlu0 %4640
        %4642 = vrot.lane.b32.xlu0 %v4488, 64
        %v4643 = vpop.permute.xlu0 %4642
        %4644 = vrot.lane.b32.xlu0 %v4490, 64
        %v4645 = vpop.permute.xlu0 %4644
        %4646 = vrot.lane.b32.xlu0 %v4493, 64
        %v4647 = vpop.permute.xlu0 %4646
        %4648 = vrot.lane.b32.xlu0 %v4495, 64
        %v4649 = vpop.permute.xlu0 %4648
        %4650 = vrot.lane.b32.xlu0 %v4498, 64
        %v4651 = vpop.permute.xlu0 %4650
        %4652 = vrot.lane.b32.xlu0 %v4500, 64
        %v4653 = vpop.permute.xlu0 %4652
        %4654 = vrot.lane.b32.xlu0 %v4503, 64
        %v4655 = vpop.permute.xlu0 %4654
        %4656 = vrot.lane.b32.xlu0 %v4505, 64
        %v4657 = vpop.permute.xlu0 %4656
        %4658 = vrot.lane.b32.xlu0 %v4508, 64
        %v4659 = vpop.permute.xlu0 %4658
        %4660 = vrot.lane.b32.xlu0 %v4510, 64
        %v4661 = vpop.permute.xlu0 %4660
        %4662 = vrot.lane.b32.xlu0 %v4513, 64
        %v4663 = vpop.permute.xlu0 %4662
        %4664 = vrot.lane.b32.xlu0 %v4515, 64
        %v4665 = vpop.permute.xlu0 %4664
        %4666 = vrot.lane.b32.xlu0 %v4518, 64
        %v4667 = vpop.permute.xlu0 %4666
        %4668 = vrot.lane.b32.xlu0 %v4520, 64
        %v4669 = vpop.permute.xlu0 %4668
        %4670 = vrot.lane.b32.xlu0 %v4523, 64
        %v4671 = vpop.permute.xlu0 %4670
        %4672 = vrot.lane.b32.xlu0 %v4525, 64
        %v4673 = vpop.permute.xlu0 %4672
        %4674 = vrot.lane.b32.xlu0 %v4528, 64
        %v4675 = vpop.permute.xlu0 %4674
        %4676 = vrot.lane.b32.xlu0 %v4530, 64
        %v4677 = vpop.permute.xlu0 %4676
        %4678 = vrot.lane.b32.xlu0 %v4533, 64
        %v4679 = vpop.permute.xlu0 %4678
        %4680 = vrot.lane.b32.xlu0 %v4535, 64
        %v4681 = vpop.permute.xlu0 %4680
        %4682 = vrot.lane.b32.xlu0 %v4538, 64
        %v4683 = vpop.permute.xlu0 %4682
        %4684 = vrot.lane.b32.xlu0 %v4540, 64
        %v4685 = vpop.permute.xlu0 %4684
        %vm4734 = vcmask 523264
        %v4735 = vsel %vm4734, %v2305, %v4591
        %v4736 = vsel %vm4734, %v2307, %v4593
        %v4737 = vsel %vm4734, %v2310, %v4595
        %v4738 = vsel %vm4734, %v2312, %v4597
        %v4739 = vsel %vm4734, %v2315, %v4599
        %v4740 = vsel %vm4734, %v2317, %v4601
        %v4741 = vsel %vm4734, %v2320, %v4603
        %v4742 = vsel %vm4734, %v2322, %v4605
        %v4743 = vsel %vm4734, %v2325, %v4607
        %v4744 = vsel %vm4734, %v2327, %v4609
        %v4745 = vsel %vm4734, %v2330, %v4611
        %v4746 = vsel %vm4734, %v2332, %v4613
        %v4747 = vsel %vm4734, %v2335, %v4615
        %v4748 = vsel %vm4734, %v2337, %v4617
        %v4749 = vsel %vm4734, %v2340, %v4619
        %v4750 = vsel %vm4734, %v2342, %v4621
        %v4751 = vsel %vm4734, %v2345, %v4623
        %v4752 = vsel %vm4734, %v2347, %v4625
        %v4753 = vsel %vm4734, %v2350, %v4627
        %v4754 = vsel %vm4734, %v2352, %v4629
        %v4755 = vsel %vm4734, %v2355, %v4631
        %v4756 = vsel %vm4734, %v2357, %v4633
        %v4757 = vsel %vm4734, %v2360, %v4635
        %v4758 = vsel %vm4734, %v2362, %v4637
        %v4759 = vsel %vm4734, %v2365, %v4639
        %v4760 = vsel %vm4734, %v2367, %v4641
        %v4761 = vsel %vm4734, %v2370, %v4643
        %v4762 = vsel %vm4734, %v2372, %v4645
        %v4763 = vsel %vm4734, %v2375, %v4647
        %v4764 = vsel %vm4734, %v2377, %v4649
        %v4765 = vsel %vm4734, %v2380, %v4651
        %v4766 = vsel %vm4734, %v2382, %v4653
        %v4767 = vsel %vm4734, %v2385, %v4655
        %v4768 = vsel %vm4734, %v2387, %v4657
        %v4769 = vsel %vm4734, %v2390, %v4659
        %v4770 = vsel %vm4734, %v2392, %v4661
        %v4771 = vsel %vm4734, %v2395, %v4663
        %v4772 = vsel %vm4734, %v2397, %v4665
        %v4773 = vsel %vm4734, %v2400, %v4667
        %v4774 = vsel %vm4734, %v2402, %v4669
        %v4775 = vsel %vm4734, %v2405, %v4671
        %v4776 = vsel %vm4734, %v2407, %v4673
        %v4777 = vsel %vm4734, %v2410, %v4675
        %v4778 = vsel %vm4734, %v2412, %v4677
        %v4779 = vsel %vm4734, %v2415, %v4679
        %v4780 = vsel %vm4734, %v2417, %v4681
        %v4781 = vsel %vm4734, %v2420, %v4683
        %v4782 = vsel %vm4734, %v2422, %v4685
        %4783 = vst [vmem:[%s291] sm:$0xff] %v4735
        %4784 = vst [vmem:[%s291 + $0x8] sm:$0xff] %v4736
        %4785 = vst [vmem:[%s291 + $0x10] sm:$0xff] %v4737
        %4786 = vst [vmem:[%s291 + $0x18] sm:$0xff] %v4738
        %4787 = vst [vmem:[%s291 + $0x20] sm:$0xff] %v4739
        %4788 = vst [vmem:[%s291 + $0x28] sm:$0xff] %v4740
        %4789 = vst [vmem:[%s291 + $0x30] sm:$0xff] %v4741
        %4790 = vst [vmem:[%s291 + $0x38] sm:$0xff] %v4742
        %4791 = vst [vmem:[%s291 + $0x40] sm:$0xff] %v4743
        %4792 = vst [vmem:[%s291 + $0x48] sm:$0xff] %v4744
        %4793 = vst [vmem:[%s291 + $0x50] sm:$0xff] %v4745
        %4794 = vst [vmem:[%s291 + $0x58] sm:$0xff] %v4746
        %4795 = vst [vmem:[%s291 + $0x60] sm:$0xff] %v4747
        %4796 = vst [vmem:[%s291 + $0x68] sm:$0xff] %v4748
        %4797 = vst [vmem:[%s291 + $0x70] sm:$0xff] %v4749
        %4798 = vst [vmem:[%s291 + $0x78] sm:$0xff] %v4750
        %4799 = vst [vmem:[%s291 + $0x80] sm:$0xff] %v4751
        %4800 = vst [vmem:[%s291 + $0x88] sm:$0xff] %v4752
        %4801 = vst [vmem:[%s291 + $0x90] sm:$0xff] %v4753
        %4802 = vst [vmem:[%s291 + $0x98] sm:$0xff] %v4754
        %4803 = vst [vmem:[%s291 + $0xa0] sm:$0xff] %v4755
        %4804 = vst [vmem:[%s291 + $0xa8] sm:$0xff] %v4756
        %4805 = vst [vmem:[%s291 + $0xb0] sm:$0xff] %v4757
        %4806 = vst [vmem:[%s291 + $0xb8] sm:$0xff] %v4758
        %4807 = vst [vmem:[%s291 + $0xc0] sm:$0xff] %v4759
        %4808 = vst [vmem:[%s291 + $0xc8] sm:$0xff] %v4760
        %4809 = vst [vmem:[%s291 + $0xd0] sm:$0xff] %v4761
        %4810 = vst [vmem:[%s291 + $0xd8] sm:$0xff] %v4762
        %4811 = vst [vmem:[%s291 + $0xe0] sm:$0xff] %v4763
        %4812 = vst [vmem:[%s291 + $0xe8] sm:$0xff] %v4764
        %4813 = vst [vmem:[%s291 + $0xf0] sm:$0xff] %v4765
        %4814 = vst [vmem:[%s291 + $0xf8] sm:$0xff] %v4766
        %4815 = vst [vmem:[%s291 + $0x100] sm:$0xff] %v4767
        %4816 = vst [vmem:[%s291 + $0x108] sm:$0xff] %v4768
        %4817 = vst [vmem:[%s291 + $0x110] sm:$0xff] %v4769
        %4818 = vst [vmem:[%s291 + $0x118] sm:$0xff] %v4770
        %4819 = vst [vmem:[%s291 + $0x120] sm:$0xff] %v4771
        %4820 = vst [vmem:[%s291 + $0x128] sm:$0xff] %v4772
        %4821 = vst [vmem:[%s291 + $0x130] sm:$0xff] %v4773
        %4822 = vst [vmem:[%s291 + $0x138] sm:$0xff] %v4774
        %4823 = vst [vmem:[%s291 + $0x140] sm:$0xff] %v4775
        %4824 = vst [vmem:[%s291 + $0x148] sm:$0xff] %v4776
        %4825 = vst [vmem:[%s291 + $0x150] sm:$0xff] %v4777
        %4826 = vst [vmem:[%s291 + $0x158] sm:$0xff] %v4778
        %4827 = vst [vmem:[%s291 + $0x160] sm:$0xff] %v4779
        %4828 = vst [vmem:[%s291 + $0x168] sm:$0xff] %v4780
        %4829 = vst [vmem:[%s291 + $0x170] sm:$0xff] %v4781
        %4830 = vst [vmem:[%s291 + $0x178] sm:$0xff] %v4782
        %s4831 = sand.u32 %s129, 1
        %s4832 = scalar_lea.sflag [#allocation4], %s4831
        %s4833 = sand.u32 %s129, 1
        %s4834 = smul.addr %s4833, 384
        %s4835 = scalar_lea.vmem [#allocation8], %s4834
        // Predicated region
        $region49: #{tpu_custom_call.1} parent=35 // pred_check
          %p4836 = pneg %p139
        $region50: #{tpu_custom_call.1} parent=35 // pred_check_branch
          %4838 = sbr.rel (%p4836) target = $region52
        $region51: #{tpu_custom_call.1} parent=35 // pred_region
          %4840 = vsyncadd %s4832, 0
          %s4841 = smul.addr %s22, 48
          %s4842 = smul.addr %s4841, 8
          %s4843 = scalar_lea.hbm %s4, %s4842
          %s4844 = sshll.u32 %s4835, 4
          %s4845 = int_to_ptr.vmem [resolvable:$true] %s4844
          %s4846 = sshll.u32 %s4843, 4
          %s4847 = int_to_ptr.hbm [resolvable:$true] %s4846
          %4852 = dma.vmem_to_hbm [thread:$0]  %s4845, 6144, %s4847, %s4832, 128, 128, 8
        $region52: #{tpu_custom_call.1} parent=35 // pred_fallthru
          _
      $region36: #{tpu_custom_call.1} parent=5 // pred_fallthru
        _
      %p4853 = scmp.le.s32.totalorder 2, %s17
      // Predicated region
      $region53: #{tpu_custom_call.1} parent=5 // pred_check
        %p4854 = pneg %p4853
      $region54: #{tpu_custom_call.1} parent=5 // pred_check_branch
        %4856 = sbr.rel (%p4854) target = $region56
      $region55: #{tpu_custom_call.1} parent=5 // pred_region
        %s4857 = ssub.s32 %s17, 2
        // Predicated region
        $region57: #{tpu_custom_call.1} parent=55 // pred_check
          %p4858 = pneg %p145
        $region58: #{tpu_custom_call.1} parent=55 // pred_check_branch
          %4860 = sbr.rel (%p4858) target = $region60
        $region59: #{tpu_custom_call.1} parent=55 // pred_region
          %s4861 = sand.u32 %s130, 1
          %s4862 = scalar_lea.sflag [#allocation4], %s4861
          %s4863 = sand.u32 %s130, 1
          %s4864 = smul.addr %s4863, 384
          %s4865 = scalar_lea.vmem [#allocation8], %s4864
          %4867 = dma.done %s4862, 6144
        $region60: #{tpu_custom_call.1} parent=55 // pred_fallthru
          _
      $region56: #{tpu_custom_call.1} parent=5 // pred_fallthru
        _
    $region6: #{tpu_custom_call.1} parent=1 // loop_footer
      %s21 = sadd.s32 1, %s17
    $region7: #{tpu_custom_call.1} parent=1 // loop_footer_branch
      %16 = sbr.rel target = $region3
    $region8: #{tpu_custom_call.1} parent=1 // loop_exit
      _
    %4868 = vsyncpa [#allocation3], 1
    %s4869 = scalar_lea.sflag [#allocation3], 1
    %4870 = vsyncpa %s4869, 1
    %4871 = vsyncpa [#allocation6], 1
    %4872 = vsyncpa [#allocation4], 1
    %s4873 = scalar_lea.sflag [#allocation4], 1
    %4874 = vsyncpa %s4873, 1

</llo_original>
